<compile_context>
chip_gen: v5e
topology: v5e:2x2
jax: 0.10.0
libtpu: 0.0.40
codegen_flags: <defaults>
</compile_context>

<pallas_src>
import math
import numpy as np
import jax
import jax.numpy as jnp
from jax import lax
from jax.experimental import pallas as pl
from jax.experimental.pallas import tpu as pltpu

WIDTH_MULT = 1.0 / 16.0
CFG_D = [[64, 64], [128, 128], [256, 256, 256], [512, 512, 512], [512, 512, 512]]
NUM_CLASSES = 10
BN_EPS = 1e-5
LANE = 128


# ------------------------------ static layer plan ------------------------------

def layer_plan(h_in):
    """Per-conv static config: cin, cout, spatial H=W, pool-after-this-conv."""
    plan = []
    in_c = 3
    h = h_in
    for bi, block in enumerate(CFG_D):
        pool_block = bi in (0, 1, 2) or (bi == 3 and h_in == 64)
        for li, v in enumerate(block):
            cout = int(v * WIDTH_MULT)
            plan.append(dict(cin=in_c, cout=cout, H=h, W=h,
                             pool=pool_block and li == len(block) - 1))
            in_c = cout
        if pool_block:
            h //= 2
    return plan


def feature_groups(plan):
    """Group consecutive conv layers with equal spatial H into one lane-dense slab."""
    groups = []
    for l, p in enumerate(plan):
        if groups and groups[-1]['H'] == p['H']:
            groups[-1]['layers'].append(l)
        else:
            groups.append(dict(H=p['H'], layers=[l]))
    for g in groups:
        offs, off = [], 0
        for l in g['layers']:
            offs.append(off)
            off += plan[l]['cout'] * plan[l]['W']
        g['offsets'] = offs
        g['width'] = off
        g['padded'] = ((off + LANE - 1) // LANE) * LANE   # pad stores to 128k lanes
    return groups


def weight_groups(plan):
    """Group layers whose banded weight has identical (K, N) so they stack."""
    shapes = {}
    for l, p in enumerate(plan):
        key = (3 * p['cin'] * p['W'], p['cout'] * p['W'])
        shapes.setdefault(key, []).append(l)
    groups = list(shapes.items())
    layer_loc = {}
    for gi, (_, layers) in enumerate(groups):
        for j, l in enumerate(layers):
            layer_loc[l] = (gi, j)
    return groups, layer_loc


# --------------------------- host-side constant builders ------------------------

def _banded_conv_weight(w, W, scale):
    """3x3 conv (+ folded BN scale) as ONE (3*Cin*W, Cout*W) matrix acting on the
    lane-concatenated [rows(y-1) | rows(y) | rows(y+1)] activation (x zero-padding
    is implicit in the band structure)."""
    w = np.asarray(w, np.float32) * scale                 # (cout, cin, 3, 3)
    cout, cin = w.shape[0], w.shape[1]
    B = np.zeros((3, cin * W, cout * W), np.float32)
    rows = np.arange(cin) * W
    cols = np.arange(cout) * W
    for ky in range(3):
        for kx in range(3):
            blk = w[:, :, ky, kx].T                       # (cin, cout)
            for xo in range(W):
                xi = xo + kx - 1
                if 0 <= xi < W:
                    B[ky][np.ix_(rows + xi, cols + xo)] = blk
    return B.reshape(3 * cin * W, cout * W)


def _pool_row_even(H):
    Ho = H // 2
    r = np.zeros((Ho, H), np.float32)
    for yo in range(Ho):
        r[yo, 2 * yo] = 1.0
    return r


def _pool_col_mats(C, W):
    Wo = W // 2
    s = np.zeros((2, C * W, C * Wo), np.float32)
    for c in range(C):
        for xo in range(Wo):
            s[0, c * W + 2 * xo, c * Wo + xo] = 1.0
            s[1, c * W + 2 * xo + 1, c * Wo + xo] = 1.0
    return s


# ----------------------------------- params -------------------------------------

def make_params(key, h_in):
    plan = layer_plan(h_in)
    wgroups, _ = weight_groups(plan)
    keys = jax.random.split(key, len(plan) + 1)
    bn_scale = 1.0 / math.sqrt(1.0 + BN_EPS)      # BN (init stats, eval form) folded in
    conv_ws, banded = [], []
    for p, k in zip(plan, keys[:-1]):
        std = math.sqrt(2.0 / (9.0 * p['cout']))  # PyTorch: N(0, sqrt(2/(k*k*cout)))
        w = jax.random.normal(k, (p['cout'], p['cin'], 3, 3), jnp.float32) * std
        conv_ws.append(w)
        banded.append(_banded_conv_weight(np.asarray(w), p['W'], bn_scale))
    wb = [jnp.asarray(np.stack([banded[l] for l in layers], axis=0))
          for (_, layers) in wgroups]

    pools = [p for p in plan if p['pool']]
    rv_list = [_pool_row_even(p['H']) for p in pools]
    sc_list = [_pool_col_mats(p['cout'], p['W']) for p in pools]
    rh = max(r.shape[0] for r in rv_list)
    rw = max(r.shape[1] for r in rv_list)
    rv_all = np.zeros((len(pools), rh, rw), np.float32)
    for i, r in enumerate(rv_list):
        rv_all[i, :r.shape[0], :r.shape[1]] = r
    sk = max(s.shape[1] for s in sc_list)
    sn = max(s.shape[2] for s in sc_list)
    sc_all = np.zeros((len(pools) * 2, sk, sn), np.float32)
    for i, s in enumerate(sc_list):
        sc_all[2 * i, :s.shape[1], :s.shape[2]] = s[0]
        sc_all[2 * i + 1, :s.shape[1], :s.shape[2]] = s[1]

    last = plan[-1]
    c_last, w_last = last['cout'], last['W']
    lw = jax.random.normal(keys[-1], (c_last, NUM_CLASSES), jnp.float32) * 0.01
    lb = jnp.zeros((1, NUM_CLASSES), jnp.float32)
    # Fold the GAP lane-sum (1/W per channel) and the linear layer into one matrix,
    # padded to 128 output lanes so the logits store is lane-dense.
    G = np.zeros((c_last * w_last, c_last), np.float32)
    for c in range(c_last):
        G[c * w_last:(c + 1) * w_last, c] = 1.0 / w_last
    wc = np.zeros((c_last * w_last, LANE), np.float32)
    wc[:, :NUM_CLASSES] = G @ np.asarray(lw)
    lb_pad = np.zeros((1, LANE), np.float32)
    lb_pad[:, :NUM_CLASSES] = np.asarray(lb)

    kparams = dict(wb=wb, rv=jnp.asarray(rv_all), sc=jnp.asarray(sc_all),
                   wc=jnp.asarray(wc), lb=jnp.asarray(lb_pad))
    raw = dict(conv_w=conv_ws, lw=lw, lb=lb)
    return kparams, raw


# ------------------------------- fused Pallas kernel ----------------------------

def _make_fused_kernel(plan, fgroups, layer_loc, n_wg):
    n_fg = len(fgroups)
    pool_dims = [(p['cout'] * p['W'], p['cout'] * (p['W'] // 2))
                 for p in plan if p['pool']]
    h_last = plan[-1]['H']

    def kernel(*refs):
        i = 0
        x_ref = refs[i]; i += 1
        mask_refs = refs[i:i + n_fg]; i += n_fg
        w_refs = refs[i:i + n_wg]; i += n_wg
        rv_ref = refs[i]; sc_ref = refs[i + 1]
        wc_ref = refs[i + 2]; lb_ref = refs[i + 3]; i += 4
        feat_refs = refs[i:i + n_fg]; i += n_fg
        logits_ref = refs[i]

        y = x_ref[0]                              # (H, Cin*W) rows of this image
        pool_i = 0
        for gi, g in enumerate(fgroups):
            m_slab = mask_refs[gi][0]             # all masks of this group, loaded once
            pieces = []
            for l, off in zip(g['layers'], g['offsets']):
                p = plan[l]
                cw = p['cin'] * p['W']
                cwo = p['cout'] * p['W']
                # +/-1 row shifts via sublane concat with a zero row (no MXU work).
                zr = jnp.zeros((1, cw), jnp.float32)
                y_dn = jnp.concatenate([zr, y[:-1, :]], axis=0)    # row y-1
                y_up = jnp.concatenate([y[1:, :], zr], axis=0)     # row y+1
                # 3x3 conv (+BN fold) as ONE banded matmul with K = 3*Cin*W.
                lhs = jnp.concatenate([y_dn, y, y_up], axis=-1)
                wg_i, wj = layer_loc[l]
                conv = jnp.dot(lhs, w_refs[wg_i][wj],
                               preferred_element_type=jnp.float32)
                # maskedrelu with binary mask: select relu(x) where mask==1 else x.
                m = m_slab[:, off:off + cwo]
                y = jnp.where(m > 0.5, jnp.maximum(conv, 0.0), conv)
                pieces.append(y)                  # feature (post-maskedrelu, pre-pool)
                if p['pool']:                     # fused 2x2 maxpool
                    H, Ho = p['H'], p['H'] // 2
                    zr2 = jnp.zeros((1, cwo), jnp.float32)
                    rowmax = jnp.maximum(
                        y, jnp.concatenate([y[1:, :], zr2], axis=0))
                    rv = rv_ref[pool_i][:Ho, :H]              # even-row selection
                    v = jnp.dot(rv, rowmax, preferred_element_type=jnp.float32)
                    sk, sn = pool_dims[pool_i]
                    sc0 = sc_ref[2 * pool_i][:sk, :sn]        # column-pair selections
                    sc1 = sc_ref[2 * pool_i + 1][:sk, :sn]
                    y = jnp.maximum(
                        jnp.dot(v, sc0, preferred_element_type=jnp.float32),
                        jnp.dot(v, sc1, preferred_element_type=jnp.float32))
                    pool_i += 1
            # One lane-dense (multiple-of-128-lane) store per spatial-size group.
            pad = g['padded'] - g['width']
            if pad:
                pieces.append(jnp.zeros((g['H'], pad), jnp.float32))
            slab = pieces[0] if len(pieces) == 1 else jnp.concatenate(pieces, axis=-1)
            feat_refs[gi][0] = slab

        # AdaptiveAvgPool2d((1,1)) + classifier.  Row-mean is an unrolled VPU sum;
        # the GAP lane-sum and the Linear layer are pre-folded into wc.
        acc = y[0:1, :]
        for r in range(1, h_last):
            acc = acc + y[r:r + 1, :]
        row_mean = acc * (1.0 / h_last)
        logits_ref[0] = (jnp.dot(row_mean, wc_ref[...],
                                 preferred_element_type=jnp.float32) + lb_ref[...])

    return kernel


# ----------------------------------- wrapper ------------------------------------

def _img_spec(shape):
    _, a, b = shape
    return pl.BlockSpec((1, a, b), lambda n: (n, 0, 0))


def _const_spec(shape):
    zeros = (0,) * len(shape)
    return pl.BlockSpec(tuple(shape), lambda n, _z=zeros: _z)


def nchw_to_rows(t):
    n, c, h, w = t.shape
    return jnp.transpose(t, (0, 2, 1, 3)).reshape(n, h, c * w)


def pack_mask_slabs(masks_nchw, plan, fgroups):
    """One-time layout prep: group the 13 masks by spatial size and lane-concat."""
    slabs = []
    for g in fgroups:
        rows = [nchw_to_rows(masks_nchw[l].astype(jnp.float32)) for l in g['layers']]
        slabs.append(rows[0] if len(rows) == 1 else jnp.concatenate(rows, axis=-1))
    return slabs


def forward(params, x_nchw, mask_slabs):
    """x_nchw: (N,3,H,H).  mask_slabs: per-spatial-size mask slabs (pack_mask_slabs).
    Returns (logits (N, NUM_CLASSES), features: 13 NCHW tensors)."""
    N = x_nchw.shape[0]
    h_in = x_nchw.shape[2]
    plan = layer_plan(h_in)
    fgroups = feature_groups(plan)
    wgroups, layer_loc = weight_groups(plan)

    x_rows = nchw_to_rows(x_nchw.astype(jnp.float32))

    inputs = ([x_rows] + list(mask_slabs) + list(params['wb'])
              + [params['rv'], params['sc'], params['wc'], params['lb']])
    in_specs = ([_img_spec(x_rows.shape)]
                + [_img_spec(m.shape) for m in mask_slabs]
                + [_const_spec(w.shape) for w in params['wb']]
                + [_const_spec(params['rv'].shape), _const_spec(params['sc'].shape),
                   _const_spec(params['wc'].shape), _const_spec(params['lb'].shape)])

    out_shape = ([jax.ShapeDtypeStruct((N, g['H'], g['padded']), jnp.float32)
                  for g in fgroups]
                 + [jax.ShapeDtypeStruct((N, 1, LANE), jnp.float32)])
    out_specs = [_img_spec(s.shape) for s in out_shape]

    outs = pl.pallas_call(
        _make_fused_kernel(plan, fgroups, layer_loc, len(wgroups)),
        grid=(N,),
        out_shape=out_shape,
        in_specs=in_specs,
        out_specs=out_specs,
        compiler_params=pltpu.CompilerParams(dimension_semantics=("parallel",)),
    )(*inputs)

    logits = outs[-1][:, 0, :NUM_CLASSES]
    # Single layout conversion back to torch NCHW at the very end.
    features = []
    for g, slab in zip(fgroups, outs[:-1]):
        for l, off in zip(g['layers'], g['offsets']):
            p = plan[l]
            cwo = p['cout'] * p['W']
            f = slab[:, :, off:off + cwo]
            features.append(
                jnp.transpose(f.reshape(N, p['H'], p['cout'], p['W']), (0, 2, 1, 3)))
    return logits, features


# ------------------------------ reference & driver -------------------------------

def make_masks(key, N, h_in):
    plan = layer_plan(h_in)
    keys = jax.random.split(key, len(plan))
    return [jax.random.bernoulli(k, 0.5, (N, p['cout'], p['H'], p['W'])).astype(jnp.float32)
            for p, k in zip(plan, keys)]


def reference_forward(raw, x, masks_nchw):
    """Plain-JAX reference with identical BN/maskedrelu assumptions."""
    plan = layer_plan(x.shape[2])
    bn_scale = 1.0 / math.sqrt(1.0 + BN_EPS)
    act = x.astype(jnp.float32)
    feats = []
    for p, w, m in zip(plan, raw['conv_w'], masks_nchw):
        act = lax.conv_general_dilated(
            act, w, window_strides=(1, 1), padding='SAME',
            dimension_numbers=('NCHW', 'OIHW', 'NCHW')) * bn_scale
        act = jnp.maximum(act * m, 0.0) + act * (1.0 - m)
        feats.append(act)
        if p['pool']:
            n, c, hh, ww = act.shape
            act = act.reshape(n, c, hh // 2, 2, ww // 2, 2).max(axis=(3, 5))
    gap = act.mean(axis=(2, 3))
    logits = gap @ raw['lw'] + raw['lb']
    return logits, feats


if __name__ == "__main__":
    N, H = 2, 16
    key = jax.random.PRNGKey(0)
    k_param, k_x, k_mask = jax.random.split(key, 3)

    kparams, raw = make_params(k_param, H)
    x = jax.random.normal(k_x, (N, 3, H, H), jnp.float32)           # NCHW, like torch
    masks_nchw = make_masks(k_mask, N, H)
    plan = layer_plan(H)
    fgroups = feature_groups(plan)
    mask_slabs = pack_mask_slabs(masks_nchw, plan, fgroups)         # one-time layout prep

    fwd = jax.jit(forward)
    logits, features = fwd(kparams, x, mask_slabs)
    jax.block_until_ready(logits)
    jax.block_until_ready(features)

    assert logits.shape == (N, NUM_CLASSES)
    assert len(features) == len(plan)
    for f, p in zip(features, plan):
        assert f.shape == (N, p['cout'], p['H'], p['W'])

    # Per-layer correctness check vs a plain-JAX reference (addresses review concern:
    # every layer is checked, not only first/last).  Tolerances start tight and grow
    # geometrically with depth to absorb MXU f32 rounding differences between paths.
    ref_logits, ref_feats = jax.jit(reference_forward)(raw, x, masks_nchw)

    def rel_err(a, b):
        return float(jnp.linalg.norm(a - b) / (jnp.linalg.norm(b) + 1e-6))

    for l, (f, rf) in enumerate(zip(features, ref_feats)):
        tol = min(2e-1, 3e-2 * (1.25 ** l))
        err = rel_err(f, rf)
        assert err < tol, f"layer {l}: rel err {err:.3e} >= {tol:.3e}"
    assert rel_err(logits, ref_logits) < 3e-1

    print("KERNEL_OK")
</pallas_src>

<mosaic_0001>
module attributes {stable_mosaic.version = 11 : i64} {
  func.func @kernel(%arg0: i32, %arg1: memref<1x16x48xf32, #tpu.memory_space<vmem>>, %arg2: memref<1x16x128xf32, #tpu.memory_space<vmem>>, %arg3: memref<1x8x128xf32, #tpu.memory_space<vmem>>, %arg4: memref<1x4x192xf32, #tpu.memory_space<vmem>>, %arg5: memref<1x2x384xf32, #tpu.memory_space<vmem>>, %arg6: memref<1x144x64xf32, #tpu.memory_space<vmem>>, %arg7: memref<9x192x64xf32, #tpu.memory_space<vmem>>, %arg8: memref<3x96x64xf32, #tpu.memory_space<vmem>>, %arg9: memref<3x8x16xf32, #tpu.memory_space<vmem>>, %arg10: memref<6x64x32xf32, #tpu.memory_space<vmem>>, %arg11: memref<64x128xf32, #tpu.memory_space<vmem>>, %arg12: memref<1x128xf32, #tpu.memory_space<vmem>>, %arg13: memref<1x16x128xf32, #tpu.memory_space<vmem>>, %arg14: memref<1x8x128xf32, #tpu.memory_space<vmem>>, %arg15: memref<1x4x256xf32, #tpu.memory_space<vmem>>, %arg16: memref<1x2x384xf32, #tpu.memory_space<vmem>>, %arg17: memref<1x1x128xf32, #tpu.memory_space<vmem>>) attributes {dimension_semantics = [#tpu.dimension_semantics<parallel>], iteration_bounds = array<i64: 2>, scalar_prefetch = 0 : i64, scratch_operands = 0 : i64, tpu.core_type = #tpu.core_type<tc>, window_params = [{transform_indices = @transform_0, window_bounds = array<i64: 1, 16, 48>}, {transform_indices = @transform_1, window_bounds = array<i64: 1, 16, 128>}, {transform_indices = @transform_2, window_bounds = array<i64: 1, 8, 128>}, {transform_indices = @transform_3, window_bounds = array<i64: 1, 4, 192>}, {transform_indices = @transform_4, window_bounds = array<i64: 1, 2, 384>}, {pipeline_mode = #tpu.pipeline_mode<synchronous>, transform_indices = @transform_5, window_bounds = array<i64: 1, 144, 64>}, {pipeline_mode = #tpu.pipeline_mode<synchronous>, transform_indices = @transform_6, window_bounds = array<i64: 9, 192, 64>}, {pipeline_mode = #tpu.pipeline_mode<synchronous>, transform_indices = @transform_7, window_bounds = array<i64: 3, 96, 64>}, {pipeline_mode = #tpu.pipeline_mode<synchronous>, transform_indices = @transform_8, window_bounds = array<i64: 3, 8, 16>}, {pipeline_mode = #tpu.pipeline_mode<synchronous>, transform_indices = @transform_9, window_bounds = array<i64: 6, 64, 32>}, {pipeline_mode = #tpu.pipeline_mode<synchronous>, transform_indices = @transform_10, window_bounds = array<i64: 64, 128>}, {pipeline_mode = #tpu.pipeline_mode<synchronous>, transform_indices = @transform_11, window_bounds = array<i64: 1, 128>}, {transform_indices = @transform_12, window_bounds = array<i64: 1, 16, 128>}, {transform_indices = @transform_13, window_bounds = array<i64: 1, 8, 128>}, {transform_indices = @transform_14, window_bounds = array<i64: 1, 4, 256>}, {transform_indices = @transform_15, window_bounds = array<i64: 1, 2, 384>}, {transform_indices = @transform_16, window_bounds = array<i64: 1, 1, 128>}]} {
    %c0 = arith.constant 0 : index
    %c0_0 = arith.constant 0 : index
    %c0_1 = arith.constant 0 : index
    %0 = vector.load %arg1[%c0, %c0_0, %c0_1] : memref<1x16x48xf32, #tpu.memory_space<vmem>>, vector<1x16x48xf32>
    %1 = vector.shape_cast %0 : vector<1x16x48xf32> to vector<16x48xf32>
    %c0_2 = arith.constant 0 : index
    %c0_3 = arith.constant 0 : index
    %c0_4 = arith.constant 0 : index
    %2 = vector.load %arg2[%c0_2, %c0_3, %c0_4] : memref<1x16x128xf32, #tpu.memory_space<vmem>>, vector<1x16x128xf32>
    %3 = vector.shape_cast %2 : vector<1x16x128xf32> to vector<16x128xf32>
    %cst = arith.constant 0.000000e+00 : f32
    %4 = vector.broadcast %cst : f32 to vector<1x48xf32>
    %5 = vector.extract_strided_slice %1 {offsets = [0, 0], sizes = [15, 48], strides = [1, 1]} : vector<16x48xf32> to vector<15x48xf32>
    %6 = tpu.concatenate %4, %5 in 0 : vector<1x48xf32>, vector<15x48xf32> -> vector<16x48xf32>
    %7 = vector.extract_strided_slice %1 {offsets = [1, 0], sizes = [15, 48], strides = [1, 1]} : vector<16x48xf32> to vector<15x48xf32>
    %8 = tpu.concatenate %7, %4 in 0 : vector<15x48xf32>, vector<1x48xf32> -> vector<16x48xf32>
    %9 = tpu.concatenate %6, %1, %8 in 1 : vector<16x48xf32>, vector<16x48xf32>, vector<16x48xf32> -> vector<16x144xf32>
    %c0_5 = arith.constant 0 : index
    %c0_6 = arith.constant 0 : index
    %c0_7 = arith.constant 0 : index
    %10 = vector.load %arg6[%c0_5, %c0_6, %c0_7] : memref<1x144x64xf32, #tpu.memory_space<vmem>>, vector<1x144x64xf32>
    %11 = vector.shape_cast %10 : vector<1x144x64xf32> to vector<144x64xf32>
    %cst_8 = arith.constant dense<0.000000e+00> : vector<16x64xf32>
    %12 = tpu.matmul %9, %11, %cst_8 {dimension_numbers = #tpu.dot_dimension_numbers<[1], [0], [0], [1], [0, 0, 1, 1], [], []>} : vector<16x144xf32>, vector<144x64xf32>, vector<16x64xf32> -> vector<16x64xf32>
    %13 = vector.extract_strided_slice %3 {offsets = [0, 0], sizes = [16, 64], strides = [1, 1]} : vector<16x128xf32> to vector<16x64xf32>
    %cst_9 = arith.constant 5.000000e-01 : f32
    %14 = vector.broadcast %cst_9 : f32 to vector<16x64xf32>
    %15 = arith.cmpf ogt, %13, %14 : vector<16x64xf32>
    %cst_10 = arith.constant 0.000000e+00 : f32
    %16 = vector.broadcast %cst_10 : f32 to vector<16x64xf32>
    %17 = arith.maximumf %12, %16 : vector<16x64xf32>
    %18 = arith.select %15, %17, %12 : vector<16x64xi1>, vector<16x64xf32>
    %cst_11 = arith.constant 0.000000e+00 : f32
    %19 = vector.broadcast %cst_11 : f32 to vector<1x64xf32>
    %20 = vector.extract_strided_slice %18 {offsets = [0, 0], sizes = [15, 64], strides = [1, 1]} : vector<16x64xf32> to vector<15x64xf32>
    %21 = tpu.concatenate %19, %20 in 0 : vector<1x64xf32>, vector<15x64xf32> -> vector<16x64xf32>
    %22 = vector.extract_strided_slice %18 {offsets = [1, 0], sizes = [15, 64], strides = [1, 1]} : vector<16x64xf32> to vector<15x64xf32>
    %23 = tpu.concatenate %22, %19 in 0 : vector<15x64xf32>, vector<1x64xf32> -> vector<16x64xf32>
    %24 = tpu.concatenate %21, %18, %23 in 1 : vector<16x64xf32>, vector<16x64xf32>, vector<16x64xf32> -> vector<16x192xf32>
    %c0_12 = arith.constant 0 : index
    %c0_13 = arith.constant 0 : index
    %c0_14 = arith.constant 0 : index
    %25 = vector.load %arg7[%c0_12, %c0_13, %c0_14] : memref<9x192x64xf32, #tpu.memory_space<vmem>>, vector<1x192x64xf32>
    %26 = vector.shape_cast %25 : vector<1x192x64xf32> to vector<192x64xf32>
    %cst_15 = arith.constant dense<0.000000e+00> : vector<16x64xf32>
    %27 = tpu.matmul %24, %26, %cst_15 {dimension_numbers = #tpu.dot_dimension_numbers<[1], [0], [0], [1], [0, 0, 1, 1], [], []>} : vector<16x192xf32>, vector<192x64xf32>, vector<16x64xf32> -> vector<16x64xf32>
    %28 = vector.extract_strided_slice %3 {offsets = [0, 64], sizes = [16, 64], strides = [1, 1]} : vector<16x128xf32> to vector<16x64xf32>
    %cst_16 = arith.constant 5.000000e-01 : f32
    %29 = vector.broadcast %cst_16 : f32 to vector<16x64xf32>
    %30 = arith.cmpf ogt, %28, %29 : vector<16x64xf32>
    %cst_17 = arith.constant 0.000000e+00 : f32
    %31 = vector.broadcast %cst_17 : f32 to vector<16x64xf32>
    %32 = arith.maximumf %27, %31 : vector<16x64xf32>
    %33 = arith.select %30, %32, %27 : vector<16x64xi1>, vector<16x64xf32>
    %cst_18 = arith.constant 0.000000e+00 : f32
    %34 = vector.broadcast %cst_18 : f32 to vector<1x64xf32>
    %35 = vector.extract_strided_slice %33 {offsets = [1, 0], sizes = [15, 64], strides = [1, 1]} : vector<16x64xf32> to vector<15x64xf32>
    %36 = tpu.concatenate %35, %34 in 0 : vector<15x64xf32>, vector<1x64xf32> -> vector<16x64xf32>
    %37 = arith.maximumf %33, %36 : vector<16x64xf32>
    %c0_19 = arith.constant 0 : index
    %c0_20 = arith.constant 0 : index
    %c0_21 = arith.constant 0 : index
    %38 = vector.load %arg9[%c0_19, %c0_20, %c0_21] : memref<3x8x16xf32, #tpu.memory_space<vmem>>, vector<1x8x16xf32>
    %39 = vector.shape_cast %38 : vector<1x8x16xf32> to vector<8x16xf32>
    %cst_22 = arith.constant dense<0.000000e+00> : vector<8x64xf32>
    %40 = tpu.matmul %39, %37, %cst_22 {dimension_numbers = #tpu.dot_dimension_numbers<[1], [0], [0], [1], [0, 0, 1, 1], [], []>} : vector<8x16xf32>, vector<16x64xf32>, vector<8x64xf32> -> vector<8x64xf32>
    %c0_23 = arith.constant 0 : index
    %c0_24 = arith.constant 0 : index
    %c0_25 = arith.constant 0 : index
    %41 = vector.load %arg10[%c0_23, %c0_24, %c0_25] : memref<6x64x32xf32, #tpu.memory_space<vmem>>, vector<1x64x32xf32>
    %42 = vector.shape_cast %41 : vector<1x64x32xf32> to vector<64x32xf32>
    %c1 = arith.constant 1 : index
    %c0_26 = arith.constant 0 : index
    %c0_27 = arith.constant 0 : index
    %43 = vector.load %arg10[%c1, %c0_26, %c0_27] : memref<6x64x32xf32, #tpu.memory_space<vmem>>, vector<1x64x32xf32>
    %44 = vector.shape_cast %43 : vector<1x64x32xf32> to vector<64x32xf32>
    %cst_28 = arith.constant dense<0.000000e+00> : vector<8x32xf32>
    %45 = tpu.matmul %40, %42, %cst_28 {dimension_numbers = #tpu.dot_dimension_numbers<[1], [0], [0], [1], [0, 0, 1, 1], [], []>} : vector<8x64xf32>, vector<64x32xf32>, vector<8x32xf32> -> vector<8x32xf32>
    %cst_29 = arith.constant dense<0.000000e+00> : vector<8x32xf32>
    %46 = tpu.matmul %40, %44, %cst_29 {dimension_numbers = #tpu.dot_dimension_numbers<[1], [0], [0], [1], [0, 0, 1, 1], [], []>} : vector<8x64xf32>, vector<64x32xf32>, vector<8x32xf32> -> vector<8x32xf32>
    %47 = arith.maximumf %45, %46 : vector<8x32xf32>
    %48 = tpu.concatenate %18, %33 in 1 : vector<16x64xf32>, vector<16x64xf32> -> vector<16x128xf32>
    %c0_30 = arith.constant 0 : index
    %c0_31 = arith.constant 0 : index
    %c0_32 = arith.constant 0 : index
    %49 = vector.load %arg13[%c0_30, %c0_31, %c0_32] : memref<1x16x128xf32, #tpu.memory_space<vmem>>, vector<1x16x128xf32>
    %50 = vector.shape_cast %49 : vector<1x16x128xf32> to vector<16x128xf32>
    %51 = vector.shape_cast %48 : vector<16x128xf32> to vector<1x16x128xf32>
    tpu.vector_store %arg13[%c0_30, %c0_31, %c0_32], %51 {strides = array<i32>} : memref<1x16x128xf32, #tpu.memory_space<vmem>>, vector<1x16x128xf32>,
    %c0_33 = arith.constant 0 : index
    %c0_34 = arith.constant 0 : index
    %c0_35 = arith.constant 0 : index
    %52 = vector.load %arg3[%c0_33, %c0_34, %c0_35] : memref<1x8x128xf32, #tpu.memory_space<vmem>>, vector<1x8x128xf32>
    %53 = vector.shape_cast %52 : vector<1x8x128xf32> to vector<8x128xf32>
    %cst_36 = arith.constant 0.000000e+00 : f32
    %54 = vector.broadcast %cst_36 : f32 to vector<1x32xf32>
    %55 = vector.extract_strided_slice %47 {offsets = [0, 0], sizes = [7, 32], strides = [1, 1]} : vector<8x32xf32> to vector<7x32xf32>
    %56 = tpu.concatenate %54, %55 in 0 : vector<1x32xf32>, vector<7x32xf32> -> vector<8x32xf32>
    %57 = vector.extract_strided_slice %47 {offsets = [1, 0], sizes = [7, 32], strides = [1, 1]} : vector<8x32xf32> to vector<7x32xf32>
    %58 = tpu.concatenate %57, %54 in 0 : vector<7x32xf32>, vector<1x32xf32> -> vector<8x32xf32>
    %59 = tpu.concatenate %56, %47, %58 in 1 : vector<8x32xf32>, vector<8x32xf32>, vector<8x32xf32> -> vector<8x96xf32>
    %c0_37 = arith.constant 0 : index
    %c0_38 = arith.constant 0 : index
    %c0_39 = arith.constant 0 : index
    %60 = vector.load %arg8[%c0_37, %c0_38, %c0_39] : memref<3x96x64xf32, #tpu.memory_space<vmem>>, vector<1x96x64xf32>
    %61 = vector.shape_cast %60 : vector<1x96x64xf32> to vector<96x64xf32>
    %cst_40 = arith.constant dense<0.000000e+00> : vector<8x64xf32>
    %62 = tpu.matmul %59, %61, %cst_40 {dimension_numbers = #tpu.dot_dimension_numbers<[1], [0], [0], [1], [0, 0, 1, 1], [], []>} : vector<8x96xf32>, vector<96x64xf32>, vector<8x64xf32> -> vector<8x64xf32>
    %63 = vector.extract_strided_slice %53 {offsets = [0, 0], sizes = [8, 64], strides = [1, 1]} : vector<8x128xf32> to vector<8x64xf32>
    %cst_41 = arith.constant 5.000000e-01 : f32
    %64 = vector.broadcast %cst_41 : f32 to vector<8x64xf32>
    %65 = arith.cmpf ogt, %63, %64 : vector<8x64xf32>
    %cst_42 = arith.constant 0.000000e+00 : f32
    %66 = vector.broadcast %cst_42 : f32 to vector<8x64xf32>
    %67 = arith.maximumf %62, %66 : vector<8x64xf32>
    %68 = arith.select %65, %67, %62 : vector<8x64xi1>, vector<8x64xf32>
    %cst_43 = arith.constant 0.000000e+00 : f32
    %69 = vector.broadcast %cst_43 : f32 to vector<1x64xf32>
    %70 = vector.extract_strided_slice %68 {offsets = [0, 0], sizes = [7, 64], strides = [1, 1]} : vector<8x64xf32> to vector<7x64xf32>
    %71 = tpu.concatenate %69, %70 in 0 : vector<1x64xf32>, vector<7x64xf32> -> vector<8x64xf32>
    %72 = vector.extract_strided_slice %68 {offsets = [1, 0], sizes = [7, 64], strides = [1, 1]} : vector<8x64xf32> to vector<7x64xf32>
    %73 = tpu.concatenate %72, %69 in 0 : vector<7x64xf32>, vector<1x64xf32> -> vector<8x64xf32>
    %74 = tpu.concatenate %71, %68, %73 in 1 : vector<8x64xf32>, vector<8x64xf32>, vector<8x64xf32> -> vector<8x192xf32>
    %c1_44 = arith.constant 1 : index
    %c0_45 = arith.constant 0 : index
    %c0_46 = arith.constant 0 : index
    %75 = vector.load %arg7[%c1_44, %c0_45, %c0_46] : memref<9x192x64xf32, #tpu.memory_space<vmem>>, vector<1x192x64xf32>
    %76 = vector.shape_cast %75 : vector<1x192x64xf32> to vector<192x64xf32>
    %cst_47 = arith.constant dense<0.000000e+00> : vector<8x64xf32>
    %77 = tpu.matmul %74, %76, %cst_47 {dimension_numbers = #tpu.dot_dimension_numbers<[1], [0], [0], [1], [0, 0, 1, 1], [], []>} : vector<8x192xf32>, vector<192x64xf32>, vector<8x64xf32> -> vector<8x64xf32>
    %78 = vector.extract_strided_slice %53 {offsets = [0, 64], sizes = [8, 64], strides = [1, 1]} : vector<8x128xf32> to vector<8x64xf32>
    %cst_48 = arith.constant 5.000000e-01 : f32
    %79 = vector.broadcast %cst_48 : f32 to vector<8x64xf32>
    %80 = arith.cmpf ogt, %78, %79 : vector<8x64xf32>
    %cst_49 = arith.constant 0.000000e+00 : f32
    %81 = vector.broadcast %cst_49 : f32 to vector<8x64xf32>
    %82 = arith.maximumf %77, %81 : vector<8x64xf32>
    %83 = arith.select %80, %82, %77 : vector<8x64xi1>, vector<8x64xf32>
    %cst_50 = arith.constant 0.000000e+00 : f32
    %84 = vector.broadcast %cst_50 : f32 to vector<1x64xf32>
    %85 = vector.extract_strided_slice %83 {offsets = [1, 0], sizes = [7, 64], strides = [1, 1]} : vector<8x64xf32> to vector<7x64xf32>
    %86 = tpu.concatenate %85, %84 in 0 : vector<7x64xf32>, vector<1x64xf32> -> vector<8x64xf32>
    %87 = arith.maximumf %83, %86 : vector<8x64xf32>
    %c1_51 = arith.constant 1 : index
    %c0_52 = arith.constant 0 : index
    %c0_53 = arith.constant 0 : index
    %88 = vector.load %arg9[%c1_51, %c0_52, %c0_53] : memref<3x8x16xf32, #tpu.memory_space<vmem>>, vector<1x8x16xf32>
    %89 = vector.shape_cast %88 : vector<1x8x16xf32> to vector<8x16xf32>
    %90 = vector.extract_strided_slice %89 {offsets = [0, 0], sizes = [4, 8], strides = [1, 1]} : vector<8x16xf32> to vector<4x8xf32>
    %cst_54 = arith.constant dense<0.000000e+00> : vector<4x64xf32>
    %91 = tpu.matmul %90, %87, %cst_54 {dimension_numbers = #tpu.dot_dimension_numbers<[1], [0], [0], [1], [0, 0, 1, 1], [], []>} : vector<4x8xf32>, vector<8x64xf32>, vector<4x64xf32> -> vector<4x64xf32>
    %c2 = arith.constant 2 : index
    %c0_55 = arith.constant 0 : index
    %c0_56 = arith.constant 0 : index
    %92 = vector.load %arg10[%c2, %c0_55, %c0_56] : memref<6x64x32xf32, #tpu.memory_space<vmem>>, vector<1x64x32xf32>
    %93 = vector.shape_cast %92 : vector<1x64x32xf32> to vector<64x32xf32>
    %c3 = arith.constant 3 : index
    %c0_57 = arith.constant 0 : index
    %c0_58 = arith.constant 0 : index
    %94 = vector.load %arg10[%c3, %c0_57, %c0_58] : memref<6x64x32xf32, #tpu.memory_space<vmem>>, vector<1x64x32xf32>
    %95 = vector.shape_cast %94 : vector<1x64x32xf32> to vector<64x32xf32>
    %cst_59 = arith.constant dense<0.000000e+00> : vector<4x32xf32>
    %96 = tpu.matmul %91, %93, %cst_59 {dimension_numbers = #tpu.dot_dimension_numbers<[1], [0], [0], [1], [0, 0, 1, 1], [], []>} : vector<4x64xf32>, vector<64x32xf32>, vector<4x32xf32> -> vector<4x32xf32>
    %cst_60 = arith.constant dense<0.000000e+00> : vector<4x32xf32>
    %97 = tpu.matmul %91, %95, %cst_60 {dimension_numbers = #tpu.dot_dimension_numbers<[1], [0], [0], [1], [0, 0, 1, 1], [], []>} : vector<4x64xf32>, vector<64x32xf32>, vector<4x32xf32> -> vector<4x32xf32>
    %98 = arith.maximumf %96, %97 : vector<4x32xf32>
    %99 = tpu.concatenate %68, %83 in 1 : vector<8x64xf32>, vector<8x64xf32> -> vector<8x128xf32>
    %c0_61 = arith.constant 0 : index
    %c0_62 = arith.constant 0 : index
    %c0_63 = arith.constant 0 : index
    %100 = vector.load %arg14[%c0_61, %c0_62, %c0_63] : memref<1x8x128xf32, #tpu.memory_space<vmem>>, vector<1x8x128xf32>
    %101 = vector.shape_cast %100 : vector<1x8x128xf32> to vector<8x128xf32>
    %102 = vector.shape_cast %99 : vector<8x128xf32> to vector<1x8x128xf32>
    tpu.vector_store %arg14[%c0_61, %c0_62, %c0_63], %102 {strides = array<i32>} : memref<1x8x128xf32, #tpu.memory_space<vmem>>, vector<1x8x128xf32>,
    %c0_64 = arith.constant 0 : index
    %c0_65 = arith.constant 0 : index
    %c0_66 = arith.constant 0 : index
    %103 = vector.load %arg4[%c0_64, %c0_65, %c0_66] : memref<1x4x192xf32, #tpu.memory_space<vmem>>, vector<1x4x192xf32>
    %104 = vector.shape_cast %103 : vector<1x4x192xf32> to vector<4x192xf32>
    %cst_67 = arith.constant 0.000000e+00 : f32
    %105 = vector.broadcast %cst_67 : f32 to vector<1x32xf32>
    %106 = vector.extract_strided_slice %98 {offsets = [0, 0], sizes = [3, 32], strides = [1, 1]} : vector<4x32xf32> to vector<3x32xf32>
    %107 = tpu.concatenate %105, %106 in 0 : vector<1x32xf32>, vector<3x32xf32> -> vector<4x32xf32>
    %108 = vector.extract_strided_slice %98 {offsets = [1, 0], sizes = [3, 32], strides = [1, 1]} : vector<4x32xf32> to vector<3x32xf32>
    %109 = tpu.concatenate %108, %105 in 0 : vector<3x32xf32>, vector<1x32xf32> -> vector<4x32xf32>
    %110 = tpu.concatenate %107, %98, %109 in 1 : vector<4x32xf32>, vector<4x32xf32>, vector<4x32xf32> -> vector<4x96xf32>
    %c1_68 = arith.constant 1 : index
    %c0_69 = arith.constant 0 : index
    %c0_70 = arith.constant 0 : index
    %111 = vector.load %arg8[%c1_68, %c0_69, %c0_70] : memref<3x96x64xf32, #tpu.memory_space<vmem>>, vector<1x96x64xf32>
    %112 = vector.shape_cast %111 : vector<1x96x64xf32> to vector<96x64xf32>
    %cst_71 = arith.constant dense<0.000000e+00> : vector<4x64xf32>
    %113 = tpu.matmul %110, %112, %cst_71 {dimension_numbers = #tpu.dot_dimension_numbers<[1], [0], [0], [1], [0, 0, 1, 1], [], []>} : vector<4x96xf32>, vector<96x64xf32>, vector<4x64xf32> -> vector<4x64xf32>
    %114 = vector.extract_strided_slice %104 {offsets = [0, 0], sizes = [4, 64], strides = [1, 1]} : vector<4x192xf32> to vector<4x64xf32>
    %cst_72 = arith.constant 5.000000e-01 : f32
    %115 = vector.broadcast %cst_72 : f32 to vector<4x64xf32>
    %116 = arith.cmpf ogt, %114, %115 : vector<4x64xf32>
    %cst_73 = arith.constant 0.000000e+00 : f32
    %117 = vector.broadcast %cst_73 : f32 to vector<4x64xf32>
    %118 = arith.maximumf %113, %117 : vector<4x64xf32>
    %119 = arith.select %116, %118, %113 : vector<4x64xi1>, vector<4x64xf32>
    %cst_74 = arith.constant 0.000000e+00 : f32
    %120 = vector.broadcast %cst_74 : f32 to vector<1x64xf32>
    %121 = vector.extract_strided_slice %119 {offsets = [0, 0], sizes = [3, 64], strides = [1, 1]} : vector<4x64xf32> to vector<3x64xf32>
    %122 = tpu.concatenate %120, %121 in 0 : vector<1x64xf32>, vector<3x64xf32> -> vector<4x64xf32>
    %123 = vector.extract_strided_slice %119 {offsets = [1, 0], sizes = [3, 64], strides = [1, 1]} : vector<4x64xf32> to vector<3x64xf32>
    %124 = tpu.concatenate %123, %120 in 0 : vector<3x64xf32>, vector<1x64xf32> -> vector<4x64xf32>
    %125 = tpu.concatenate %122, %119, %124 in 1 : vector<4x64xf32>, vector<4x64xf32>, vector<4x64xf32> -> vector<4x192xf32>
    %c2_75 = arith.constant 2 : index
    %c0_76 = arith.constant 0 : index
    %c0_77 = arith.constant 0 : index
    %126 = vector.load %arg7[%c2_75, %c0_76, %c0_77] : memref<9x192x64xf32, #tpu.memory_space<vmem>>, vector<1x192x64xf32>
    %127 = vector.shape_cast %126 : vector<1x192x64xf32> to vector<192x64xf32>
    %cst_78 = arith.constant dense<0.000000e+00> : vector<4x64xf32>
    %128 = tpu.matmul %125, %127, %cst_78 {dimension_numbers = #tpu.dot_dimension_numbers<[1], [0], [0], [1], [0, 0, 1, 1], [], []>} : vector<4x192xf32>, vector<192x64xf32>, vector<4x64xf32> -> vector<4x64xf32>
    %129 = vector.extract_strided_slice %104 {offsets = [0, 64], sizes = [4, 64], strides = [1, 1]} : vector<4x192xf32> to vector<4x64xf32>
    %cst_79 = arith.constant 5.000000e-01 : f32
    %130 = vector.broadcast %cst_79 : f32 to vector<4x64xf32>
    %131 = arith.cmpf ogt, %129, %130 : vector<4x64xf32>
    %cst_80 = arith.constant 0.000000e+00 : f32
    %132 = vector.broadcast %cst_80 : f32 to vector<4x64xf32>
    %133 = arith.maximumf %128, %132 : vector<4x64xf32>
    %134 = arith.select %131, %133, %128 : vector<4x64xi1>, vector<4x64xf32>
    %cst_81 = arith.constant 0.000000e+00 : f32
    %135 = vector.broadcast %cst_81 : f32 to vector<1x64xf32>
    %136 = vector.extract_strided_slice %134 {offsets = [0, 0], sizes = [3, 64], strides = [1, 1]} : vector<4x64xf32> to vector<3x64xf32>
    %137 = tpu.concatenate %135, %136 in 0 : vector<1x64xf32>, vector<3x64xf32> -> vector<4x64xf32>
    %138 = vector.extract_strided_slice %134 {offsets = [1, 0], sizes = [3, 64], strides = [1, 1]} : vector<4x64xf32> to vector<3x64xf32>
    %139 = tpu.concatenate %138, %135 in 0 : vector<3x64xf32>, vector<1x64xf32> -> vector<4x64xf32>
    %140 = tpu.concatenate %137, %134, %139 in 1 : vector<4x64xf32>, vector<4x64xf32>, vector<4x64xf32> -> vector<4x192xf32>
    %c3_82 = arith.constant 3 : index
    %c0_83 = arith.constant 0 : index
    %c0_84 = arith.constant 0 : index
    %141 = vector.load %arg7[%c3_82, %c0_83, %c0_84] : memref<9x192x64xf32, #tpu.memory_space<vmem>>, vector<1x192x64xf32>
    %142 = vector.shape_cast %141 : vector<1x192x64xf32> to vector<192x64xf32>
    %cst_85 = arith.constant dense<0.000000e+00> : vector<4x64xf32>
    %143 = tpu.matmul %140, %142, %cst_85 {dimension_numbers = #tpu.dot_dimension_numbers<[1], [0], [0], [1], [0, 0, 1, 1], [], []>} : vector<4x192xf32>, vector<192x64xf32>, vector<4x64xf32> -> vector<4x64xf32>
    %144 = vector.extract_strided_slice %104 {offsets = [0, 128], sizes = [4, 64], strides = [1, 1]} : vector<4x192xf32> to vector<4x64xf32>
    %cst_86 = arith.constant 5.000000e-01 : f32
    %145 = vector.broadcast %cst_86 : f32 to vector<4x64xf32>
    %146 = arith.cmpf ogt, %144, %145 : vector<4x64xf32>
    %cst_87 = arith.constant 0.000000e+00 : f32
    %147 = vector.broadcast %cst_87 : f32 to vector<4x64xf32>
    %148 = arith.maximumf %143, %147 : vector<4x64xf32>
    %149 = arith.select %146, %148, %143 : vector<4x64xi1>, vector<4x64xf32>
    %cst_88 = arith.constant 0.000000e+00 : f32
    %150 = vector.broadcast %cst_88 : f32 to vector<1x64xf32>
    %151 = vector.extract_strided_slice %149 {offsets = [1, 0], sizes = [3, 64], strides = [1, 1]} : vector<4x64xf32> to vector<3x64xf32>
    %152 = tpu.concatenate %151, %150 in 0 : vector<3x64xf32>, vector<1x64xf32> -> vector<4x64xf32>
    %153 = arith.maximumf %149, %152 : vector<4x64xf32>
    %c2_89 = arith.constant 2 : index
    %c0_90 = arith.constant 0 : index
    %c0_91 = arith.constant 0 : index
    %154 = vector.load %arg9[%c2_89, %c0_90, %c0_91] : memref<3x8x16xf32, #tpu.memory_space<vmem>>, vector<1x8x16xf32>
    %155 = vector.shape_cast %154 : vector<1x8x16xf32> to vector<8x16xf32>
    %156 = vector.extract_strided_slice %155 {offsets = [0, 0], sizes = [2, 4], strides = [1, 1]} : vector<8x16xf32> to vector<2x4xf32>
    %cst_92 = arith.constant dense<0.000000e+00> : vector<2x64xf32>
    %157 = tpu.matmul %156, %153, %cst_92 {dimension_numbers = #tpu.dot_dimension_numbers<[1], [0], [0], [1], [0, 0, 1, 1], [], []>} : vector<2x4xf32>, vector<4x64xf32>, vector<2x64xf32> -> vector<2x64xf32>
    %c4 = arith.constant 4 : index
    %c0_93 = arith.constant 0 : index
    %c0_94 = arith.constant 0 : index
    %158 = vector.load %arg10[%c4, %c0_93, %c0_94] : memref<6x64x32xf32, #tpu.memory_space<vmem>>, vector<1x64x32xf32>
    %159 = vector.shape_cast %158 : vector<1x64x32xf32> to vector<64x32xf32>
    %c5 = arith.constant 5 : index
    %c0_95 = arith.constant 0 : index
    %c0_96 = arith.constant 0 : index
    %160 = vector.load %arg10[%c5, %c0_95, %c0_96] : memref<6x64x32xf32, #tpu.memory_space<vmem>>, vector<1x64x32xf32>
    %161 = vector.shape_cast %160 : vector<1x64x32xf32> to vector<64x32xf32>
    %cst_97 = arith.constant dense<0.000000e+00> : vector<2x32xf32>
    %162 = tpu.matmul %157, %159, %cst_97 {dimension_numbers = #tpu.dot_dimension_numbers<[1], [0], [0], [1], [0, 0, 1, 1], [], []>} : vector<2x64xf32>, vector<64x32xf32>, vector<2x32xf32> -> vector<2x32xf32>
    %cst_98 = arith.constant dense<0.000000e+00> : vector<2x32xf32>
    %163 = tpu.matmul %157, %161, %cst_98 {dimension_numbers = #tpu.dot_dimension_numbers<[1], [0], [0], [1], [0, 0, 1, 1], [], []>} : vector<2x64xf32>, vector<64x32xf32>, vector<2x32xf32> -> vector<2x32xf32>
    %164 = arith.maximumf %162, %163 : vector<2x32xf32>
    %cst_99 = arith.constant 0.000000e+00 : f32
    %165 = vector.broadcast %cst_99 : f32 to vector<4x64xf32>
    %166 = tpu.concatenate %119, %134, %149, %165 in 1 : vector<4x64xf32>, vector<4x64xf32>, vector<4x64xf32>, vector<4x64xf32> -> vector<4x256xf32>
    %c0_100 = arith.constant 0 : index
    %c0_101 = arith.constant 0 : index
    %c0_102 = arith.constant 0 : index
    %167 = vector.load %arg15[%c0_100, %c0_101, %c0_102] : memref<1x4x256xf32, #tpu.memory_space<vmem>>, vector<1x4x256xf32>
    %168 = vector.shape_cast %167 : vector<1x4x256xf32> to vector<4x256xf32>
    %169 = vector.shape_cast %166 : vector<4x256xf32> to vector<1x4x256xf32>
    tpu.vector_store %arg15[%c0_100, %c0_101, %c0_102], %169 {strides = array<i32>} : memref<1x4x256xf32, #tpu.memory_space<vmem>>, vector<1x4x256xf32>,
    %c0_103 = arith.constant 0 : index
    %c0_104 = arith.constant 0 : index
    %c0_105 = arith.constant 0 : index
    %170 = vector.load %arg5[%c0_103, %c0_104, %c0_105] : memref<1x2x384xf32, #tpu.memory_space<vmem>>, vector<1x2x384xf32>
    %171 = vector.shape_cast %170 : vector<1x2x384xf32> to vector<2x384xf32>
    %cst_106 = arith.constant 0.000000e+00 : f32
    %172 = vector.broadcast %cst_106 : f32 to vector<1x32xf32>
    %173 = vector.extract_strided_slice %164 {offsets = [0, 0], sizes = [1, 32], strides = [1, 1]} : vector<2x32xf32> to vector<1x32xf32>
    %174 = tpu.concatenate %172, %173 in 0 : vector<1x32xf32>, vector<1x32xf32> -> vector<2x32xf32>
    %175 = vector.extract_strided_slice %164 {offsets = [1, 0], sizes = [1, 32], strides = [1, 1]} : vector<2x32xf32> to vector<1x32xf32>
    %176 = tpu.concatenate %175, %172 in 0 : vector<1x32xf32>, vector<1x32xf32> -> vector<2x32xf32>
    %177 = tpu.concatenate %174, %164, %176 in 1 : vector<2x32xf32>, vector<2x32xf32>, vector<2x32xf32> -> vector<2x96xf32>
    %c2_107 = arith.constant 2 : index
    %c0_108 = arith.constant 0 : index
    %c0_109 = arith.constant 0 : index
    %178 = vector.load %arg8[%c2_107, %c0_108, %c0_109] : memref<3x96x64xf32, #tpu.memory_space<vmem>>, vector<1x96x64xf32>
    %179 = vector.shape_cast %178 : vector<1x96x64xf32> to vector<96x64xf32>
    %cst_110 = arith.constant dense<0.000000e+00> : vector<2x64xf32>
    %180 = tpu.matmul %177, %179, %cst_110 {dimension_numbers = #tpu.dot_dimension_numbers<[1], [0], [0], [1], [0, 0, 1, 1], [], []>} : vector<2x96xf32>, vector<96x64xf32>, vector<2x64xf32> -> vector<2x64xf32>
    %181 = vector.extract_strided_slice %171 {offsets = [0, 0], sizes = [2, 64], strides = [1, 1]} : vector<2x384xf32> to vector<2x64xf32>
    %cst_111 = arith.constant 5.000000e-01 : f32
    %182 = vector.broadcast %cst_111 : f32 to vector<2x64xf32>
    %183 = arith.cmpf ogt, %181, %182 : vector<2x64xf32>
    %cst_112 = arith.constant 0.000000e+00 : f32
    %184 = vector.broadcast %cst_112 : f32 to vector<2x64xf32>
    %185 = arith.maximumf %180, %184 : vector<2x64xf32>
    %186 = arith.select %183, %185, %180 : vector<2x64xi1>, vector<2x64xf32>
    %cst_113 = arith.constant 0.000000e+00 : f32
    %187 = vector.broadcast %cst_113 : f32 to vector<1x64xf32>
    %188 = vector.extract_strided_slice %186 {offsets = [0, 0], sizes = [1, 64], strides = [1, 1]} : vector<2x64xf32> to vector<1x64xf32>
    %189 = tpu.concatenate %187, %188 in 0 : vector<1x64xf32>, vector<1x64xf32> -> vector<2x64xf32>
    %190 = vector.extract_strided_slice %186 {offsets = [1, 0], sizes = [1, 64], strides = [1, 1]} : vector<2x64xf32> to vector<1x64xf32>
    %191 = tpu.concatenate %190, %187 in 0 : vector<1x64xf32>, vector<1x64xf32> -> vector<2x64xf32>
    %192 = tpu.concatenate %189, %186, %191 in 1 : vector<2x64xf32>, vector<2x64xf32>, vector<2x64xf32> -> vector<2x192xf32>
    %c4_114 = arith.constant 4 : index
    %c0_115 = arith.constant 0 : index
    %c0_116 = arith.constant 0 : index
    %193 = vector.load %arg7[%c4_114, %c0_115, %c0_116] : memref<9x192x64xf32, #tpu.memory_space<vmem>>, vector<1x192x64xf32>
    %194 = vector.shape_cast %193 : vector<1x192x64xf32> to vector<192x64xf32>
    %cst_117 = arith.constant dense<0.000000e+00> : vector<2x64xf32>
    %195 = tpu.matmul %192, %194, %cst_117 {dimension_numbers = #tpu.dot_dimension_numbers<[1], [0], [0], [1], [0, 0, 1, 1], [], []>} : vector<2x192xf32>, vector<192x64xf32>, vector<2x64xf32> -> vector<2x64xf32>
    %196 = vector.extract_strided_slice %171 {offsets = [0, 64], sizes = [2, 64], strides = [1, 1]} : vector<2x384xf32> to vector<2x64xf32>
    %cst_118 = arith.constant 5.000000e-01 : f32
    %197 = vector.broadcast %cst_118 : f32 to vector<2x64xf32>
    %198 = arith.cmpf ogt, %196, %197 : vector<2x64xf32>
    %cst_119 = arith.constant 0.000000e+00 : f32
    %199 = vector.broadcast %cst_119 : f32 to vector<2x64xf32>
    %200 = arith.maximumf %195, %199 : vector<2x64xf32>
    %201 = arith.select %198, %200, %195 : vector<2x64xi1>, vector<2x64xf32>
    %cst_120 = arith.constant 0.000000e+00 : f32
    %202 = vector.broadcast %cst_120 : f32 to vector<1x64xf32>
    %203 = vector.extract_strided_slice %201 {offsets = [0, 0], sizes = [1, 64], strides = [1, 1]} : vector<2x64xf32> to vector<1x64xf32>
    %204 = tpu.concatenate %202, %203 in 0 : vector<1x64xf32>, vector<1x64xf32> -> vector<2x64xf32>
    %205 = vector.extract_strided_slice %201 {offsets = [1, 0], sizes = [1, 64], strides = [1, 1]} : vector<2x64xf32> to vector<1x64xf32>
    %206 = tpu.concatenate %205, %202 in 0 : vector<1x64xf32>, vector<1x64xf32> -> vector<2x64xf32>
    %207 = tpu.concatenate %204, %201, %206 in 1 : vector<2x64xf32>, vector<2x64xf32>, vector<2x64xf32> -> vector<2x192xf32>
    %c5_121 = arith.constant 5 : index
    %c0_122 = arith.constant 0 : index
    %c0_123 = arith.constant 0 : index
    %208 = vector.load %arg7[%c5_121, %c0_122, %c0_123] : memref<9x192x64xf32, #tpu.memory_space<vmem>>, vector<1x192x64xf32>
    %209 = vector.shape_cast %208 : vector<1x192x64xf32> to vector<192x64xf32>
    %cst_124 = arith.constant dense<0.000000e+00> : vector<2x64xf32>
    %210 = tpu.matmul %207, %209, %cst_124 {dimension_numbers = #tpu.dot_dimension_numbers<[1], [0], [0], [1], [0, 0, 1, 1], [], []>} : vector<2x192xf32>, vector<192x64xf32>, vector<2x64xf32> -> vector<2x64xf32>
    %211 = vector.extract_strided_slice %171 {offsets = [0, 128], sizes = [2, 64], strides = [1, 1]} : vector<2x384xf32> to vector<2x64xf32>
    %cst_125 = arith.constant 5.000000e-01 : f32
    %212 = vector.broadcast %cst_125 : f32 to vector<2x64xf32>
    %213 = arith.cmpf ogt, %211, %212 : vector<2x64xf32>
    %cst_126 = arith.constant 0.000000e+00 : f32
    %214 = vector.broadcast %cst_126 : f32 to vector<2x64xf32>
    %215 = arith.maximumf %210, %214 : vector<2x64xf32>
    %216 = arith.select %213, %215, %210 : vector<2x64xi1>, vector<2x64xf32>
    %cst_127 = arith.constant 0.000000e+00 : f32
    %217 = vector.broadcast %cst_127 : f32 to vector<1x64xf32>
    %218 = vector.extract_strided_slice %216 {offsets = [0, 0], sizes = [1, 64], strides = [1, 1]} : vector<2x64xf32> to vector<1x64xf32>
    %219 = tpu.concatenate %217, %218 in 0 : vector<1x64xf32>, vector<1x64xf32> -> vector<2x64xf32>
    %220 = vector.extract_strided_slice %216 {offsets = [1, 0], sizes = [1, 64], strides = [1, 1]} : vector<2x64xf32> to vector<1x64xf32>
    %221 = tpu.concatenate %220, %217 in 0 : vector<1x64xf32>, vector<1x64xf32> -> vector<2x64xf32>
    %222 = tpu.concatenate %219, %216, %221 in 1 : vector<2x64xf32>, vector<2x64xf32>, vector<2x64xf32> -> vector<2x192xf32>
    %c6 = arith.constant 6 : index
    %c0_128 = arith.constant 0 : index
    %c0_129 = arith.constant 0 : index
    %223 = vector.load %arg7[%c6, %c0_128, %c0_129] : memref<9x192x64xf32, #tpu.memory_space<vmem>>, vector<1x192x64xf32>
    %224 = vector.shape_cast %223 : vector<1x192x64xf32> to vector<192x64xf32>
    %cst_130 = arith.constant dense<0.000000e+00> : vector<2x64xf32>
    %225 = tpu.matmul %222, %224, %cst_130 {dimension_numbers = #tpu.dot_dimension_numbers<[1], [0], [0], [1], [0, 0, 1, 1], [], []>} : vector<2x192xf32>, vector<192x64xf32>, vector<2x64xf32> -> vector<2x64xf32>
    %226 = vector.extract_strided_slice %171 {offsets = [0, 192], sizes = [2, 64], strides = [1, 1]} : vector<2x384xf32> to vector<2x64xf32>
    %cst_131 = arith.constant 5.000000e-01 : f32
    %227 = vector.broadcast %cst_131 : f32 to vector<2x64xf32>
    %228 = arith.cmpf ogt, %226, %227 : vector<2x64xf32>
    %cst_132 = arith.constant 0.000000e+00 : f32
    %229 = vector.broadcast %cst_132 : f32 to vector<2x64xf32>
    %230 = arith.maximumf %225, %229 : vector<2x64xf32>
    %231 = arith.select %228, %230, %225 : vector<2x64xi1>, vector<2x64xf32>
    %cst_133 = arith.constant 0.000000e+00 : f32
    %232 = vector.broadcast %cst_133 : f32 to vector<1x64xf32>
    %233 = vector.extract_strided_slice %231 {offsets = [0, 0], sizes = [1, 64], strides = [1, 1]} : vector<2x64xf32> to vector<1x64xf32>
    %234 = tpu.concatenate %232, %233 in 0 : vector<1x64xf32>, vector<1x64xf32> -> vector<2x64xf32>
    %235 = vector.extract_strided_slice %231 {offsets = [1, 0], sizes = [1, 64], strides = [1, 1]} : vector<2x64xf32> to vector<1x64xf32>
    %236 = tpu.concatenate %235, %232 in 0 : vector<1x64xf32>, vector<1x64xf32> -> vector<2x64xf32>
    %237 = tpu.concatenate %234, %231, %236 in 1 : vector<2x64xf32>, vector<2x64xf32>, vector<2x64xf32> -> vector<2x192xf32>
    %c7 = arith.constant 7 : index
    %c0_134 = arith.constant 0 : index
    %c0_135 = arith.constant 0 : index
    %238 = vector.load %arg7[%c7, %c0_134, %c0_135] : memref<9x192x64xf32, #tpu.memory_space<vmem>>, vector<1x192x64xf32>
    %239 = vector.shape_cast %238 : vector<1x192x64xf32> to vector<192x64xf32>
    %cst_136 = arith.constant dense<0.000000e+00> : vector<2x64xf32>
    %240 = tpu.matmul %237, %239, %cst_136 {dimension_numbers = #tpu.dot_dimension_numbers<[1], [0], [0], [1], [0, 0, 1, 1], [], []>} : vector<2x192xf32>, vector<192x64xf32>, vector<2x64xf32> -> vector<2x64xf32>
    %241 = vector.extract_strided_slice %171 {offsets = [0, 256], sizes = [2, 64], strides = [1, 1]} : vector<2x384xf32> to vector<2x64xf32>
    %cst_137 = arith.constant 5.000000e-01 : f32
    %242 = vector.broadcast %cst_137 : f32 to vector<2x64xf32>
    %243 = arith.cmpf ogt, %241, %242 : vector<2x64xf32>
    %cst_138 = arith.constant 0.000000e+00 : f32
    %244 = vector.broadcast %cst_138 : f32 to vector<2x64xf32>
    %245 = arith.maximumf %240, %244 : vector<2x64xf32>
    %246 = arith.select %243, %245, %240 : vector<2x64xi1>, vector<2x64xf32>
    %cst_139 = arith.constant 0.000000e+00 : f32
    %247 = vector.broadcast %cst_139 : f32 to vector<1x64xf32>
    %248 = vector.extract_strided_slice %246 {offsets = [0, 0], sizes = [1, 64], strides = [1, 1]} : vector<2x64xf32> to vector<1x64xf32>
    %249 = tpu.concatenate %247, %248 in 0 : vector<1x64xf32>, vector<1x64xf32> -> vector<2x64xf32>
    %250 = vector.extract_strided_slice %246 {offsets = [1, 0], sizes = [1, 64], strides = [1, 1]} : vector<2x64xf32> to vector<1x64xf32>
    %251 = tpu.concatenate %250, %247 in 0 : vector<1x64xf32>, vector<1x64xf32> -> vector<2x64xf32>
    %252 = tpu.concatenate %249, %246, %251 in 1 : vector<2x64xf32>, vector<2x64xf32>, vector<2x64xf32> -> vector<2x192xf32>
    %c8 = arith.constant 8 : index
    %c0_140 = arith.constant 0 : index
    %c0_141 = arith.constant 0 : index
    %253 = vector.load %arg7[%c8, %c0_140, %c0_141] : memref<9x192x64xf32, #tpu.memory_space<vmem>>, vector<1x192x64xf32>
    %254 = vector.shape_cast %253 : vector<1x192x64xf32> to vector<192x64xf32>
    %cst_142 = arith.constant dense<0.000000e+00> : vector<2x64xf32>
    %255 = tpu.matmul %252, %254, %cst_142 {dimension_numbers = #tpu.dot_dimension_numbers<[1], [0], [0], [1], [0, 0, 1, 1], [], []>} : vector<2x192xf32>, vector<192x64xf32>, vector<2x64xf32> -> vector<2x64xf32>
    %256 = vector.extract_strided_slice %171 {offsets = [0, 320], sizes = [2, 64], strides = [1, 1]} : vector<2x384xf32> to vector<2x64xf32>
    %cst_143 = arith.constant 5.000000e-01 : f32
    %257 = vector.broadcast %cst_143 : f32 to vector<2x64xf32>
    %258 = arith.cmpf ogt, %256, %257 : vector<2x64xf32>
    %cst_144 = arith.constant 0.000000e+00 : f32
    %259 = vector.broadcast %cst_144 : f32 to vector<2x64xf32>
    %260 = arith.maximumf %255, %259 : vector<2x64xf32>
    %261 = arith.select %258, %260, %255 : vector<2x64xi1>, vector<2x64xf32>
    %262 = tpu.concatenate %186, %201, %216, %231, %246, %261 in 1 : vector<2x64xf32>, vector<2x64xf32>, vector<2x64xf32>, vector<2x64xf32>, vector<2x64xf32>, vector<2x64xf32> -> vector<2x384xf32>
    %c0_145 = arith.constant 0 : index
    %c0_146 = arith.constant 0 : index
    %c0_147 = arith.constant 0 : index
    %263 = vector.load %arg16[%c0_145, %c0_146, %c0_147] : memref<1x2x384xf32, #tpu.memory_space<vmem>>, vector<1x2x384xf32>
    %264 = vector.shape_cast %263 : vector<1x2x384xf32> to vector<2x384xf32>
    %265 = vector.shape_cast %262 : vector<2x384xf32> to vector<1x2x384xf32>
    tpu.vector_store %arg16[%c0_145, %c0_146, %c0_147], %265 {strides = array<i32>} : memref<1x2x384xf32, #tpu.memory_space<vmem>>, vector<1x2x384xf32>,
    %266 = vector.extract_strided_slice %261 {offsets = [0, 0], sizes = [1, 64], strides = [1, 1]} : vector<2x64xf32> to vector<1x64xf32>
    %267 = vector.extract_strided_slice %261 {offsets = [1, 0], sizes = [1, 64], strides = [1, 1]} : vector<2x64xf32> to vector<1x64xf32>
    %268 = arith.addf %266, %267 : vector<1x64xf32>
    %cst_148 = arith.constant 5.000000e-01 : f32
    %269 = vector.broadcast %cst_148 : f32 to vector<1x64xf32>
    %270 = arith.mulf %268, %269 : vector<1x64xf32>
    %c0_149 = arith.constant 0 : index
    %c0_150 = arith.constant 0 : index
    %271 = vector.load %arg11[%c0_149, %c0_150] : memref<64x128xf32, #tpu.memory_space<vmem>>, vector<64x128xf32>
    %cst_151 = arith.constant dense<0.000000e+00> : vector<1x128xf32>
    %272 = tpu.matmul %270, %271, %cst_151 {dimension_numbers = #tpu.dot_dimension_numbers<[1], [0], [0], [1], [0, 0, 1, 1], [], []>} : vector<1x64xf32>, vector<64x128xf32>, vector<1x128xf32> -> vector<1x128xf32>
    %c0_152 = arith.constant 0 : index
    %c0_153 = arith.constant 0 : index
    %273 = vector.load %arg12[%c0_152, %c0_153] : memref<1x128xf32, #tpu.memory_space<vmem>>, vector<1x128xf32>
    %274 = arith.addf %272, %273 : vector<1x128xf32>
    %c0_154 = arith.constant 0 : index
    %c0_155 = arith.constant 0 : index
    %c0_156 = arith.constant 0 : index
    %275 = vector.load %arg17[%c0_154, %c0_155, %c0_156] : memref<1x1x128xf32, #tpu.memory_space<vmem>>, vector<1x1x128xf32>
    %276 = vector.shape_cast %275 : vector<1x1x128xf32> to vector<1x128xf32>
    %277 = vector.shape_cast %274 : vector<1x128xf32> to vector<1x1x128xf32>
    tpu.vector_store %arg17[%c0_154, %c0_155, %c0_156], %277 {strides = array<i32>} : memref<1x1x128xf32, #tpu.memory_space<vmem>>, vector<1x1x128xf32>,
    return
  }
  func.func @transform_0(%arg0: i32) -> (i32, i32, i32) {
    %c0_i32 = arith.constant 0 : i32
    %c0_i32_0 = arith.constant 0 : i32
    %c0_i32_1 = arith.constant 0 : i32
    return %arg0, %c0_i32, %c0_i32_0 : i32, i32, i32
  }
  func.func @transform_1(%arg0: i32) -> (i32, i32, i32) {
    %c0_i32 = arith.constant 0 : i32
    %c0_i32_0 = arith.constant 0 : i32
    %c0_i32_1 = arith.constant 0 : i32
    return %arg0, %c0_i32, %c0_i32_0 : i32, i32, i32
  }
  func.func @transform_2(%arg0: i32) -> (i32, i32, i32) {
    %c0_i32 = arith.constant 0 : i32
    %c0_i32_0 = arith.constant 0 : i32
    %c0_i32_1 = arith.constant 0 : i32
    return %arg0, %c0_i32, %c0_i32_0 : i32, i32, i32
  }
  func.func @transform_3(%arg0: i32) -> (i32, i32, i32) {
    %c0_i32 = arith.constant 0 : i32
    %c0_i32_0 = arith.constant 0 : i32
    %c0_i32_1 = arith.constant 0 : i32
    return %arg0, %c0_i32, %c0_i32_0 : i32, i32, i32
  }
  func.func @transform_4(%arg0: i32) -> (i32, i32, i32) {
    %c0_i32 = arith.constant 0 : i32
    %c0_i32_0 = arith.constant 0 : i32
    %c0_i32_1 = arith.constant 0 : i32
    return %arg0, %c0_i32, %c0_i32_0 : i32, i32, i32
  }
  func.func @transform_5(%arg0: i32) -> (i32, i32, i32) {
    %c0_i32 = arith.constant 0 : i32
    %c0_i32_0 = arith.constant 0 : i32
    %c0_i32_1 = arith.constant 0 : i32
    %c0_i32_2 = arith.constant 0 : i32
    return %c0_i32, %c0_i32_0, %c0_i32_1 : i32, i32, i32
  }
  func.func @transform_6(%arg0: i32) -> (i32, i32, i32) {
    %c0_i32 = arith.constant 0 : i32
    %c0_i32_0 = arith.constant 0 : i32
    %c0_i32_1 = arith.constant 0 : i32
    %c0_i32_2 = arith.constant 0 : i32
    return %c0_i32, %c0_i32_0, %c0_i32_1 : i32, i32, i32
  }
  func.func @transform_7(%arg0: i32) -> (i32, i32, i32) {
    %c0_i32 = arith.constant 0 : i32
    %c0_i32_0 = arith.constant 0 : i32
    %c0_i32_1 = arith.constant 0 : i32
    %c0_i32_2 = arith.constant 0 : i32
    return %c0_i32, %c0_i32_0, %c0_i32_1 : i32, i32, i32
  }
  func.func @transform_8(%arg0: i32) -> (i32, i32, i32) {
    %c0_i32 = arith.constant 0 : i32
    %c0_i32_0 = arith.constant 0 : i32
    %c0_i32_1 = arith.constant 0 : i32
    %c0_i32_2 = arith.constant 0 : i32
    return %c0_i32, %c0_i32_0, %c0_i32_1 : i32, i32, i32
  }
  func.func @transform_9(%arg0: i32) -> (i32, i32, i32) {
    %c0_i32 = arith.constant 0 : i32
    %c0_i32_0 = arith.constant 0 : i32
    %c0_i32_1 = arith.constant 0 : i32
    %c0_i32_2 = arith.constant 0 : i32
    return %c0_i32, %c0_i32_0, %c0_i32_1 : i32, i32, i32
  }
  func.func @transform_10(%arg0: i32) -> (i32, i32) {
    %c0_i32 = arith.constant 0 : i32
    %c0_i32_0 = arith.constant 0 : i32
    %c0_i32_1 = arith.constant 0 : i32
    return %c0_i32, %c0_i32_0 : i32, i32
  }
  func.func @transform_11(%arg0: i32) -> (i32, i32) {
    %c0_i32 = arith.constant 0 : i32
    %c0_i32_0 = arith.constant 0 : i32
    %c0_i32_1 = arith.constant 0 : i32
    return %c0_i32, %c0_i32_0 : i32, i32
  }
  func.func @transform_12(%arg0: i32) -> (i32, i32, i32) {
    %c0_i32 = arith.constant 0 : i32
    %c0_i32_0 = arith.constant 0 : i32
    %c0_i32_1 = arith.constant 0 : i32
    return %arg0, %c0_i32, %c0_i32_0 : i32, i32, i32
  }
  func.func @transform_13(%arg0: i32) -> (i32, i32, i32) {
    %c0_i32 = arith.constant 0 : i32
    %c0_i32_0 = arith.constant 0 : i32
    %c0_i32_1 = arith.constant 0 : i32
    return %arg0, %c0_i32, %c0_i32_0 : i32, i32, i32
  }
  func.func @transform_14(%arg0: i32) -> (i32, i32, i32) {
    %c0_i32 = arith.constant 0 : i32
    %c0_i32_0 = arith.constant 0 : i32
    %c0_i32_1 = arith.constant 0 : i32
    return %arg0, %c0_i32, %c0_i32_0 : i32, i32, i32
  }
  func.func @transform_15(%arg0: i32) -> (i32, i32, i32) {
    %c0_i32 = arith.constant 0 : i32
    %c0_i32_0 = arith.constant 0 : i32
    %c0_i32_1 = arith.constant 0 : i32
    return %arg0, %c0_i32, %c0_i32_0 : i32, i32, i32
  }
  func.func @transform_16(%arg0: i32) -> (i32, i32, i32) {
    %c0_i32 = arith.constant 0 : i32
    %c0_i32_0 = arith.constant 0 : i32
    %c0_i32_1 = arith.constant 0 : i32
    return %arg0, %c0_i32, %c0_i32_0 : i32, i32, i32
  }
}

</mosaic_0001>

<llo_original>
// kernel: forward.1
$region0: #{forward.1}
  #allocation0 [shape = 'u32[]', space=smem, size = 0x4, offset = 0x4, fixed_abs, tag = 'smem constant byte address 0x4 - core index']
  #allocation1 [shape = 'u32[72,128]{1,0:T(1,128)}', space=vmem, size = 0x9000, scoped, tag = 'internal scratch']
  %s0 = inlined_call_operand.vmem [shape: f32[2,16,48], index: 0, kind: input, shape index: {}]
  %s1 = inlined_call_operand.vmem [shape: f32[2,16,128], index: 1, kind: input, shape index: {}]
  %s2 = inlined_call_operand.vmem [shape: f32[2,8,128], index: 2, kind: input, shape index: {}]
  %s3 = inlined_call_operand.vmem [shape: f32[2,4,192], index: 3, kind: input, shape index: {}]
  %s4 = inlined_call_operand.vmem [shape: f32[2,2,384], index: 4, kind: input, shape index: {}]
  %s5 = inlined_call_operand.vmem [shape: f32[1,144,64], index: 5, kind: input, shape index: {}]
  %s6 = inlined_call_operand.vmem [shape: f32[9,192,64], index: 6, kind: input, shape index: {}]
  %s7 = inlined_call_operand.vmem [shape: f32[3,96,64], index: 7, kind: input, shape index: {}]
  %s8 = inlined_call_operand.vmem [shape: f32[3,8,16], index: 8, kind: input, shape index: {}]
  %s9 = inlined_call_operand.vmem [shape: f32[6,64,32], index: 9, kind: input, shape index: {}]
  %s10 = inlined_call_operand.vmem [shape: f32[64,128], index: 10, kind: input, shape index: {}]
  %s11 = inlined_call_operand.vmem [shape: f32[1,128], index: 11, kind: input, shape index: {}]
  %s12 = inlined_call_operand.vmem [shape: f32[2,16,128], index: 12, kind: output, shape index: {0}]
  %s13 = inlined_call_operand.vmem [shape: f32[2,8,128], index: 13, kind: output, shape index: {1}]
  %s14 = inlined_call_operand.vmem [shape: f32[2,4,256], index: 14, kind: output, shape index: {2}]
  %s15 = inlined_call_operand.vmem [shape: f32[2,2,384], index: 15, kind: output, shape index: {3}]
  %s16 = inlined_call_operand.hbm [shape: f32[2,1,128], index: 16, kind: output, shape index: {4}]
  %17 = xla_tuple %s12, %s13, %s14, %s15, %s16
  %s18 = sld [smem:[#allocation0]]
  $region113: #{forward.1} parent=0
    _
  %s20 = ssub.s32 1, %s18
  %s21 = scalar_select 0, %s20, %s18
  $region1: #{forward.1} parent=0
    #allocation2 [shape = 'u8[1024]{0}', space=vmem, size = 0x400, scoped, tag = 'output window, operand 4']
    #allocation3 [shape = 's32[2]{0}', space=sflag, size = 0x8, scoped, tag = 'scoped memory for forward.1']
    %22 = vsyncpa [#allocation3], 0
    %s23 = scalar_lea.sflag [#allocation3], 1
    %24 = vsyncpa %s23, 0
    loop: start=0, step=1, limit=4
    $region2: #{forward.1} parent=1 // loop_pre_header
      _
    $region3: #{forward.1} parent=1 // loop_header
      %s26 = sphi 0, %s30
      %p27 = scmp.ge.s32.totalorder %s26, 4
      %s36 = sphi 0, %s38
      %s39 = sphi 0, %s36
      %s40 = sphi 0, %s39
      %s56 = sphi 0, %s40
      %s62 = sphi 0, %s64
      %s65 = sphi 0, %s62
      %s66 = sphi 0, %s65
      %s82 = sphi 0, %s66
      %s88 = sphi 0, %s90
      %s91 = sphi 0, %s88
      %s92 = sphi 0, %s91
      %s108 = sphi 0, %s92
      %s114 = sphi 0, %s116
      %s117 = sphi 0, %s114
      %s118 = sphi 0, %s117
      %s134 = sphi 0, %s118
      %s140 = sphi 0, %s142
      %s143 = sphi 0, %s140
      %s144 = sphi 0, %s143
      %s160 = sphi 0, %s144
      %s164 = sphi 0, %s164
      %s166 = sphi 0, %s164
      %s167 = sphi 0, %s166
      %s181 = sphi 0, %s167
      %s185 = sphi 0, %s185
      %s187 = sphi 0, %s185
      %s188 = sphi 0, %s187
      %s202 = sphi 0, %s188
      %s206 = sphi 0, %s206
      %s208 = sphi 0, %s206
      %s209 = sphi 0, %s208
      %s223 = sphi 0, %s209
      %s227 = sphi 0, %s227
      %s229 = sphi 0, %s227
      %s230 = sphi 0, %s229
      %s244 = sphi 0, %s230
      %s248 = sphi 0, %s248
      %s250 = sphi 0, %s248
      %s251 = sphi 0, %s250
      %s265 = sphi 0, %s251
      %s269 = sphi 0, %s269
      %s271 = sphi 0, %s269
      %s272 = sphi 0, %s271
      %s286 = sphi 0, %s272
      %s290 = sphi 0, %s290
      %s292 = sphi 0, %s290
      %s293 = sphi 0, %s292
      %s307 = sphi 0, %s293
      %s313 = sphi 0, %s315
      %s316 = sphi 0, %s313
      %s317 = sphi 0, %s316
      %s333 = sphi 0, %s317
      %s339 = sphi 0, %s341
      %s342 = sphi 0, %s339
      %s343 = sphi 0, %s342
      %s359 = sphi 0, %s343
      %s365 = sphi 0, %s367
      %s368 = sphi 0, %s365
      %s369 = sphi 0, %s368
      %s385 = sphi 0, %s369
      %s391 = sphi 0, %s393
      %s394 = sphi 0, %s391
      %s395 = sphi 0, %s394
      %s411 = sphi 0, %s395
      %s417 = sphi 0, %s419
      %s420 = sphi 0, %s417
      %s421 = sphi 0, %s420
      %s437 = sphi 0, %s421
    $region4: #{forward.1} parent=1 // loop_header_branch
      %29 = sbr.rel (%p27) target = $region8
    $region5: #{forward.1} parent=1 // loop_body
      %s31 = ssub.s32 %s26, 1
      %s32 = ssub.s32 %s26, 2
      %s33 = sadd.s32 %s26, 1
      %s34 = ssub.s32 %s26, %s33
      %p35 = scmp.eq.s32.totalorder %s34, 0
      %s37 = sadd.s32 %s36, 1
      %s38 = scalar_select %p35, %s36, %s37
      %p41 = pneg %p35
      %p42 = scmp.eq.s32.totalorder %s26, 1
      %p43 = por %p41, %p42
      %p44 = scmp.ne.s32.totalorder %s36, %s39
      %p45 = scmp.eq.s32.totalorder %s26, 0
      %p46 = por %p44, %p45
      %p47 = scmp.ne.s32.totalorder %s36, %s39
      %p48 = scmp.eq.s32.totalorder %s31, 1
      %p49 = por %p47, %p48
      %p50 = scmp.ne.s32.totalorder %s39, %s40
      %p51 = scmp.eq.s32.totalorder %s31, 0
      %p52 = por %p50, %p51
      %p53 = scmp.ne.s32.totalorder %s39, %s40
      %p54 = scmp.eq.s32.totalorder %s32, 1
      %p55 = por %p53, %p54
      %p57 = scmp.ne.s32.totalorder %s40, %s56
      %p58 = scmp.eq.s32.totalorder %s32, 0
      %p59 = por %p57, %p58
      %s60 = ssub.s32 %s26, %s33
      %p61 = scmp.eq.s32.totalorder %s60, 0
      %s63 = sadd.s32 %s62, 1
      %s64 = scalar_select %p61, %s62, %s63
      %p67 = pneg %p61
      %p68 = scmp.eq.s32.totalorder %s26, 1
      %p69 = por %p67, %p68
      %p70 = scmp.ne.s32.totalorder %s62, %s65
      %p71 = scmp.eq.s32.totalorder %s26, 0
      %p72 = por %p70, %p71
      %p73 = scmp.ne.s32.totalorder %s62, %s65
      %p74 = scmp.eq.s32.totalorder %s31, 1
      %p75 = por %p73, %p74
      %p76 = scmp.ne.s32.totalorder %s65, %s66
      %p77 = scmp.eq.s32.totalorder %s31, 0
      %p78 = por %p76, %p77
      %p79 = scmp.ne.s32.totalorder %s65, %s66
      %p80 = scmp.eq.s32.totalorder %s32, 1
      %p81 = por %p79, %p80
      %p83 = scmp.ne.s32.totalorder %s66, %s82
      %p84 = scmp.eq.s32.totalorder %s32, 0
      %p85 = por %p83, %p84
      %s86 = ssub.s32 %s26, %s33
      %p87 = scmp.eq.s32.totalorder %s86, 0
      %s89 = sadd.s32 %s88, 1
      %s90 = scalar_select %p87, %s88, %s89
      %p93 = pneg %p87
      %p94 = scmp.eq.s32.totalorder %s26, 1
      %p95 = por %p93, %p94
      %p96 = scmp.ne.s32.totalorder %s88, %s91
      %p97 = scmp.eq.s32.totalorder %s26, 0
      %p98 = por %p96, %p97
      %p99 = scmp.ne.s32.totalorder %s88, %s91
      %p100 = scmp.eq.s32.totalorder %s31, 1
      %p101 = por %p99, %p100
      %p102 = scmp.ne.s32.totalorder %s91, %s92
      %p103 = scmp.eq.s32.totalorder %s31, 0
      %p104 = por %p102, %p103
      %p105 = scmp.ne.s32.totalorder %s91, %s92
      %p106 = scmp.eq.s32.totalorder %s32, 1
      %p107 = por %p105, %p106
      %p109 = scmp.ne.s32.totalorder %s92, %s108
      %p110 = scmp.eq.s32.totalorder %s32, 0
      %p111 = por %p109, %p110
      %s112 = ssub.s32 %s26, %s33
      %p113 = scmp.eq.s32.totalorder %s112, 0
      %s115 = sadd.s32 %s114, 1
      %s116 = scalar_select %p113, %s114, %s115
      %p119 = pneg %p113
      %p120 = scmp.eq.s32.totalorder %s26, 1
      %p121 = por %p119, %p120
      %p122 = scmp.ne.s32.totalorder %s114, %s117
      %p123 = scmp.eq.s32.totalorder %s26, 0
      %p124 = por %p122, %p123
      %p125 = scmp.ne.s32.totalorder %s114, %s117
      %p126 = scmp.eq.s32.totalorder %s31, 1
      %p127 = por %p125, %p126
      %p128 = scmp.ne.s32.totalorder %s117, %s118
      %p129 = scmp.eq.s32.totalorder %s31, 0
      %p130 = por %p128, %p129
      %p131 = scmp.ne.s32.totalorder %s117, %s118
      %p132 = scmp.eq.s32.totalorder %s32, 1
      %p133 = por %p131, %p132
      %p135 = scmp.ne.s32.totalorder %s118, %s134
      %p136 = scmp.eq.s32.totalorder %s32, 0
      %p137 = por %p135, %p136
      %s138 = ssub.s32 %s26, %s33
      %p139 = scmp.eq.s32.totalorder %s138, 0
      %s141 = sadd.s32 %s140, 1
      %s142 = scalar_select %p139, %s140, %s141
      %p145 = pneg %p139
      %p146 = scmp.eq.s32.totalorder %s26, 1
      %p147 = por %p145, %p146
      %p148 = scmp.ne.s32.totalorder %s140, %s143
      %p149 = scmp.eq.s32.totalorder %s26, 0
      %p150 = por %p148, %p149
      %p151 = scmp.ne.s32.totalorder %s140, %s143
      %p152 = scmp.eq.s32.totalorder %s31, 1
      %p153 = por %p151, %p152
      %p154 = scmp.ne.s32.totalorder %s143, %s144
      %p155 = scmp.eq.s32.totalorder %s31, 0
      %p156 = por %p154, %p155
      %p157 = scmp.ne.s32.totalorder %s143, %s144
      %p158 = scmp.eq.s32.totalorder %s32, 1
      %p159 = por %p157, %p158
      %p161 = scmp.ne.s32.totalorder %s144, %s160
      %p162 = scmp.eq.s32.totalorder %s32, 0
      %p163 = por %p161, %p162
      %s165 = sadd.s32 %s164, 1
      %p168 = scmp.eq.s32.totalorder %s26, 1
      %p169 = scmp.ne.s32.totalorder %s164, %s166
      %p170 = scmp.eq.s32.totalorder %s26, 0
      %p171 = por %p169, %p170
      %p172 = scmp.ne.s32.totalorder %s164, %s166
      %p173 = scmp.eq.s32.totalorder %s31, 1
      %p174 = por %p172, %p173
      %p175 = scmp.ne.s32.totalorder %s166, %s167
      %p176 = scmp.eq.s32.totalorder %s31, 0
      %p177 = por %p175, %p176
      %p178 = scmp.ne.s32.totalorder %s166, %s167
      %p179 = scmp.eq.s32.totalorder %s32, 1
      %p180 = por %p178, %p179
      %p182 = scmp.ne.s32.totalorder %s167, %s181
      %p183 = scmp.eq.s32.totalorder %s32, 0
      %p184 = por %p182, %p183
      %s186 = sadd.s32 %s185, 1
      %p189 = scmp.eq.s32.totalorder %s26, 1
      %p190 = scmp.ne.s32.totalorder %s185, %s187
      %p191 = scmp.eq.s32.totalorder %s26, 0
      %p192 = por %p190, %p191
      %p193 = scmp.ne.s32.totalorder %s185, %s187
      %p194 = scmp.eq.s32.totalorder %s31, 1
      %p195 = por %p193, %p194
      %p196 = scmp.ne.s32.totalorder %s187, %s188
      %p197 = scmp.eq.s32.totalorder %s31, 0
      %p198 = por %p196, %p197
      %p199 = scmp.ne.s32.totalorder %s187, %s188
      %p200 = scmp.eq.s32.totalorder %s32, 1
      %p201 = por %p199, %p200
      %p203 = scmp.ne.s32.totalorder %s188, %s202
      %p204 = scmp.eq.s32.totalorder %s32, 0
      %p205 = por %p203, %p204
      %s207 = sadd.s32 %s206, 1
      %p210 = scmp.eq.s32.totalorder %s26, 1
      %p211 = scmp.ne.s32.totalorder %s206, %s208
      %p212 = scmp.eq.s32.totalorder %s26, 0
      %p213 = por %p211, %p212
      %p214 = scmp.ne.s32.totalorder %s206, %s208
      %p215 = scmp.eq.s32.totalorder %s31, 1
      %p216 = por %p214, %p215
      %p217 = scmp.ne.s32.totalorder %s208, %s209
      %p218 = scmp.eq.s32.totalorder %s31, 0
      %p219 = por %p217, %p218
      %p220 = scmp.ne.s32.totalorder %s208, %s209
      %p221 = scmp.eq.s32.totalorder %s32, 1
      %p222 = por %p220, %p221
      %p224 = scmp.ne.s32.totalorder %s209, %s223
      %p225 = scmp.eq.s32.totalorder %s32, 0
      %p226 = por %p224, %p225
      %s228 = sadd.s32 %s227, 1
      %p231 = scmp.eq.s32.totalorder %s26, 1
      %p232 = scmp.ne.s32.totalorder %s227, %s229
      %p233 = scmp.eq.s32.totalorder %s26, 0
      %p234 = por %p232, %p233
      %p235 = scmp.ne.s32.totalorder %s227, %s229
      %p236 = scmp.eq.s32.totalorder %s31, 1
      %p237 = por %p235, %p236
      %p238 = scmp.ne.s32.totalorder %s229, %s230
      %p239 = scmp.eq.s32.totalorder %s31, 0
      %p240 = por %p238, %p239
      %p241 = scmp.ne.s32.totalorder %s229, %s230
      %p242 = scmp.eq.s32.totalorder %s32, 1
      %p243 = por %p241, %p242
      %p245 = scmp.ne.s32.totalorder %s230, %s244
      %p246 = scmp.eq.s32.totalorder %s32, 0
      %p247 = por %p245, %p246
      %s249 = sadd.s32 %s248, 1
      %p252 = scmp.eq.s32.totalorder %s26, 1
      %p253 = scmp.ne.s32.totalorder %s248, %s250
      %p254 = scmp.eq.s32.totalorder %s26, 0
      %p255 = por %p253, %p254
      %p256 = scmp.ne.s32.totalorder %s248, %s250
      %p257 = scmp.eq.s32.totalorder %s31, 1
      %p258 = por %p256, %p257
      %p259 = scmp.ne.s32.totalorder %s250, %s251
      %p260 = scmp.eq.s32.totalorder %s31, 0
      %p261 = por %p259, %p260
      %p262 = scmp.ne.s32.totalorder %s250, %s251
      %p263 = scmp.eq.s32.totalorder %s32, 1
      %p264 = por %p262, %p263
      %p266 = scmp.ne.s32.totalorder %s251, %s265
      %p267 = scmp.eq.s32.totalorder %s32, 0
      %p268 = por %p266, %p267
      %s270 = sadd.s32 %s269, 1
      %p273 = scmp.eq.s32.totalorder %s26, 1
      %p274 = scmp.ne.s32.totalorder %s269, %s271
      %p275 = scmp.eq.s32.totalorder %s26, 0
      %p276 = por %p274, %p275
      %p277 = scmp.ne.s32.totalorder %s269, %s271
      %p278 = scmp.eq.s32.totalorder %s31, 1
      %p279 = por %p277, %p278
      %p280 = scmp.ne.s32.totalorder %s271, %s272
      %p281 = scmp.eq.s32.totalorder %s31, 0
      %p282 = por %p280, %p281
      %p283 = scmp.ne.s32.totalorder %s271, %s272
      %p284 = scmp.eq.s32.totalorder %s32, 1
      %p285 = por %p283, %p284
      %p287 = scmp.ne.s32.totalorder %s272, %s286
      %p288 = scmp.eq.s32.totalorder %s32, 0
      %p289 = por %p287, %p288
      %s291 = sadd.s32 %s290, 1
      %p294 = scmp.eq.s32.totalorder %s26, 1
      %p295 = scmp.ne.s32.totalorder %s290, %s292
      %p296 = scmp.eq.s32.totalorder %s26, 0
      %p297 = por %p295, %p296
      %p298 = scmp.ne.s32.totalorder %s290, %s292
      %p299 = scmp.eq.s32.totalorder %s31, 1
      %p300 = por %p298, %p299
      %p301 = scmp.ne.s32.totalorder %s292, %s293
      %p302 = scmp.eq.s32.totalorder %s31, 0
      %p303 = por %p301, %p302
      %p304 = scmp.ne.s32.totalorder %s292, %s293
      %p305 = scmp.eq.s32.totalorder %s32, 1
      %p306 = por %p304, %p305
      %p308 = scmp.ne.s32.totalorder %s293, %s307
      %p309 = scmp.eq.s32.totalorder %s32, 0
      %p310 = por %p308, %p309
      %s311 = ssub.s32 %s26, %s33
      %p312 = scmp.eq.s32.totalorder %s311, 0
      %s314 = sadd.s32 %s313, 1
      %s315 = scalar_select %p312, %s313, %s314
      %p318 = pneg %p312
      %p319 = scmp.eq.s32.totalorder %s26, 1
      %p320 = por %p318, %p319
      %p321 = scmp.ne.s32.totalorder %s313, %s316
      %p322 = scmp.eq.s32.totalorder %s26, 0
      %p323 = por %p321, %p322
      %p324 = scmp.ne.s32.totalorder %s313, %s316
      %p325 = scmp.eq.s32.totalorder %s31, 1
      %p326 = por %p324, %p325
      %p327 = scmp.ne.s32.totalorder %s316, %s317
      %p328 = scmp.eq.s32.totalorder %s31, 0
      %p329 = por %p327, %p328
      %p330 = scmp.ne.s32.totalorder %s316, %s317
      %p331 = scmp.eq.s32.totalorder %s32, 1
      %p332 = por %p330, %p331
      %p334 = scmp.ne.s32.totalorder %s317, %s333
      %p335 = scmp.eq.s32.totalorder %s32, 0
      %p336 = por %p334, %p335
      %s337 = ssub.s32 %s26, %s33
      %p338 = scmp.eq.s32.totalorder %s337, 0
      %s340 = sadd.s32 %s339, 1
      %s341 = scalar_select %p338, %s339, %s340
      %p344 = pneg %p338
      %p345 = scmp.eq.s32.totalorder %s26, 1
      %p346 = por %p344, %p345
      %p347 = scmp.ne.s32.totalorder %s339, %s342
      %p348 = scmp.eq.s32.totalorder %s26, 0
      %p349 = por %p347, %p348
      %p350 = scmp.ne.s32.totalorder %s339, %s342
      %p351 = scmp.eq.s32.totalorder %s31, 1
      %p352 = por %p350, %p351
      %p353 = scmp.ne.s32.totalorder %s342, %s343
      %p354 = scmp.eq.s32.totalorder %s31, 0
      %p355 = por %p353, %p354
      %p356 = scmp.ne.s32.totalorder %s342, %s343
      %p357 = scmp.eq.s32.totalorder %s32, 1
      %p358 = por %p356, %p357
      %p360 = scmp.ne.s32.totalorder %s343, %s359
      %p361 = scmp.eq.s32.totalorder %s32, 0
      %p362 = por %p360, %p361
      %s363 = ssub.s32 %s26, %s33
      %p364 = scmp.eq.s32.totalorder %s363, 0
      %s366 = sadd.s32 %s365, 1
      %s367 = scalar_select %p364, %s365, %s366
      %p370 = pneg %p364
      %p371 = scmp.eq.s32.totalorder %s26, 1
      %p372 = por %p370, %p371
      %p373 = scmp.ne.s32.totalorder %s365, %s368
      %p374 = scmp.eq.s32.totalorder %s26, 0
      %p375 = por %p373, %p374
      %p376 = scmp.ne.s32.totalorder %s365, %s368
      %p377 = scmp.eq.s32.totalorder %s31, 1
      %p378 = por %p376, %p377
      %p379 = scmp.ne.s32.totalorder %s368, %s369
      %p380 = scmp.eq.s32.totalorder %s31, 0
      %p381 = por %p379, %p380
      %p382 = scmp.ne.s32.totalorder %s368, %s369
      %p383 = scmp.eq.s32.totalorder %s32, 1
      %p384 = por %p382, %p383
      %p386 = scmp.ne.s32.totalorder %s369, %s385
      %p387 = scmp.eq.s32.totalorder %s32, 0
      %p388 = por %p386, %p387
      %s389 = ssub.s32 %s26, %s33
      %p390 = scmp.eq.s32.totalorder %s389, 0
      %s392 = sadd.s32 %s391, 1
      %s393 = scalar_select %p390, %s391, %s392
      %p396 = pneg %p390
      %p397 = scmp.eq.s32.totalorder %s26, 1
      %p398 = por %p396, %p397
      %p399 = scmp.ne.s32.totalorder %s391, %s394
      %p400 = scmp.eq.s32.totalorder %s26, 0
      %p401 = por %p399, %p400
      %p402 = scmp.ne.s32.totalorder %s391, %s394
      %p403 = scmp.eq.s32.totalorder %s31, 1
      %p404 = por %p402, %p403
      %p405 = scmp.ne.s32.totalorder %s394, %s395
      %p406 = scmp.eq.s32.totalorder %s31, 0
      %p407 = por %p405, %p406
      %p408 = scmp.ne.s32.totalorder %s394, %s395
      %p409 = scmp.eq.s32.totalorder %s32, 1
      %p410 = por %p408, %p409
      %p412 = scmp.ne.s32.totalorder %s395, %s411
      %p413 = scmp.eq.s32.totalorder %s32, 0
      %p414 = por %p412, %p413
      %s415 = ssub.s32 %s26, %s33
      %p416 = scmp.eq.s32.totalorder %s415, 0
      %s418 = sadd.s32 %s417, 1
      %s419 = scalar_select %p416, %s417, %s418
      %p422 = pneg %p416
      %p423 = scmp.eq.s32.totalorder %s26, 1
      %p424 = por %p422, %p423
      %p425 = scmp.ne.s32.totalorder %s417, %s420
      %p426 = scmp.eq.s32.totalorder %s26, 0
      %p427 = por %p425, %p426
      %p428 = scmp.ne.s32.totalorder %s417, %s420
      %p429 = scmp.eq.s32.totalorder %s31, 1
      %p430 = por %p428, %p429
      %p431 = scmp.ne.s32.totalorder %s420, %s421
      %p432 = scmp.eq.s32.totalorder %s31, 0
      %p433 = por %p431, %p432
      %p434 = scmp.ne.s32.totalorder %s420, %s421
      %p435 = scmp.eq.s32.totalorder %s32, 1
      %p436 = por %p434, %p435
      %p438 = scmp.ne.s32.totalorder %s421, %s437
      %p439 = scmp.eq.s32.totalorder %s32, 0
      %p440 = por %p438, %p439
      %p441 = scmp.le.s32.totalorder 1, %s26
      %p442 = scmp.lt.s32.totalorder %s26, 3
      %p443 = pnand %p441, %p442
      %p444 = pneg %p443
      // Predicated region
      $region9: #{forward.1} parent=5 // pred_check
        _
      $region10: #{forward.1} parent=5 // pred_check_branch
        %446 = sbr.rel (%p443) target = $region12
      $region11: #{forward.1} parent=5 // pred_region
        %s447 = ssub.s32 %s26, 1
        // Predicated region
        $region13: #{forward.1} parent=11 // pred_check
          %p448 = pneg %p177
        $region14: #{forward.1} parent=11 // pred_check_branch
          %450 = sbr.rel (%p448) target = $region16
        $region15: #{forward.1} parent=11 // pred_region
          _
        $region16: #{forward.1} parent=11 // pred_fallthru
          _
        // Predicated region
        $region17: #{forward.1} parent=11 // pred_check
          %p451 = pneg %p198
        $region18: #{forward.1} parent=11 // pred_check_branch
          %453 = sbr.rel (%p451) target = $region20
        $region19: #{forward.1} parent=11 // pred_region
          _
        $region20: #{forward.1} parent=11 // pred_fallthru
          _
        // Predicated region
        $region21: #{forward.1} parent=11 // pred_check
          %p454 = pneg %p219
        $region22: #{forward.1} parent=11 // pred_check_branch
          %456 = sbr.rel (%p454) target = $region24
        $region23: #{forward.1} parent=11 // pred_region
          _
        $region24: #{forward.1} parent=11 // pred_fallthru
          _
        // Predicated region
        $region25: #{forward.1} parent=11 // pred_check
          %p457 = pneg %p240
        $region26: #{forward.1} parent=11 // pred_check_branch
          %459 = sbr.rel (%p457) target = $region28
        $region27: #{forward.1} parent=11 // pred_region
          _
        $region28: #{forward.1} parent=11 // pred_fallthru
          _
        // Predicated region
        $region29: #{forward.1} parent=11 // pred_check
          %p460 = pneg %p261
        $region30: #{forward.1} parent=11 // pred_check_branch
          %462 = sbr.rel (%p460) target = $region32
        $region31: #{forward.1} parent=11 // pred_region
          _
        $region32: #{forward.1} parent=11 // pred_fallthru
          _
        // Predicated region
        $region33: #{forward.1} parent=11 // pred_check
          %p463 = pneg %p282
        $region34: #{forward.1} parent=11 // pred_check_branch
          %465 = sbr.rel (%p463) target = $region36
        $region35: #{forward.1} parent=11 // pred_region
          _
        $region36: #{forward.1} parent=11 // pred_fallthru
          _
        // Predicated region
        $region37: #{forward.1} parent=11 // pred_check
          %p466 = pneg %p303
        $region38: #{forward.1} parent=11 // pred_check_branch
          %468 = sbr.rel (%p466) target = $region40
        $region39: #{forward.1} parent=11 // pred_region
          _
        $region40: #{forward.1} parent=11 // pred_fallthru
          _
      $region12: #{forward.1} parent=5 // pred_fallthru
        _
      %p469 = scmp.lt.s32.totalorder %s26, 2
      // Predicated region
      $region41: #{forward.1} parent=5 // pred_check
        %p470 = pneg %p469
      $region42: #{forward.1} parent=5 // pred_check_branch
        %472 = sbr.rel (%p470) target = $region44
      $region43: #{forward.1} parent=5 // pred_region
        // Predicated region
        $region45: #{forward.1} parent=43 // pred_check
          %p473 = pneg %p46
        $region46: #{forward.1} parent=43 // pred_check_branch
          %475 = sbr.rel (%p473) target = $region48
        $region47: #{forward.1} parent=43 // pred_region
          %p476 = scmp.lt.s32.totalorder %s26, 1
          %s477 = scalar_select %p476, %s26, 1
          %s478 = smul.addr %s477, 2
          %s479 = smul.addr %s478, 8
          %s480 = scalar_lea.vmem %s0, %s479
        $region48: #{forward.1} parent=43 // pred_fallthru
          _
        // Predicated region
        $region49: #{forward.1} parent=43 // pred_check
          %p481 = pneg %p72
        $region50: #{forward.1} parent=43 // pred_check_branch
          %483 = sbr.rel (%p481) target = $region52
        $region51: #{forward.1} parent=43 // pred_region
          %p484 = scmp.lt.s32.totalorder %s26, 1
          %s485 = scalar_select %p484, %s26, 1
          %s486 = smul.addr %s485, 2
          %s487 = smul.addr %s486, 8
          %s488 = scalar_lea.vmem %s1, %s487
        $region52: #{forward.1} parent=43 // pred_fallthru
          _
        // Predicated region
        $region53: #{forward.1} parent=43 // pred_check
          %p489 = pneg %p98
        $region54: #{forward.1} parent=43 // pred_check_branch
          %491 = sbr.rel (%p489) target = $region56
        $region55: #{forward.1} parent=43 // pred_region
          %p492 = scmp.lt.s32.totalorder %s26, 1
          %s493 = scalar_select %p492, %s26, 1
          %s494 = smul.addr %s493, 8
          %s495 = scalar_lea.vmem %s2, %s494
        $region56: #{forward.1} parent=43 // pred_fallthru
          _
        // Predicated region
        $region57: #{forward.1} parent=43 // pred_check
          %p496 = pneg %p124
        $region58: #{forward.1} parent=43 // pred_check_branch
          %498 = sbr.rel (%p496) target = $region60
        $region59: #{forward.1} parent=43 // pred_region
          %p499 = scmp.lt.s32.totalorder %s26, 1
          %s500 = scalar_select %p499, %s26, 1
          %s501 = smul.addr %s500, 2
          %s502 = smul.addr %s501, 4
          %s503 = scalar_lea.vmem %s3, %s502
        $region60: #{forward.1} parent=43 // pred_fallthru
          _
        // Predicated region
        $region61: #{forward.1} parent=43 // pred_check
          %p504 = pneg %p150
        $region62: #{forward.1} parent=43 // pred_check_branch
          %506 = sbr.rel (%p504) target = $region64
        $region63: #{forward.1} parent=43 // pred_region
          %p507 = scmp.lt.s32.totalorder %s26, 1
          %s508 = scalar_select %p507, %s26, 1
          %s509 = smul.addr %s508, 3
          %s510 = smul.addr %s509, 2
          %s511 = scalar_lea.vmem %s4, %s510
        $region64: #{forward.1} parent=43 // pred_fallthru
          _
      $region44: #{forward.1} parent=5 // pred_fallthru
        _
      %p512 = scmp.le.s32.totalorder 1, %s26
      %p513 = scmp.lt.s32.totalorder %s26, 3
      %p514 = pnand %p512, %p513
      %p515 = pneg %p514
      // Predicated region
      $region65: #{forward.1} parent=5 // pred_check
        _
      $region66: #{forward.1} parent=5 // pred_check_branch
        %517 = sbr.rel (%p514) target = $region68
      $region67: #{forward.1} parent=5 // pred_region
        %s518 = ssub.s32 %s26, 1
        %p519 = scmp.lt.s32.totalorder %s31, 1
        %s520 = scalar_select %p519, %s31, 1
        %s521 = smul.addr %s520, 2
        %s522 = smul.addr %s521, 8
        %s523 = scalar_lea.vmem %s0, %s522
        %p524 = pneg %p52
        %p525 = pneg %p49
        %p526 = scmp.lt.s32.totalorder %s31, 1
        %s527 = scalar_select %p526, %s31, 1
        %s528 = smul.addr %s527, 2
        %s529 = smul.addr %s528, 8
        %s530 = scalar_lea.vmem %s1, %s529
        %p531 = pneg %p78
        %p532 = pneg %p75
        %p533 = scmp.lt.s32.totalorder %s31, 1
        %s534 = scalar_select %p533, %s31, 1
        %s535 = smul.addr %s534, 8
        %s536 = scalar_lea.vmem %s2, %s535
        %p537 = pneg %p104
        %p538 = pneg %p101
        %p539 = scmp.lt.s32.totalorder %s31, 1
        %s540 = scalar_select %p539, %s31, 1
        %s541 = smul.addr %s540, 2
        %s542 = smul.addr %s541, 4
        %s543 = scalar_lea.vmem %s3, %s542
        %p544 = pneg %p130
        %p545 = pneg %p127
        %p546 = scmp.lt.s32.totalorder %s31, 1
        %s547 = scalar_select %p546, %s31, 1
        %s548 = smul.addr %s547, 3
        %s549 = smul.addr %s548, 2
        %s550 = scalar_lea.vmem %s4, %s549
        %p551 = pneg %p156
        %p552 = pneg %p153
        %p553 = pneg %p177
        %p554 = pneg %p174
        %p555 = pneg %p198
        %p556 = pneg %p195
        %p557 = pneg %p219
        %p558 = pneg %p216
        %p559 = pneg %p240
        %p560 = pneg %p237
        %p561 = pneg %p261
        %p562 = pneg %p258
        %p563 = pneg %p282
        %p564 = pneg %p279
        %p565 = pneg %p303
        %p566 = pneg %p300
        %p567 = pneg %p329
        %p568 = pneg %p326
        %p569 = scmp.lt.s32.totalorder %s31, 1
        %s570 = scalar_select %p569, %s31, 1
        %s571 = smul.addr %s570, 2
        %s572 = smul.addr %s571, 8
        %s573 = scalar_lea.vmem %s12, %s572
        %p574 = pneg %p355
        %p575 = pneg %p352
        %p576 = scmp.lt.s32.totalorder %s31, 1
        %s577 = scalar_select %p576, %s31, 1
        %s578 = smul.addr %s577, 8
        %s579 = scalar_lea.vmem %s13, %s578
        %p580 = pneg %p381
        %p581 = pneg %p378
        %p582 = scmp.lt.s32.totalorder %s31, 1
        %s583 = scalar_select %p582, %s31, 1
        %s584 = smul.addr %s583, 2
        %s585 = smul.addr %s584, 4
        %s586 = scalar_lea.vmem %s14, %s585
        %p587 = pneg %p407
        %p588 = pneg %p404
        %p589 = scmp.lt.s32.totalorder %s31, 1
        %s590 = scalar_select %p589, %s31, 1
        %s591 = smul.addr %s590, 3
        %s592 = smul.addr %s591, 2
        %s593 = scalar_lea.vmem %s15, %s592
        %p594 = pneg %p433
        %p595 = pneg %p430
        %s596 = sand.u32 %s420, 1
        %s597 = scalar_lea.sflag [#allocation3], %s596
        %s598 = sand.u32 %s420, 1
        %s599 = scalar_lea.vmem [#allocation2], %s598
        %p600 = scmp.lt.s32.totalorder %s31, 1
        %s601 = scalar_select %p600, %s31, 1
        %s602 = smul.addr %s601, 2
        %s603 = smul.addr %s602, 8
        %s604 = scalar_lea.vmem %s0, %s603
        %p605 = scmp.lt.s32.totalorder %s31, 1
        %s606 = scalar_select %p605, %s31, 1
        %s607 = smul.addr %s606, 2
        %s608 = smul.addr %s607, 8
        %s609 = scalar_lea.vmem %s1, %s608
        %p610 = scmp.lt.s32.totalorder %s31, 1
        %s611 = scalar_select %p610, %s31, 1
        %s612 = smul.addr %s611, 8
        %s613 = scalar_lea.vmem %s2, %s612
        %p614 = scmp.lt.s32.totalorder %s31, 1
        %s615 = scalar_select %p614, %s31, 1
        %s616 = smul.addr %s615, 2
        %s617 = smul.addr %s616, 4
        %s618 = scalar_lea.vmem %s3, %s617
        %p619 = scmp.lt.s32.totalorder %s31, 1
        %s620 = scalar_select %p619, %s31, 1
        %s621 = smul.addr %s620, 3
        %s622 = smul.addr %s621, 2
        %s623 = scalar_lea.vmem %s4, %s622
        %p624 = scmp.lt.s32.totalorder %s31, 1
        %s625 = scalar_select %p624, %s31, 1
        %s626 = smul.addr %s625, 2
        %s627 = smul.addr %s626, 8
        %s628 = scalar_lea.vmem %s12, %s627
        %p629 = scmp.lt.s32.totalorder %s31, 1
        %s630 = scalar_select %p629, %s31, 1
        %s631 = smul.addr %s630, 8
        %s632 = scalar_lea.vmem %s13, %s631
        %p633 = scmp.lt.s32.totalorder %s31, 1
        %s634 = scalar_select %p633, %s31, 1
        %s635 = smul.addr %s634, 2
        %s636 = smul.addr %s635, 4
        %s637 = scalar_lea.vmem %s14, %s636
        %p638 = scmp.lt.s32.totalorder %s31, 1
        %s639 = scalar_select %p638, %s31, 1
        %s640 = smul.addr %s639, 3
        %s641 = smul.addr %s640, 2
        %s642 = scalar_lea.vmem %s15, %s641
        %v643 = vld [vmem:[%s604] sm:$0xff]
        %v644 = vld [vmem:[%s604 + $0x8] sm:$0xff]
        %v645 = vld [vmem:[%s609] sm:$0xff]
        %v646 = vld [vmem:[%s609 + $0x8] sm:$0xff]
        %vm649 = vcmask 1040384
        %v650 = vrot.slane %v643, 7
        %v651 = vrot.slane %v644, 7
        %v652 = vsel %vm649, %v650, %v651
        %v655 = vsel %vm649, 0.0, %v650
        %vm656 = vcmask 1046528
        %v657 = vrot.slane %v643, 1
        %v658 = vrot.slane %v644, 1
        %v659 = vsel %vm656, %v657, %v658
        %v661 = vsel %vm656, %v658, 0.0
        %662 = vrot.lane.b32.xlu0 %v643, 48
        %v663 = vpop.permute.xlu0 %662
        %664 = vrot.lane.b32.xlu0 %v644, 48
        %v665 = vpop.permute.xlu0 %664
        %669 = vrot.lane.b32.xlu0 %v659, 96
        %v670 = vpop.permute.xlu0 %669
        %671 = vrot.lane.b32.xlu0 %v661, 96
        %v672 = vpop.permute.xlu0 %671
        %vm675 = vcmask 392192
        %v676 = vsel %vm675, %v655, %v663
        %v677 = vsel %vm675, %v652, %v665
        %vm678 = vcmask 785408
        %v679 = vsel %vm678, %v676, %v670
        %v680 = vsel %vm678, %v677, %v672
        %v681 = vld [vmem:[%s5] sm:$0xff]
        %v682 = vld [vmem:[%s5 + $0x8] sm:$0xff]
        %v683 = vld [vmem:[%s5 + $0x10] sm:$0xff]
        %v684 = vld [vmem:[%s5 + $0x18] sm:$0xff]
        %v685 = vld [vmem:[%s5 + $0x20] sm:$0xff]
        %v686 = vld [vmem:[%s5 + $0x28] sm:$0xff]
        %v687 = vld [vmem:[%s5 + $0x30] sm:$0xff]
        %v688 = vld [vmem:[%s5 + $0x38] sm:$0xff]
        %v689 = vld [vmem:[%s5 + $0x40] sm:$0xff]
        %v690 = vld [vmem:[%s5 + $0x48] sm:$0xff]
        %v691 = vld [vmem:[%s5 + $0x50] sm:$0xff]
        %v692 = vld [vmem:[%s5 + $0x58] sm:$0xff]
        %v693 = vld [vmem:[%s5 + $0x60] sm:$0xff]
        %v694 = vld [vmem:[%s5 + $0x68] sm:$0xff]
        %v695 = vld [vmem:[%s5 + $0x70] sm:$0xff]
        %v696 = vld [vmem:[%s5 + $0x78] sm:$0xff]
        %v697 = vld [vmem:[%s5 + $0x80] sm:$0xff]
        %v698 = vld [vmem:[%s5 + $0x88] sm:$0xff]
        %vm699 = vcmask 130048
        %v700 = vsel %vm699, %v670, 0
        %v702 = vsel %vm699, %v672, 0
        %704 = vmatpush.msra.mxu0 %v696
        %705 = vmatpush.msra.mxu0 %v695
        %706 = vmatpush.msra.mxu0 %v694
        %707 = vmatpush.msra.mxu0 %v693
        %708 = vmatpush.msra.mxu0 %v692
        %709 = vmatpush.msra.mxu0 %v691
        %710 = vmatpush.msra.mxu0 %v690
        %711 = vmatpush.msra.mxu0 %v689
        %712 = vmatpush.msra.mxu0 %v688
        %713 = vmatpush.msra.mxu0 %v687
        %714 = vmatpush.msra.mxu0 %v686
        %715 = vmatpush.msra.mxu0 %v685
        %716 = vmatpush.msra.mxu0 %v684
        %717 = vmatpush.msra.mxu0 %v683
        %718 = vmatpush.msra.mxu0 %v682
        %719 = vmatpush.msra.mxu0 %v681
        %720 = vmatmul.f32.gmra.mxu0 %v679
        %v721 = vpop.f32.mrf.mxu0
        %v722 = vadd.f32 0.0, %v721
        %723 = vmatmul.f32.gmra.mxu0 %v680
        %v724 = vpop.f32.mrf.mxu0
        %v725 = vadd.f32 0.0, %v724
        %726 = vdwg.mxu0
        %727 = vmatpush.msra.mxu0 0.0
        %728 = vmatpush.msra.mxu0 0.0
        %729 = vmatpush.msra.mxu0 0.0
        %730 = vmatpush.msra.mxu0 0.0
        %731 = vmatpush.msra.mxu0 0.0
        %732 = vmatpush.msra.mxu0 0.0
        %733 = vmatpush.msra.mxu0 0.0
        %734 = vmatpush.msra.mxu0 0.0
        %735 = vmatpush.msra.mxu0 0.0
        %736 = vmatpush.msra.mxu0 0.0
        %737 = vmatpush.msra.mxu0 0.0
        %738 = vmatpush.msra.mxu0 0.0
        %739 = vmatpush.msra.mxu0 0.0
        %740 = vmatpush.msra.mxu0 0.0
        %741 = vmatpush.msra.mxu0 %v698
        %742 = vmatpush.msra.mxu0 %v697
        %743 = vmatmul.f32.gmra.mxu0 %v700
        %v744 = vpop.f32.mrf.mxu0
        %v745 = vadd.f32 %v722, %v744
        %746 = vmatmul.f32.gmra.mxu0 %v702
        %v747 = vpop.f32.mrf.mxu0
        %v748 = vadd.f32 %v725, %v747
        %749 = vdwg.mxu0
        %vm750 = vcmp.gt.f32.partialorder %v645, 0.5
        %vm751 = vcmp.gt.f32.partialorder %v646, 0.5
        %v752 = vmax.f32 %v745, 0.0
        %v753 = vmax.f32 %v748, 0.0
        %v754 = vsel %vm750, %v752, %v745
        %v755 = vsel %vm751, %v753, %v748
        %v758 = vrot.slane %v754, 7
        %v759 = vrot.slane %v755, 7
        %v760 = vsel %vm649, %v758, %v759
        %v763 = vsel %vm649, 0.0, %v758
        %v764 = vrot.slane %v754, 1
        %v765 = vrot.slane %v755, 1
        %v766 = vsel %vm656, %v764, %v765
        %v768 = vsel %vm656, %v765, 0.0
        %769 = vrot.lane.b32.xlu0 %v754, 64
        %v770 = vpop.permute.xlu0 %769
        %771 = vrot.lane.b32.xlu0 %v755, 64
        %v772 = vpop.permute.xlu0 %771
        %vm775 = vcmask 523264
        %v776 = vsel %vm775, %v763, %v770
        %v777 = vsel %vm775, %v760, %v772
        %v778 = vld [vmem:[%s6] sm:$0xff]
        %v779 = vld [vmem:[%s6 + $0x8] sm:$0xff]
        %v780 = vld [vmem:[%s6 + $0x10] sm:$0xff]
        %v781 = vld [vmem:[%s6 + $0x18] sm:$0xff]
        %v782 = vld [vmem:[%s6 + $0x20] sm:$0xff]
        %v783 = vld [vmem:[%s6 + $0x28] sm:$0xff]
        %v784 = vld [vmem:[%s6 + $0x30] sm:$0xff]
        %v785 = vld [vmem:[%s6 + $0x38] sm:$0xff]
        %v786 = vld [vmem:[%s6 + $0x40] sm:$0xff]
        %v787 = vld [vmem:[%s6 + $0x48] sm:$0xff]
        %v788 = vld [vmem:[%s6 + $0x50] sm:$0xff]
        %v789 = vld [vmem:[%s6 + $0x58] sm:$0xff]
        %v790 = vld [vmem:[%s6 + $0x60] sm:$0xff]
        %v791 = vld [vmem:[%s6 + $0x68] sm:$0xff]
        %v792 = vld [vmem:[%s6 + $0x70] sm:$0xff]
        %v793 = vld [vmem:[%s6 + $0x78] sm:$0xff]
        %v794 = vld [vmem:[%s6 + $0x80] sm:$0xff]
        %v795 = vld [vmem:[%s6 + $0x88] sm:$0xff]
        %v796 = vld [vmem:[%s6 + $0x90] sm:$0xff]
        %v797 = vld [vmem:[%s6 + $0x98] sm:$0xff]
        %v798 = vld [vmem:[%s6 + $0xa0] sm:$0xff]
        %v799 = vld [vmem:[%s6 + $0xa8] sm:$0xff]
        %v800 = vld [vmem:[%s6 + $0xb0] sm:$0xff]
        %v801 = vld [vmem:[%s6 + $0xb8] sm:$0xff]
        %v802 = vsel %vm775, %v766, 0
        %v805 = vsel %vm775, %v768, 0
        %807 = vmatpush.msra.mxu0 %v793
        %808 = vmatpush.msra.mxu0 %v792
        %809 = vmatpush.msra.mxu0 %v791
        %810 = vmatpush.msra.mxu0 %v790
        %811 = vmatpush.msra.mxu0 %v789
        %812 = vmatpush.msra.mxu0 %v788
        %813 = vmatpush.msra.mxu0 %v787
        %814 = vmatpush.msra.mxu0 %v786
        %815 = vmatpush.msra.mxu0 %v785
        %816 = vmatpush.msra.mxu0 %v784
        %817 = vmatpush.msra.mxu0 %v783
        %818 = vmatpush.msra.mxu0 %v782
        %819 = vmatpush.msra.mxu0 %v781
        %820 = vmatpush.msra.mxu0 %v780
        %821 = vmatpush.msra.mxu0 %v779
        %822 = vmatpush.msra.mxu0 %v778
        %823 = vmatmul.f32.gmra.mxu0 %v776
        %v824 = vpop.f32.mrf.mxu0
        %v825 = vadd.f32 0.0, %v824
        %826 = vmatmul.f32.gmra.mxu0 %v777
        %v827 = vpop.f32.mrf.mxu0
        %v828 = vadd.f32 0.0, %v827
        %829 = vdwg.mxu0
        %830 = vmatpush.msra.mxu0 0.0
        %831 = vmatpush.msra.mxu0 0.0
        %832 = vmatpush.msra.mxu0 0.0
        %833 = vmatpush.msra.mxu0 0.0
        %834 = vmatpush.msra.mxu0 0.0
        %835 = vmatpush.msra.mxu0 0.0
        %836 = vmatpush.msra.mxu0 0.0
        %837 = vmatpush.msra.mxu0 0.0
        %838 = vmatpush.msra.mxu0 %v801
        %839 = vmatpush.msra.mxu0 %v800
        %840 = vmatpush.msra.mxu0 %v799
        %841 = vmatpush.msra.mxu0 %v798
        %842 = vmatpush.msra.mxu0 %v797
        %843 = vmatpush.msra.mxu0 %v796
        %844 = vmatpush.msra.mxu0 %v795
        %845 = vmatpush.msra.mxu0 %v794
        %846 = vmatmul.f32.gmra.mxu0 %v802
        %v847 = vpop.f32.mrf.mxu0
        %v848 = vadd.f32 %v825, %v847
        %849 = vmatmul.f32.gmra.mxu0 %v805
        %v850 = vpop.f32.mrf.mxu0
        %v851 = vadd.f32 %v828, %v850
        %852 = vdwg.mxu0
        %v853 = vmax.f32 %v848, 0.0
        %v854 = vmax.f32 %v851, 0.0
        %857 = vrot.lane.b32.xlu0 %v853, 64
        %v858 = vpop.permute.xlu0 %857
        %859 = vrot.lane.b32.xlu0 %v854, 64
        %v860 = vpop.permute.xlu0 %859
        %865 = vrot.lane.b32.xlu0 %v848, 64
        %v866 = vpop.permute.xlu0 %865
        %867 = vrot.lane.b32.xlu0 %v851, 64
        %v868 = vpop.permute.xlu0 %867
        %v871 = vsel %vm750, %v858, %v866
        %v872 = vsel %vm751, %v860, %v868
        %v875 = vrot.slane %v871, 1
        %v876 = vrot.slane %v872, 1
        %v877 = vsel %vm656, %v875, %v876
        %v880 = vsel %vm656, %v876, 0.0
        %v881 = vmax.f32 %v871, %v877
        %v882 = vmax.f32 %v872, %v880
        %v883 = vld [vmem:[%s8] sm:$0xff]
        %886 = vrot.lane.b32.xlu0 %v881, 64
        %v887 = vpop.permute.xlu0 %886
        %888 = vrot.lane.b32.xlu0 %v882, 64
        %v889 = vpop.permute.xlu0 %888
        %v893 = vsel %vm699, %v883, 0
        %895 = vmatpush.msra.mxu0 0.0
        %896 = vmatpush.msra.mxu0 0.0
        %897 = vmatpush.msra.mxu0 0.0
        %898 = vmatpush.msra.mxu0 0.0
        %899 = vmatpush.msra.mxu0 0.0
        %900 = vmatpush.msra.mxu0 0.0
        %901 = vmatpush.msra.mxu0 0.0
        %902 = vmatpush.msra.mxu0 0.0
        %903 = vmatpush.msra.mxu0 0.0
        %904 = vmatpush.msra.mxu0 0.0
        %905 = vmatpush.msra.mxu0 0.0
        %906 = vmatpush.msra.mxu0 0.0
        %907 = vmatpush.msra.mxu0 0.0
        %908 = vmatpush.msra.mxu0 0.0
        %909 = vmatpush.msra.mxu0 %v889
        %910 = vmatpush.msra.mxu0 %v887
        %911 = vmatmul.f32.gmra.mxu0 %v893
        %v912 = vpop.f32.mrf.mxu0
        %v913 = vadd.f32 0.0, %v912
        %914 = vdwg.mxu0
        %v915 = vld [vmem:[%s9] sm:$0xff]
        %v916 = vld [vmem:[%s9 + $0x8] sm:$0xff]
        %v917 = vld [vmem:[%s9 + $0x10] sm:$0xff]
        %v918 = vld [vmem:[%s9 + $0x18] sm:$0xff]
        %v919 = vld [vmem:[%s9 + $0x20] sm:$0xff]
        %v920 = vld [vmem:[%s9 + $0x28] sm:$0xff]
        %v921 = vld [vmem:[%s9 + $0x30] sm:$0xff]
        %v922 = vld [vmem:[%s9 + $0x38] sm:$0xff]
        %s923 = scalar_lea.vmem %s9, 64
        %v924 = vld [vmem:[%s923] sm:$0xff]
        %v925 = vld [vmem:[%s923 + $0x8] sm:$0xff]
        %v926 = vld [vmem:[%s923 + $0x10] sm:$0xff]
        %v927 = vld [vmem:[%s923 + $0x18] sm:$0xff]
        %v928 = vld [vmem:[%s923 + $0x20] sm:$0xff]
        %v929 = vld [vmem:[%s923 + $0x28] sm:$0xff]
        %v930 = vld [vmem:[%s923 + $0x30] sm:$0xff]
        %v931 = vld [vmem:[%s923 + $0x38] sm:$0xff]
        %v933 = vsel %vm775, %v913, 0
        %935 = vmatpush.msra.mxu0 0.0
        %936 = vmatpush.msra.mxu0 0.0
        %937 = vmatpush.msra.mxu0 0.0
        %938 = vmatpush.msra.mxu0 0.0
        %939 = vmatpush.msra.mxu0 0.0
        %940 = vmatpush.msra.mxu0 0.0
        %941 = vmatpush.msra.mxu0 0.0
        %942 = vmatpush.msra.mxu0 0.0
        %943 = vmatpush.msra.mxu0 %v922
        %944 = vmatpush.msra.mxu0 %v921
        %945 = vmatpush.msra.mxu0 %v920
        %946 = vmatpush.msra.mxu0 %v919
        %947 = vmatpush.msra.mxu0 %v918
        %948 = vmatpush.msra.mxu0 %v917
        %949 = vmatpush.msra.mxu0 %v916
        %950 = vmatpush.msra.mxu0 %v915
        %951 = vmatmul.f32.gmra.mxu0 %v933
        %v952 = vpop.f32.mrf.mxu0
        %v953 = vadd.f32 0.0, %v952
        %954 = vdwg.mxu0
        %955 = vmatpush.msra.mxu0 0.0
        %956 = vmatpush.msra.mxu0 0.0
        %957 = vmatpush.msra.mxu0 0.0
        %958 = vmatpush.msra.mxu0 0.0
        %959 = vmatpush.msra.mxu0 0.0
        %960 = vmatpush.msra.mxu0 0.0
        %961 = vmatpush.msra.mxu0 0.0
        %962 = vmatpush.msra.mxu0 0.0
        %963 = vmatpush.msra.mxu0 %v931
        %964 = vmatpush.msra.mxu0 %v930
        %965 = vmatpush.msra.mxu0 %v929
        %966 = vmatpush.msra.mxu0 %v928
        %967 = vmatpush.msra.mxu0 %v927
        %968 = vmatpush.msra.mxu0 %v926
        %969 = vmatpush.msra.mxu0 %v925
        %970 = vmatpush.msra.mxu0 %v924
        %971 = vmatmul.f32.gmra.mxu0 %v933
        %v972 = vpop.f32.mrf.mxu0
        %v973 = vadd.f32 0.0, %v972
        %974 = vdwg.mxu0
        %v975 = vmax.f32 %v953, %v973
        %v976 = vsel %vm775, %v754, %v871
        %v977 = vsel %vm775, %v755, %v872
        %978 = vst [vmem:[%s628] sm:$0xff] %v976
        %979 = vst [vmem:[%s628 + $0x8] sm:$0xff] %v977
        %v980 = vld [vmem:[%s613] sm:$0xff]
        %v982 = vrot.slane %v975, 7
        %v984 = vsel %vm649, 0.0, %v982
        %v985 = vrot.slane %v975, 1
        %v987 = vsel %vm656, %v985, 0.0
        %988 = vrot.lane.b32.xlu0 %v975, 32
        %v989 = vpop.permute.xlu0 %988
        %992 = vrot.lane.b32.xlu0 %v987, 64
        %v993 = vpop.permute.xlu0 %992
        %vm995 = vcmask 261120
        %v996 = vsel %vm995, %v984, %v989
        %v997 = vsel %vm775, %v996, %v993
        %v998 = vld [vmem:[%s7] sm:$0xff]
        %v999 = vld [vmem:[%s7 + $0x8] sm:$0xff]
        %v1000 = vld [vmem:[%s7 + $0x10] sm:$0xff]
        %v1001 = vld [vmem:[%s7 + $0x18] sm:$0xff]
        %v1002 = vld [vmem:[%s7 + $0x20] sm:$0xff]
        %v1003 = vld [vmem:[%s7 + $0x28] sm:$0xff]
        %v1004 = vld [vmem:[%s7 + $0x30] sm:$0xff]
        %v1005 = vld [vmem:[%s7 + $0x38] sm:$0xff]
        %v1006 = vld [vmem:[%s7 + $0x40] sm:$0xff]
        %v1007 = vld [vmem:[%s7 + $0x48] sm:$0xff]
        %v1008 = vld [vmem:[%s7 + $0x50] sm:$0xff]
        %v1009 = vld [vmem:[%s7 + $0x58] sm:$0xff]
        %v1011 = vsel %vm678, %v997, 0
        %1013 = vmatpush.msra.mxu0 0.0
        %1014 = vmatpush.msra.mxu0 0.0
        %1015 = vmatpush.msra.mxu0 0.0
        %1016 = vmatpush.msra.mxu0 0.0
        %1017 = vmatpush.msra.mxu0 %v1009
        %1018 = vmatpush.msra.mxu0 %v1008
        %1019 = vmatpush.msra.mxu0 %v1007
        %1020 = vmatpush.msra.mxu0 %v1006
        %1021 = vmatpush.msra.mxu0 %v1005
        %1022 = vmatpush.msra.mxu0 %v1004
        %1023 = vmatpush.msra.mxu0 %v1003
        %1024 = vmatpush.msra.mxu0 %v1002
        %1025 = vmatpush.msra.mxu0 %v1001
        %1026 = vmatpush.msra.mxu0 %v1000
        %1027 = vmatpush.msra.mxu0 %v999
        %1028 = vmatpush.msra.mxu0 %v998
        %1029 = vmatmul.f32.gmra.mxu0 %v1011
        %v1030 = vpop.f32.mrf.mxu0
        %v1031 = vadd.f32 0.0, %v1030
        %1032 = vdwg.mxu0
        %vm1033 = vcmp.gt.f32.partialorder %v980, 0.5
        %v1034 = vmax.f32 %v1031, 0.0
        %v1035 = vsel %vm1033, %v1034, %v1031
        %v1037 = vrot.slane %v1035, 7
        %v1039 = vsel %vm649, 0.0, %v1037
        %v1040 = vrot.slane %v1035, 1
        %v1042 = vsel %vm656, %v1040, 0.0
        %1043 = vrot.lane.b32.xlu0 %v1035, 64
        %v1044 = vpop.permute.xlu0 %1043
        %v1046 = vsel %vm775, %v1039, %v1044
        %s1047 = scalar_lea.vmem %s6, 192
        %v1048 = vld [vmem:[%s1047] sm:$0xff]
        %v1049 = vld [vmem:[%s1047 + $0x8] sm:$0xff]
        %v1050 = vld [vmem:[%s1047 + $0x10] sm:$0xff]
        %v1051 = vld [vmem:[%s1047 + $0x18] sm:$0xff]
        %v1052 = vld [vmem:[%s1047 + $0x20] sm:$0xff]
        %v1053 = vld [vmem:[%s1047 + $0x28] sm:$0xff]
        %v1054 = vld [vmem:[%s1047 + $0x30] sm:$0xff]
        %v1055 = vld [vmem:[%s1047 + $0x38] sm:$0xff]
        %v1056 = vld [vmem:[%s1047 + $0x40] sm:$0xff]
        %v1057 = vld [vmem:[%s1047 + $0x48] sm:$0xff]
        %v1058 = vld [vmem:[%s1047 + $0x50] sm:$0xff]
        %v1059 = vld [vmem:[%s1047 + $0x58] sm:$0xff]
        %v1060 = vld [vmem:[%s1047 + $0x60] sm:$0xff]
        %v1061 = vld [vmem:[%s1047 + $0x68] sm:$0xff]
        %v1062 = vld [vmem:[%s1047 + $0x70] sm:$0xff]
        %v1063 = vld [vmem:[%s1047 + $0x78] sm:$0xff]
        %v1064 = vld [vmem:[%s1047 + $0x80] sm:$0xff]
        %v1065 = vld [vmem:[%s1047 + $0x88] sm:$0xff]
        %v1066 = vld [vmem:[%s1047 + $0x90] sm:$0xff]
        %v1067 = vld [vmem:[%s1047 + $0x98] sm:$0xff]
        %v1068 = vld [vmem:[%s1047 + $0xa0] sm:$0xff]
        %v1069 = vld [vmem:[%s1047 + $0xa8] sm:$0xff]
        %v1070 = vld [vmem:[%s1047 + $0xb0] sm:$0xff]
        %v1071 = vld [vmem:[%s1047 + $0xb8] sm:$0xff]
        %v1073 = vsel %vm775, %v1042, 0
        %1075 = vmatpush.msra.mxu0 %v1063
        %1076 = vmatpush.msra.mxu0 %v1062
        %1077 = vmatpush.msra.mxu0 %v1061
        %1078 = vmatpush.msra.mxu0 %v1060
        %1079 = vmatpush.msra.mxu0 %v1059
        %1080 = vmatpush.msra.mxu0 %v1058
        %1081 = vmatpush.msra.mxu0 %v1057
        %1082 = vmatpush.msra.mxu0 %v1056
        %1083 = vmatpush.msra.mxu0 %v1055
        %1084 = vmatpush.msra.mxu0 %v1054
        %1085 = vmatpush.msra.mxu0 %v1053
        %1086 = vmatpush.msra.mxu0 %v1052
        %1087 = vmatpush.msra.mxu0 %v1051
        %1088 = vmatpush.msra.mxu0 %v1050
        %1089 = vmatpush.msra.mxu0 %v1049
        %1090 = vmatpush.msra.mxu0 %v1048
        %1091 = vmatmul.f32.gmra.mxu0 %v1046
        %v1092 = vpop.f32.mrf.mxu0
        %v1093 = vadd.f32 0.0, %v1092
        %1094 = vdwg.mxu0
        %1095 = vmatpush.msra.mxu0 0.0
        %1096 = vmatpush.msra.mxu0 0.0
        %1097 = vmatpush.msra.mxu0 0.0
        %1098 = vmatpush.msra.mxu0 0.0
        %1099 = vmatpush.msra.mxu0 0.0
        %1100 = vmatpush.msra.mxu0 0.0
        %1101 = vmatpush.msra.mxu0 0.0
        %1102 = vmatpush.msra.mxu0 0.0
        %1103 = vmatpush.msra.mxu0 %v1071
        %1104 = vmatpush.msra.mxu0 %v1070
        %1105 = vmatpush.msra.mxu0 %v1069
        %1106 = vmatpush.msra.mxu0 %v1068
        %1107 = vmatpush.msra.mxu0 %v1067
        %1108 = vmatpush.msra.mxu0 %v1066
        %1109 = vmatpush.msra.mxu0 %v1065
        %1110 = vmatpush.msra.mxu0 %v1064
        %1111 = vmatmul.f32.gmra.mxu0 %v1073
        %v1112 = vpop.f32.mrf.mxu0
        %v1113 = vadd.f32 %v1093, %v1112
        %1114 = vdwg.mxu0
        %v1115 = vmax.f32 %v1113, 0.0
        %1117 = vrot.lane.b32.xlu0 %v1115, 64
        %v1118 = vpop.permute.xlu0 %1117
        %1121 = vrot.lane.b32.xlu0 %v1113, 64
        %v1122 = vpop.permute.xlu0 %1121
        %v1124 = vsel %vm1033, %v1118, %v1122
        %v1126 = vrot.slane %v1124, 1
        %v1128 = vsel %vm656, %v1126, 0.0
        %v1129 = vmax.f32 %v1124, %v1128
        %s1130 = scalar_lea.vmem %s8, 8
        %v1131 = vld [vmem:[%s1130] sm:$0xff]
        %1133 = vrot.lane.b32.xlu0 %v1129, 64
        %v1134 = vpop.permute.xlu0 %1133
        %vm1136 = vcmask 64512
        %v1138 = vsel %vm1136, %v1131, 0
        %1140 = vmatpush.msra.mxu0 0.0
        %1141 = vmatpush.msra.mxu0 0.0
        %1142 = vmatpush.msra.mxu0 0.0
        %1143 = vmatpush.msra.mxu0 0.0
        %1144 = vmatpush.msra.mxu0 0.0
        %1145 = vmatpush.msra.mxu0 0.0
        %1146 = vmatpush.msra.mxu0 0.0
        %1147 = vmatpush.msra.mxu0 0.0
        %1148 = vmatpush.msra.mxu0 0.0
        %1149 = vmatpush.msra.mxu0 0.0
        %1150 = vmatpush.msra.mxu0 0.0
        %1151 = vmatpush.msra.mxu0 0.0
        %1152 = vmatpush.msra.mxu0 0.0
        %1153 = vmatpush.msra.mxu0 0.0
        %1154 = vmatpush.msra.mxu0 0.0
        %1155 = vmatpush.msra.mxu0 %v1134
        %1156 = vmatmul.f32.gmra.mxu0 %v1138
        %v1157 = vpop.f32.mrf.mxu0
        %v1158 = vadd.f32 0.0, %v1157
        %1159 = vdwg.mxu0
        %s1160 = scalar_lea.vmem %s9, 128
        %v1161 = vld [vmem:[%s1160] sm:$0xff]
        %v1162 = vld [vmem:[%s1160 + $0x8] sm:$0xff]
        %v1163 = vld [vmem:[%s1160 + $0x10] sm:$0xff]
        %v1164 = vld [vmem:[%s1160 + $0x18] sm:$0xff]
        %v1165 = vld [vmem:[%s1160 + $0x20] sm:$0xff]
        %v1166 = vld [vmem:[%s1160 + $0x28] sm:$0xff]
        %v1167 = vld [vmem:[%s1160 + $0x30] sm:$0xff]
        %v1168 = vld [vmem:[%s1160 + $0x38] sm:$0xff]
        %s1169 = scalar_lea.vmem %s9, 192
        %v1170 = vld [vmem:[%s1169] sm:$0xff]
        %v1171 = vld [vmem:[%s1169 + $0x8] sm:$0xff]
        %v1172 = vld [vmem:[%s1169 + $0x10] sm:$0xff]
        %v1173 = vld [vmem:[%s1169 + $0x18] sm:$0xff]
        %v1174 = vld [vmem:[%s1169 + $0x20] sm:$0xff]
        %v1175 = vld [vmem:[%s1169 + $0x28] sm:$0xff]
        %v1176 = vld [vmem:[%s1169 + $0x30] sm:$0xff]
        %v1177 = vld [vmem:[%s1169 + $0x38] sm:$0xff]
        %v1179 = vsel %vm775, %v1158, 0
        %1181 = vmatpush.msra.mxu0 0.0
        %1182 = vmatpush.msra.mxu0 0.0
        %1183 = vmatpush.msra.mxu0 0.0
        %1184 = vmatpush.msra.mxu0 0.0
        %1185 = vmatpush.msra.mxu0 0.0
        %1186 = vmatpush.msra.mxu0 0.0
        %1187 = vmatpush.msra.mxu0 0.0
        %1188 = vmatpush.msra.mxu0 0.0
        %1189 = vmatpush.msra.mxu0 %v1168
        %1190 = vmatpush.msra.mxu0 %v1167
        %1191 = vmatpush.msra.mxu0 %v1166
        %1192 = vmatpush.msra.mxu0 %v1165
        %1193 = vmatpush.msra.mxu0 %v1164
        %1194 = vmatpush.msra.mxu0 %v1163
        %1195 = vmatpush.msra.mxu0 %v1162
        %1196 = vmatpush.msra.mxu0 %v1161
        %1197 = vmatmul.f32.gmra.mxu0 %v1179
        %v1198 = vpop.f32.mrf.mxu0
        %v1199 = vadd.f32 0.0, %v1198
        %1200 = vdwg.mxu0
        %1201 = vmatpush.msra.mxu0 0.0
        %1202 = vmatpush.msra.mxu0 0.0
        %1203 = vmatpush.msra.mxu0 0.0
        %1204 = vmatpush.msra.mxu0 0.0
        %1205 = vmatpush.msra.mxu0 0.0
        %1206 = vmatpush.msra.mxu0 0.0
        %1207 = vmatpush.msra.mxu0 0.0
        %1208 = vmatpush.msra.mxu0 0.0
        %1209 = vmatpush.msra.mxu0 %v1177
        %1210 = vmatpush.msra.mxu0 %v1176
        %1211 = vmatpush.msra.mxu0 %v1175
        %1212 = vmatpush.msra.mxu0 %v1174
        %1213 = vmatpush.msra.mxu0 %v1173
        %1214 = vmatpush.msra.mxu0 %v1172
        %1215 = vmatpush.msra.mxu0 %v1171
        %1216 = vmatpush.msra.mxu0 %v1170
        %1217 = vmatmul.f32.gmra.mxu0 %v1179
        %v1218 = vpop.f32.mrf.mxu0
        %v1219 = vadd.f32 0.0, %v1218
        %1220 = vdwg.mxu0
        %v1221 = vmax.f32 %v1199, %v1219
        %v1222 = vsel %vm775, %v1035, %v1124
        %1223 = vst [vmem:[%s632] sm:$0xff] %v1222
        %v1224 = vld [vmem:[%s618] sm:$0xff]
        %v1226 = vrot.slane %v1221, 7
        %v1228 = vsel %vm649, 0.0, %v1226
        %v1229 = vrot.slane %v1221, 1
        %vm1231 = vcmask 1042432
        %v1232 = vsel %vm1231, %v1229, 0.0
        %1233 = vrot.lane.b32.xlu0 %v1221, 32
        %v1234 = vpop.permute.xlu0 %1233
        %1237 = vrot.lane.b32.xlu0 %v1232, 64
        %v1238 = vpop.permute.xlu0 %1237
        %v1240 = vsel %vm995, %v1228, %v1234
        %v1241 = vsel %vm775, %v1240, %v1238
        %s1242 = scalar_lea.vmem %s7, 96
        %v1243 = vld [vmem:[%s1242] sm:$0xff]
        %v1244 = vld [vmem:[%s1242 + $0x8] sm:$0xff]
        %v1245 = vld [vmem:[%s1242 + $0x10] sm:$0xff]
        %v1246 = vld [vmem:[%s1242 + $0x18] sm:$0xff]
        %v1247 = vld [vmem:[%s1242 + $0x20] sm:$0xff]
        %v1248 = vld [vmem:[%s1242 + $0x28] sm:$0xff]
        %v1249 = vld [vmem:[%s1242 + $0x30] sm:$0xff]
        %v1250 = vld [vmem:[%s1242 + $0x38] sm:$0xff]
        %v1251 = vld [vmem:[%s1242 + $0x40] sm:$0xff]
        %v1252 = vld [vmem:[%s1242 + $0x48] sm:$0xff]
        %v1253 = vld [vmem:[%s1242 + $0x50] sm:$0xff]
        %v1254 = vld [vmem:[%s1242 + $0x58] sm:$0xff]
        %v1256 = vsel %vm678, %v1241, 0
        %1258 = vmatpush.msra.mxu0 0.0
        %1259 = vmatpush.msra.mxu0 0.0
        %1260 = vmatpush.msra.mxu0 0.0
        %1261 = vmatpush.msra.mxu0 0.0
        %1262 = vmatpush.msra.mxu0 %v1254
        %1263 = vmatpush.msra.mxu0 %v1253
        %1264 = vmatpush.msra.mxu0 %v1252
        %1265 = vmatpush.msra.mxu0 %v1251
        %1266 = vmatpush.msra.mxu0 %v1250
        %1267 = vmatpush.msra.mxu0 %v1249
        %1268 = vmatpush.msra.mxu0 %v1248
        %1269 = vmatpush.msra.mxu0 %v1247
        %1270 = vmatpush.msra.mxu0 %v1246
        %1271 = vmatpush.msra.mxu0 %v1245
        %1272 = vmatpush.msra.mxu0 %v1244
        %1273 = vmatpush.msra.mxu0 %v1243
        %1274 = vmatmul.f32.gmra.mxu0 %v1256
        %v1275 = vpop.f32.mrf.mxu0
        %v1276 = vadd.f32 0.0, %v1275
        %1277 = vdwg.mxu0
        %vm1278 = vcmp.gt.f32.partialorder %v1224, 0.5
        %v1279 = vmax.f32 %v1276, 0.0
        %v1280 = vsel %vm1278, %v1279, %v1276
        %1282 = vst [vmem:[#allocation1] ss:$2 sm:$0xff] %v1280
        %v1283 = vld.sshfl [vmem:[#allocation1] sm:$0xff pattern:$0x75316420]
        %v1284 = vrot.slane %v1283, 7
        %v1286 = vsel %vm649, 0.0, %v1284
        %1287 = vst [vmem:[#allocation1] ss:$2 sm:$0xff] %v1280
        %v1288 = vld.sshfl [vmem:[#allocation1] sm:$0xff pattern:$0x75316420]
        %v1289 = vrot.slane %v1288, 1
        %v1291 = vsel %vm1231, %v1289, 0.0
        %1292 = vst [vmem:[#allocation1] ss:$2 sm:$0xff] %v1280
        %v1293 = vld.sshfl [vmem:[#allocation1] sm:$0xff pattern:$0x75316420]
        %1294 = vrot.lane.b32.xlu0 %v1293, 64
        %v1295 = vpop.permute.xlu0 %1294
        %v1297 = vsel %vm775, %v1286, %v1295
        %s1298 = scalar_lea.vmem %s6, 384
        %v1299 = vld [vmem:[%s1298] sm:$0xff]
        %v1300 = vld [vmem:[%s1298 + $0x8] sm:$0xff]
        %v1301 = vld [vmem:[%s1298 + $0x10] sm:$0xff]
        %v1302 = vld [vmem:[%s1298 + $0x18] sm:$0xff]
        %v1303 = vld [vmem:[%s1298 + $0x20] sm:$0xff]
        %v1304 = vld [vmem:[%s1298 + $0x28] sm:$0xff]
        %v1305 = vld [vmem:[%s1298 + $0x30] sm:$0xff]
        %v1306 = vld [vmem:[%s1298 + $0x38] sm:$0xff]
        %v1307 = vld [vmem:[%s1298 + $0x40] sm:$0xff]
        %v1308 = vld [vmem:[%s1298 + $0x48] sm:$0xff]
        %v1309 = vld [vmem:[%s1298 + $0x50] sm:$0xff]
        %v1310 = vld [vmem:[%s1298 + $0x58] sm:$0xff]
        %v1311 = vld [vmem:[%s1298 + $0x60] sm:$0xff]
        %v1312 = vld [vmem:[%s1298 + $0x68] sm:$0xff]
        %v1313 = vld [vmem:[%s1298 + $0x70] sm:$0xff]
        %v1314 = vld [vmem:[%s1298 + $0x78] sm:$0xff]
        %v1315 = vld [vmem:[%s1298 + $0x80] sm:$0xff]
        %v1316 = vld [vmem:[%s1298 + $0x88] sm:$0xff]
        %v1317 = vld [vmem:[%s1298 + $0x90] sm:$0xff]
        %v1318 = vld [vmem:[%s1298 + $0x98] sm:$0xff]
        %v1319 = vld [vmem:[%s1298 + $0xa0] sm:$0xff]
        %v1320 = vld [vmem:[%s1298 + $0xa8] sm:$0xff]
        %v1321 = vld [vmem:[%s1298 + $0xb0] sm:$0xff]
        %v1322 = vld [vmem:[%s1298 + $0xb8] sm:$0xff]
        %v1324 = vsel %vm775, %v1291, 0
        %1326 = vmatpush.msra.mxu0 %v1314
        %1327 = vmatpush.msra.mxu0 %v1313
        %1328 = vmatpush.msra.mxu0 %v1312
        %1329 = vmatpush.msra.mxu0 %v1311
        %1330 = vmatpush.msra.mxu0 %v1310
        %1331 = vmatpush.msra.mxu0 %v1309
        %1332 = vmatpush.msra.mxu0 %v1308
        %1333 = vmatpush.msra.mxu0 %v1307
        %1334 = vmatpush.msra.mxu0 %v1306
        %1335 = vmatpush.msra.mxu0 %v1305
        %1336 = vmatpush.msra.mxu0 %v1304
        %1337 = vmatpush.msra.mxu0 %v1303
        %1338 = vmatpush.msra.mxu0 %v1302
        %1339 = vmatpush.msra.mxu0 %v1301
        %1340 = vmatpush.msra.mxu0 %v1300
        %1341 = vmatpush.msra.mxu0 %v1299
        %1342 = vmatmul.f32.gmra.mxu0 %v1297
        %v1343 = vpop.f32.mrf.mxu0
        %v1344 = vadd.f32 0.0, %v1343
        %1345 = vdwg.mxu0
        %1346 = vmatpush.msra.mxu0 0.0
        %1347 = vmatpush.msra.mxu0 0.0
        %1348 = vmatpush.msra.mxu0 0.0
        %1349 = vmatpush.msra.mxu0 0.0
        %1350 = vmatpush.msra.mxu0 0.0
        %1351 = vmatpush.msra.mxu0 0.0
        %1352 = vmatpush.msra.mxu0 0.0
        %1353 = vmatpush.msra.mxu0 0.0
        %1354 = vmatpush.msra.mxu0 %v1322
        %1355 = vmatpush.msra.mxu0 %v1321
        %1356 = vmatpush.msra.mxu0 %v1320
        %1357 = vmatpush.msra.mxu0 %v1319
        %1358 = vmatpush.msra.mxu0 %v1318
        %1359 = vmatpush.msra.mxu0 %v1317
        %1360 = vmatpush.msra.mxu0 %v1316
        %1361 = vmatpush.msra.mxu0 %v1315
        %1362 = vmatmul.f32.gmra.mxu0 %v1324
        %v1363 = vpop.f32.mrf.mxu0
        %v1364 = vadd.f32 %v1344, %v1363
        %1365 = vdwg.mxu0
        %v1366 = vmax.f32 %v1364, 0.0
        %1368 = vrot.lane.b32.xlu0 %v1366, 64
        %v1369 = vpop.permute.xlu0 %1368
        %1372 = vrot.lane.b32.xlu0 %v1364, 64
        %v1373 = vpop.permute.xlu0 %1372
        %v1375 = vsel %vm1278, %v1369, %v1373
        %1377 = vst [vmem:[#allocation1] ss:$2 sm:$0xff] %v1375
        %v1378 = vld.sshfl [vmem:[#allocation1] sm:$0xff pattern:$0x75316420]
        %v1379 = vrot.slane %v1378, 7
        %1380 = vrot.lane.b32.xlu0 %v1379, 64
        %v1381 = vpop.permute.xlu0 %1380
        %v1383 = vsel %vm649, 0.0, %v1381
        %1384 = vst [vmem:[#allocation1] ss:$2 sm:$0xff] %v1375
        %v1385 = vld.sshfl [vmem:[#allocation1] sm:$0xff pattern:$0x75316420]
        %v1386 = vrot.slane %v1385, 1
        %v1388 = vsel %vm1231, %v1386, 0.0
        %1390 = vrot.lane.b32.xlu0 %v1388, 64
        %v1391 = vpop.permute.xlu0 %1390
        %v1392 = vsel %vm775, %v1383, %v1375
        %s1393 = scalar_lea.vmem %s6, 576
        %v1394 = vld [vmem:[%s1393] sm:$0xff]
        %v1395 = vld [vmem:[%s1393 + $0x8] sm:$0xff]
        %v1396 = vld [vmem:[%s1393 + $0x10] sm:$0xff]
        %v1397 = vld [vmem:[%s1393 + $0x18] sm:$0xff]
        %v1398 = vld [vmem:[%s1393 + $0x20] sm:$0xff]
        %v1399 = vld [vmem:[%s1393 + $0x28] sm:$0xff]
        %v1400 = vld [vmem:[%s1393 + $0x30] sm:$0xff]
        %v1401 = vld [vmem:[%s1393 + $0x38] sm:$0xff]
        %v1402 = vld [vmem:[%s1393 + $0x40] sm:$0xff]
        %v1403 = vld [vmem:[%s1393 + $0x48] sm:$0xff]
        %v1404 = vld [vmem:[%s1393 + $0x50] sm:$0xff]
        %v1405 = vld [vmem:[%s1393 + $0x58] sm:$0xff]
        %v1406 = vld [vmem:[%s1393 + $0x60] sm:$0xff]
        %v1407 = vld [vmem:[%s1393 + $0x68] sm:$0xff]
        %v1408 = vld [vmem:[%s1393 + $0x70] sm:$0xff]
        %v1409 = vld [vmem:[%s1393 + $0x78] sm:$0xff]
        %v1410 = vld [vmem:[%s1393 + $0x80] sm:$0xff]
        %v1411 = vld [vmem:[%s1393 + $0x88] sm:$0xff]
        %v1412 = vld [vmem:[%s1393 + $0x90] sm:$0xff]
        %v1413 = vld [vmem:[%s1393 + $0x98] sm:$0xff]
        %v1414 = vld [vmem:[%s1393 + $0xa0] sm:$0xff]
        %v1415 = vld [vmem:[%s1393 + $0xa8] sm:$0xff]
        %v1416 = vld [vmem:[%s1393 + $0xb0] sm:$0xff]
        %v1417 = vld [vmem:[%s1393 + $0xb8] sm:$0xff]
        %v1418 = vsel %vm775, %v1391, 0
        %1420 = vmatpush.msra.mxu0 %v1409
        %1421 = vmatpush.msra.mxu0 %v1408
        %1422 = vmatpush.msra.mxu0 %v1407
        %1423 = vmatpush.msra.mxu0 %v1406
        %1424 = vmatpush.msra.mxu0 %v1405
        %1425 = vmatpush.msra.mxu0 %v1404
        %1426 = vmatpush.msra.mxu0 %v1403
        %1427 = vmatpush.msra.mxu0 %v1402
        %1428 = vmatpush.msra.mxu0 %v1401
        %1429 = vmatpush.msra.mxu0 %v1400
        %1430 = vmatpush.msra.mxu0 %v1399
        %1431 = vmatpush.msra.mxu0 %v1398
        %1432 = vmatpush.msra.mxu0 %v1397
        %1433 = vmatpush.msra.mxu0 %v1396
        %1434 = vmatpush.msra.mxu0 %v1395
        %1435 = vmatpush.msra.mxu0 %v1394
        %1436 = vmatmul.f32.gmra.mxu0 %v1392
        %v1437 = vpop.f32.mrf.mxu0
        %v1438 = vadd.f32 0.0, %v1437
        %1439 = vdwg.mxu0
        %1440 = vmatpush.msra.mxu0 0.0
        %1441 = vmatpush.msra.mxu0 0.0
        %1442 = vmatpush.msra.mxu0 0.0
        %1443 = vmatpush.msra.mxu0 0.0
        %1444 = vmatpush.msra.mxu0 0.0
        %1445 = vmatpush.msra.mxu0 0.0
        %1446 = vmatpush.msra.mxu0 0.0
        %1447 = vmatpush.msra.mxu0 0.0
        %1448 = vmatpush.msra.mxu0 %v1417
        %1449 = vmatpush.msra.mxu0 %v1416
        %1450 = vmatpush.msra.mxu0 %v1415
        %1451 = vmatpush.msra.mxu0 %v1414
        %1452 = vmatpush.msra.mxu0 %v1413
        %1453 = vmatpush.msra.mxu0 %v1412
        %1454 = vmatpush.msra.mxu0 %v1411
        %1455 = vmatpush.msra.mxu0 %v1410
        %1456 = vmatmul.f32.gmra.mxu0 %v1418
        %v1457 = vpop.f32.mrf.mxu0
        %v1458 = vadd.f32 %v1438, %v1457
        %1459 = vdwg.mxu0
        %v1461 = vrot.slane %v1224, 4
        %vm1463 = vcmp.gt.f32.partialorder %v1461, 0.5
        %v1464 = vmax.f32 %v1458, 0.0
        %v1465 = vsel %vm1463, %v1464, %v1458
        %1467 = vst [vmem:[#allocation1] ss:$2 sm:$0xff] %v1465
        %v1468 = vld.sshfl [vmem:[#allocation1] sm:$0xff pattern:$0x75316420]
        %v1469 = vrot.slane %v1468, 1
        %v1471 = vsel %vm1231, %v1469, 0.0
        %v1472 = vmax.f32 %v1465, %v1471
        %s1473 = scalar_lea.vmem %s8, 16
        %v1474 = vld [vmem:[%s1473] sm:$0xff]
        %vm1475 = vcmask 31744
        %v1477 = vsel %vm1475, %v1474, 0
        %vm1479 = vcmask 1043456
        %v1481 = vsel %vm1479, %v1472, 0
        %1483 = vmatpush.msra.mxu0 0.0
        %1484 = vmatpush.msra.mxu0 0.0
        %1485 = vmatpush.msra.mxu0 0.0
        %1486 = vmatpush.msra.mxu0 0.0
        %1487 = vmatpush.msra.mxu0 0.0
        %1488 = vmatpush.msra.mxu0 0.0
        %1489 = vmatpush.msra.mxu0 0.0
        %1490 = vmatpush.msra.mxu0 0.0
        %1491 = vmatpush.msra.mxu0 0.0
        %1492 = vmatpush.msra.mxu0 0.0
        %1493 = vmatpush.msra.mxu0 0.0
        %1494 = vmatpush.msra.mxu0 0.0
        %1495 = vmatpush.msra.mxu0 0.0
        %1496 = vmatpush.msra.mxu0 0.0
        %1497 = vmatpush.msra.mxu0 0.0
        %1498 = vmatpush.msra.mxu0 %v1481
        %1499 = vmatmul.f32.gmra.mxu0 %v1477
        %v1500 = vpop.f32.mrf.mxu0
        %v1501 = vadd.f32 0.0, %v1500
        %1502 = vdwg.mxu0
        %s1503 = scalar_lea.vmem %s9, 256
        %v1504 = vld [vmem:[%s1503] sm:$0xff]
        %v1505 = vld [vmem:[%s1503 + $0x8] sm:$0xff]
        %v1506 = vld [vmem:[%s1503 + $0x10] sm:$0xff]
        %v1507 = vld [vmem:[%s1503 + $0x18] sm:$0xff]
        %v1508 = vld [vmem:[%s1503 + $0x20] sm:$0xff]
        %v1509 = vld [vmem:[%s1503 + $0x28] sm:$0xff]
        %v1510 = vld [vmem:[%s1503 + $0x30] sm:$0xff]
        %v1511 = vld [vmem:[%s1503 + $0x38] sm:$0xff]
        %s1512 = scalar_lea.vmem %s9, 320
        %v1513 = vld [vmem:[%s1512] sm:$0xff]
        %v1514 = vld [vmem:[%s1512 + $0x8] sm:$0xff]
        %v1515 = vld [vmem:[%s1512 + $0x10] sm:$0xff]
        %v1516 = vld [vmem:[%s1512 + $0x18] sm:$0xff]
        %v1517 = vld [vmem:[%s1512 + $0x20] sm:$0xff]
        %v1518 = vld [vmem:[%s1512 + $0x28] sm:$0xff]
        %v1519 = vld [vmem:[%s1512 + $0x30] sm:$0xff]
        %v1520 = vld [vmem:[%s1512 + $0x38] sm:$0xff]
        %v1522 = vsel %vm775, %v1501, 0
        %1524 = vmatpush.msra.mxu0 0.0
        %1525 = vmatpush.msra.mxu0 0.0
        %1526 = vmatpush.msra.mxu0 0.0
        %1527 = vmatpush.msra.mxu0 0.0
        %1528 = vmatpush.msra.mxu0 0.0
        %1529 = vmatpush.msra.mxu0 0.0
        %1530 = vmatpush.msra.mxu0 0.0
        %1531 = vmatpush.msra.mxu0 0.0
        %1532 = vmatpush.msra.mxu0 %v1511
        %1533 = vmatpush.msra.mxu0 %v1510
        %1534 = vmatpush.msra.mxu0 %v1509
        %1535 = vmatpush.msra.mxu0 %v1508
        %1536 = vmatpush.msra.mxu0 %v1507
        %1537 = vmatpush.msra.mxu0 %v1506
        %1538 = vmatpush.msra.mxu0 %v1505
        %1539 = vmatpush.msra.mxu0 %v1504
        %1540 = vmatmul.f32.gmra.mxu0 %v1522
        %v1541 = vpop.f32.mrf.mxu0
        %v1542 = vadd.f32 0.0, %v1541
        %1543 = vdwg.mxu0
        %1544 = vmatpush.msra.mxu0 0.0
        %1545 = vmatpush.msra.mxu0 0.0
        %1546 = vmatpush.msra.mxu0 0.0
        %1547 = vmatpush.msra.mxu0 0.0
        %1548 = vmatpush.msra.mxu0 0.0
        %1549 = vmatpush.msra.mxu0 0.0
        %1550 = vmatpush.msra.mxu0 0.0
        %1551 = vmatpush.msra.mxu0 0.0
        %1552 = vmatpush.msra.mxu0 %v1520
        %1553 = vmatpush.msra.mxu0 %v1519
        %1554 = vmatpush.msra.mxu0 %v1518
        %1555 = vmatpush.msra.mxu0 %v1517
        %1556 = vmatpush.msra.mxu0 %v1516
        %1557 = vmatpush.msra.mxu0 %v1515
        %1558 = vmatpush.msra.mxu0 %v1514
        %1559 = vmatpush.msra.mxu0 %v1513
        %1560 = vmatmul.f32.gmra.mxu0 %v1522
        %v1561 = vpop.f32.mrf.mxu0
        %v1562 = vadd.f32 0.0, %v1561
        %1563 = vdwg.mxu0
        %v1564 = vmax.f32 %v1542, %v1562
        %v1565 = vsel %vm775, %v1280, %v1375
        %v1566 = vsel %vm775, %v1465, 0.0
        %v1569 = vrot.slane %v1566, 4
        %v1570 = vsel %vm1479, %v1565, %v1569
        %1572 = vst [vmem:[%s637] sm:$0xff] %v1570
        %v1573 = vld [vmem:[%s623] sm:$0x3f]
        %v1575 = vrot.slane %v1564, 7
        %v1577 = vsel %vm649, 0.0, %v1575
        %v1578 = vrot.slane %v1564, 1
        %v1580 = vsel %vm649, %v1578, 0.0
        %1581 = vrot.lane.b32.xlu0 %v1564, 32
        %v1582 = vpop.permute.xlu0 %1581
        %1585 = vrot.lane.b32.xlu0 %v1580, 64
        %v1586 = vpop.permute.xlu0 %1585
        %v1588 = vsel %vm995, %v1577, %v1582
        %v1589 = vsel %vm775, %v1588, %v1586
        %s1590 = scalar_lea.vmem %s7, 192
        %v1591 = vld [vmem:[%s1590] sm:$0xff]
        %v1592 = vld [vmem:[%s1590 + $0x8] sm:$0xff]
        %v1593 = vld [vmem:[%s1590 + $0x10] sm:$0xff]
        %v1594 = vld [vmem:[%s1590 + $0x18] sm:$0xff]
        %v1595 = vld [vmem:[%s1590 + $0x20] sm:$0xff]
        %v1596 = vld [vmem:[%s1590 + $0x28] sm:$0xff]
        %v1597 = vld [vmem:[%s1590 + $0x30] sm:$0xff]
        %v1598 = vld [vmem:[%s1590 + $0x38] sm:$0xff]
        %v1599 = vld [vmem:[%s1590 + $0x40] sm:$0xff]
        %v1600 = vld [vmem:[%s1590 + $0x48] sm:$0xff]
        %v1601 = vld [vmem:[%s1590 + $0x50] sm:$0xff]
        %v1602 = vld [vmem:[%s1590 + $0x58] sm:$0xff]
        %v1604 = vsel %vm678, %v1589, 0
        %1606 = vmatpush.msra.mxu0 0.0
        %1607 = vmatpush.msra.mxu0 0.0
        %1608 = vmatpush.msra.mxu0 0.0
        %1609 = vmatpush.msra.mxu0 0.0
        %1610 = vmatpush.msra.mxu0 %v1602
        %1611 = vmatpush.msra.mxu0 %v1601
        %1612 = vmatpush.msra.mxu0 %v1600
        %1613 = vmatpush.msra.mxu0 %v1599
        %1614 = vmatpush.msra.mxu0 %v1598
        %1615 = vmatpush.msra.mxu0 %v1597
        %1616 = vmatpush.msra.mxu0 %v1596
        %1617 = vmatpush.msra.mxu0 %v1595
        %1618 = vmatpush.msra.mxu0 %v1594
        %1619 = vmatpush.msra.mxu0 %v1593
        %1620 = vmatpush.msra.mxu0 %v1592
        %1621 = vmatpush.msra.mxu0 %v1591
        %1622 = vmatmul.f32.gmra.mxu0 %v1604
        %v1623 = vpop.f32.mrf.mxu0
        %v1624 = vadd.f32 0.0, %v1623
        %1625 = vdwg.mxu0
        %vm1626 = vcmp.gt.f32.partialorder %v1573, 0.5
        %v1627 = vmax.f32 %v1624, 0.0
        %v1628 = vsel %vm1626, %v1627, %v1624
        %v1630 = vperm.slane %v1628, 0
        %v1632 = vsel %vm649, 0.0, %v1630
        %v1633 = vperm.slane %v1628, 1
        %v1635 = vsel %vm649, %v1633, 0.0
        %1636 = vst [vmem:[#allocation1] ss:$4 sm:$0xff] %v1628
        %v1637 = vld.sshfl [vmem:[#allocation1] sm:$0xff pattern:$0x73625140]
        %1638 = vrot.lane.b32.xlu0 %v1637, 64
        %v1639 = vpop.permute.xlu0 %1638
        %v1641 = vsel %vm775, %v1632, %v1639
        %s1642 = scalar_lea.vmem %s6, 768
        %v1643 = vld [vmem:[%s1642] sm:$0xff]
        %v1644 = vld [vmem:[%s1642 + $0x8] sm:$0xff]
        %v1645 = vld [vmem:[%s1642 + $0x10] sm:$0xff]
        %v1646 = vld [vmem:[%s1642 + $0x18] sm:$0xff]
        %v1647 = vld [vmem:[%s1642 + $0x20] sm:$0xff]
        %v1648 = vld [vmem:[%s1642 + $0x28] sm:$0xff]
        %v1649 = vld [vmem:[%s1642 + $0x30] sm:$0xff]
        %v1650 = vld [vmem:[%s1642 + $0x38] sm:$0xff]
        %v1651 = vld [vmem:[%s1642 + $0x40] sm:$0xff]
        %v1652 = vld [vmem:[%s1642 + $0x48] sm:$0xff]
        %v1653 = vld [vmem:[%s1642 + $0x50] sm:$0xff]
        %v1654 = vld [vmem:[%s1642 + $0x58] sm:$0xff]
        %v1655 = vld [vmem:[%s1642 + $0x60] sm:$0xff]
        %v1656 = vld [vmem:[%s1642 + $0x68] sm:$0xff]
        %v1657 = vld [vmem:[%s1642 + $0x70] sm:$0xff]
        %v1658 = vld [vmem:[%s1642 + $0x78] sm:$0xff]
        %v1659 = vld [vmem:[%s1642 + $0x80] sm:$0xff]
        %v1660 = vld [vmem:[%s1642 + $0x88] sm:$0xff]
        %v1661 = vld [vmem:[%s1642 + $0x90] sm:$0xff]
        %v1662 = vld [vmem:[%s1642 + $0x98] sm:$0xff]
        %v1663 = vld [vmem:[%s1642 + $0xa0] sm:$0xff]
        %v1664 = vld [vmem:[%s1642 + $0xa8] sm:$0xff]
        %v1665 = vld [vmem:[%s1642 + $0xb0] sm:$0xff]
        %v1666 = vld [vmem:[%s1642 + $0xb8] sm:$0xff]
        %v1668 = vsel %vm775, %v1635, 0
        %1670 = vmatpush.msra.mxu0 %v1658
        %1671 = vmatpush.msra.mxu0 %v1657
        %1672 = vmatpush.msra.mxu0 %v1656
        %1673 = vmatpush.msra.mxu0 %v1655
        %1674 = vmatpush.msra.mxu0 %v1654
        %1675 = vmatpush.msra.mxu0 %v1653
        %1676 = vmatpush.msra.mxu0 %v1652
        %1677 = vmatpush.msra.mxu0 %v1651
        %1678 = vmatpush.msra.mxu0 %v1650
        %1679 = vmatpush.msra.mxu0 %v1649
        %1680 = vmatpush.msra.mxu0 %v1648
        %1681 = vmatpush.msra.mxu0 %v1647
        %1682 = vmatpush.msra.mxu0 %v1646
        %1683 = vmatpush.msra.mxu0 %v1645
        %1684 = vmatpush.msra.mxu0 %v1644
        %1685 = vmatpush.msra.mxu0 %v1643
        %1686 = vmatmul.f32.gmra.mxu0 %v1641
        %v1687 = vpop.f32.mrf.mxu0
        %v1688 = vadd.f32 0.0, %v1687
        %1689 = vdwg.mxu0
        %1690 = vmatpush.msra.mxu0 0.0
        %1691 = vmatpush.msra.mxu0 0.0
        %1692 = vmatpush.msra.mxu0 0.0
        %1693 = vmatpush.msra.mxu0 0.0
        %1694 = vmatpush.msra.mxu0 0.0
        %1695 = vmatpush.msra.mxu0 0.0
        %1696 = vmatpush.msra.mxu0 0.0
        %1697 = vmatpush.msra.mxu0 0.0
        %1698 = vmatpush.msra.mxu0 %v1666
        %1699 = vmatpush.msra.mxu0 %v1665
        %1700 = vmatpush.msra.mxu0 %v1664
        %1701 = vmatpush.msra.mxu0 %v1663
        %1702 = vmatpush.msra.mxu0 %v1662
        %1703 = vmatpush.msra.mxu0 %v1661
        %1704 = vmatpush.msra.mxu0 %v1660
        %1705 = vmatpush.msra.mxu0 %v1659
        %1706 = vmatmul.f32.gmra.mxu0 %v1668
        %v1707 = vpop.f32.mrf.mxu0
        %v1708 = vadd.f32 %v1688, %v1707
        %1709 = vdwg.mxu0
        %v1710 = vmax.f32 %v1708, 0.0
        %1712 = vrot.lane.b32.xlu0 %v1710, 64
        %v1713 = vpop.permute.xlu0 %1712
        %1716 = vrot.lane.b32.xlu0 %v1708, 64
        %v1717 = vpop.permute.xlu0 %1716
        %v1719 = vsel %vm1626, %v1713, %v1717
        %v1721 = vperm.slane %v1719, 0
        %1722 = vrot.lane.b32.xlu0 %v1721, 64
        %v1723 = vpop.permute.xlu0 %1722
        %v1725 = vsel %vm649, 0.0, %v1723
        %v1726 = vperm.slane %v1719, 1
        %v1728 = vsel %vm649, %v1726, 0.0
        %1730 = vrot.lane.b32.xlu0 %v1728, 64
        %v1731 = vpop.permute.xlu0 %1730
        %v1732 = vsel %vm775, %v1725, %v1719
        %s1733 = scalar_lea.vmem %s6, 960
        %v1734 = vld [vmem:[%s1733] sm:$0xff]
        %v1735 = vld [vmem:[%s1733 + $0x8] sm:$0xff]
        %v1736 = vld [vmem:[%s1733 + $0x10] sm:$0xff]
        %v1737 = vld [vmem:[%s1733 + $0x18] sm:$0xff]
        %v1738 = vld [vmem:[%s1733 + $0x20] sm:$0xff]
        %v1739 = vld [vmem:[%s1733 + $0x28] sm:$0xff]
        %v1740 = vld [vmem:[%s1733 + $0x30] sm:$0xff]
        %v1741 = vld [vmem:[%s1733 + $0x38] sm:$0xff]
        %v1742 = vld [vmem:[%s1733 + $0x40] sm:$0xff]
        %v1743 = vld [vmem:[%s1733 + $0x48] sm:$0xff]
        %v1744 = vld [vmem:[%s1733 + $0x50] sm:$0xff]
        %v1745 = vld [vmem:[%s1733 + $0x58] sm:$0xff]
        %v1746 = vld [vmem:[%s1733 + $0x60] sm:$0xff]
        %v1747 = vld [vmem:[%s1733 + $0x68] sm:$0xff]
        %v1748 = vld [vmem:[%s1733 + $0x70] sm:$0xff]
        %v1749 = vld [vmem:[%s1733 + $0x78] sm:$0xff]
        %v1750 = vld [vmem:[%s1733 + $0x80] sm:$0xff]
        %v1751 = vld [vmem:[%s1733 + $0x88] sm:$0xff]
        %v1752 = vld [vmem:[%s1733 + $0x90] sm:$0xff]
        %v1753 = vld [vmem:[%s1733 + $0x98] sm:$0xff]
        %v1754 = vld [vmem:[%s1733 + $0xa0] sm:$0xff]
        %v1755 = vld [vmem:[%s1733 + $0xa8] sm:$0xff]
        %v1756 = vld [vmem:[%s1733 + $0xb0] sm:$0xff]
        %v1757 = vld [vmem:[%s1733 + $0xb8] sm:$0xff]
        %v1758 = vsel %vm775, %v1731, 0
        %1760 = vmatpush.msra.mxu0 %v1749
        %1761 = vmatpush.msra.mxu0 %v1748
        %1762 = vmatpush.msra.mxu0 %v1747
        %1763 = vmatpush.msra.mxu0 %v1746
        %1764 = vmatpush.msra.mxu0 %v1745
        %1765 = vmatpush.msra.mxu0 %v1744
        %1766 = vmatpush.msra.mxu0 %v1743
        %1767 = vmatpush.msra.mxu0 %v1742
        %1768 = vmatpush.msra.mxu0 %v1741
        %1769 = vmatpush.msra.mxu0 %v1740
        %1770 = vmatpush.msra.mxu0 %v1739
        %1771 = vmatpush.msra.mxu0 %v1738
        %1772 = vmatpush.msra.mxu0 %v1737
        %1773 = vmatpush.msra.mxu0 %v1736
        %1774 = vmatpush.msra.mxu0 %v1735
        %1775 = vmatpush.msra.mxu0 %v1734
        %1776 = vmatmul.f32.gmra.mxu0 %v1732
        %v1777 = vpop.f32.mrf.mxu0
        %v1778 = vadd.f32 0.0, %v1777
        %1779 = vdwg.mxu0
        %1780 = vmatpush.msra.mxu0 0.0
        %1781 = vmatpush.msra.mxu0 0.0
        %1782 = vmatpush.msra.mxu0 0.0
        %1783 = vmatpush.msra.mxu0 0.0
        %1784 = vmatpush.msra.mxu0 0.0
        %1785 = vmatpush.msra.mxu0 0.0
        %1786 = vmatpush.msra.mxu0 0.0
        %1787 = vmatpush.msra.mxu0 0.0
        %1788 = vmatpush.msra.mxu0 %v1757
        %1789 = vmatpush.msra.mxu0 %v1756
        %1790 = vmatpush.msra.mxu0 %v1755
        %1791 = vmatpush.msra.mxu0 %v1754
        %1792 = vmatpush.msra.mxu0 %v1753
        %1793 = vmatpush.msra.mxu0 %v1752
        %1794 = vmatpush.msra.mxu0 %v1751
        %1795 = vmatpush.msra.mxu0 %v1750
        %1796 = vmatmul.f32.gmra.mxu0 %v1758
        %v1797 = vpop.f32.mrf.mxu0
        %v1798 = vadd.f32 %v1778, %v1797
        %1799 = vdwg.mxu0
        %v1801 = vrot.slane %v1573, 2
        %vm1803 = vcmp.gt.f32.partialorder %v1801, 0.5
        %v1804 = vmax.f32 %v1798, 0.0
        %v1805 = vsel %vm1803, %v1804, %v1798
        %v1807 = vperm.slane %v1805, 0
        %v1809 = vsel %vm649, 0.0, %v1807
        %v1810 = vperm.slane %v1805, 1
        %v1812 = vsel %vm649, %v1810, 0.0
        %1813 = vst [vmem:[#allocation1] ss:$4 sm:$0xff] %v1805
        %v1814 = vld.sshfl [vmem:[#allocation1] sm:$0xff pattern:$0x73625140]
        %1815 = vrot.lane.b32.xlu0 %v1814, 64
        %v1816 = vpop.permute.xlu0 %1815
        %v1818 = vsel %vm775, %v1809, %v1816
        %s1819 = scalar_lea.vmem %s6, 1152
        %v1820 = vld [vmem:[%s1819] sm:$0xff]
        %v1821 = vld [vmem:[%s1819 + $0x8] sm:$0xff]
        %v1822 = vld [vmem:[%s1819 + $0x10] sm:$0xff]
        %v1823 = vld [vmem:[%s1819 + $0x18] sm:$0xff]
        %v1824 = vld [vmem:[%s1819 + $0x20] sm:$0xff]
        %v1825 = vld [vmem:[%s1819 + $0x28] sm:$0xff]
        %v1826 = vld [vmem:[%s1819 + $0x30] sm:$0xff]
        %v1827 = vld [vmem:[%s1819 + $0x38] sm:$0xff]
        %v1828 = vld [vmem:[%s1819 + $0x40] sm:$0xff]
        %v1829 = vld [vmem:[%s1819 + $0x48] sm:$0xff]
        %v1830 = vld [vmem:[%s1819 + $0x50] sm:$0xff]
        %v1831 = vld [vmem:[%s1819 + $0x58] sm:$0xff]
        %v1832 = vld [vmem:[%s1819 + $0x60] sm:$0xff]
        %v1833 = vld [vmem:[%s1819 + $0x68] sm:$0xff]
        %v1834 = vld [vmem:[%s1819 + $0x70] sm:$0xff]
        %v1835 = vld [vmem:[%s1819 + $0x78] sm:$0xff]
        %v1836 = vld [vmem:[%s1819 + $0x80] sm:$0xff]
        %v1837 = vld [vmem:[%s1819 + $0x88] sm:$0xff]
        %v1838 = vld [vmem:[%s1819 + $0x90] sm:$0xff]
        %v1839 = vld [vmem:[%s1819 + $0x98] sm:$0xff]
        %v1840 = vld [vmem:[%s1819 + $0xa0] sm:$0xff]
        %v1841 = vld [vmem:[%s1819 + $0xa8] sm:$0xff]
        %v1842 = vld [vmem:[%s1819 + $0xb0] sm:$0xff]
        %v1843 = vld [vmem:[%s1819 + $0xb8] sm:$0xff]
        %v1845 = vsel %vm775, %v1812, 0
        %1847 = vmatpush.msra.mxu0 %v1835
        %1848 = vmatpush.msra.mxu0 %v1834
        %1849 = vmatpush.msra.mxu0 %v1833
        %1850 = vmatpush.msra.mxu0 %v1832
        %1851 = vmatpush.msra.mxu0 %v1831
        %1852 = vmatpush.msra.mxu0 %v1830
        %1853 = vmatpush.msra.mxu0 %v1829
        %1854 = vmatpush.msra.mxu0 %v1828
        %1855 = vmatpush.msra.mxu0 %v1827
        %1856 = vmatpush.msra.mxu0 %v1826
        %1857 = vmatpush.msra.mxu0 %v1825
        %1858 = vmatpush.msra.mxu0 %v1824
        %1859 = vmatpush.msra.mxu0 %v1823
        %1860 = vmatpush.msra.mxu0 %v1822
        %1861 = vmatpush.msra.mxu0 %v1821
        %1862 = vmatpush.msra.mxu0 %v1820
        %1863 = vmatmul.f32.gmra.mxu0 %v1818
        %v1864 = vpop.f32.mrf.mxu0
        %v1865 = vadd.f32 0.0, %v1864
        %1866 = vdwg.mxu0
        %1867 = vmatpush.msra.mxu0 0.0
        %1868 = vmatpush.msra.mxu0 0.0
        %1869 = vmatpush.msra.mxu0 0.0
        %1870 = vmatpush.msra.mxu0 0.0
        %1871 = vmatpush.msra.mxu0 0.0
        %1872 = vmatpush.msra.mxu0 0.0
        %1873 = vmatpush.msra.mxu0 0.0
        %1874 = vmatpush.msra.mxu0 0.0
        %1875 = vmatpush.msra.mxu0 %v1843
        %1876 = vmatpush.msra.mxu0 %v1842
        %1877 = vmatpush.msra.mxu0 %v1841
        %1878 = vmatpush.msra.mxu0 %v1840
        %1879 = vmatpush.msra.mxu0 %v1839
        %1880 = vmatpush.msra.mxu0 %v1838
        %1881 = vmatpush.msra.mxu0 %v1837
        %1882 = vmatpush.msra.mxu0 %v1836
        %1883 = vmatmul.f32.gmra.mxu0 %v1845
        %v1884 = vpop.f32.mrf.mxu0
        %v1885 = vadd.f32 %v1865, %v1884
        %1886 = vdwg.mxu0
        %1887 = vrot.lane.b32.xlu0 %v1573, 64
        %v1888 = vpop.permute.xlu0 %1887
        %v1889 = vrot.slane %v1888, 2
        %vm1891 = vcmp.gt.f32.partialorder %v1889, 0.5
        %v1892 = vmax.f32 %v1885, 0.0
        %v1893 = vsel %vm1891, %v1892, %v1885
        %v1895 = vperm.slane %v1893, 0
        %v1897 = vsel %vm649, 0.0, %v1895
        %v1898 = vperm.slane %v1893, 1
        %v1900 = vsel %vm649, %v1898, 0.0
        %1901 = vst [vmem:[#allocation1] ss:$4 sm:$0xff] %v1893
        %v1902 = vld.sshfl [vmem:[#allocation1] sm:$0xff pattern:$0x73625140]
        %1903 = vrot.lane.b32.xlu0 %v1902, 64
        %v1904 = vpop.permute.xlu0 %1903
        %v1906 = vsel %vm775, %v1897, %v1904
        %s1907 = scalar_lea.vmem %s6, 1344
        %v1908 = vld [vmem:[%s1907] sm:$0xff]
        %v1909 = vld [vmem:[%s1907 + $0x8] sm:$0xff]
        %v1910 = vld [vmem:[%s1907 + $0x10] sm:$0xff]
        %v1911 = vld [vmem:[%s1907 + $0x18] sm:$0xff]
        %v1912 = vld [vmem:[%s1907 + $0x20] sm:$0xff]
        %v1913 = vld [vmem:[%s1907 + $0x28] sm:$0xff]
        %v1914 = vld [vmem:[%s1907 + $0x30] sm:$0xff]
        %v1915 = vld [vmem:[%s1907 + $0x38] sm:$0xff]
        %v1916 = vld [vmem:[%s1907 + $0x40] sm:$0xff]
        %v1917 = vld [vmem:[%s1907 + $0x48] sm:$0xff]
        %v1918 = vld [vmem:[%s1907 + $0x50] sm:$0xff]
        %v1919 = vld [vmem:[%s1907 + $0x58] sm:$0xff]
        %v1920 = vld [vmem:[%s1907 + $0x60] sm:$0xff]
        %v1921 = vld [vmem:[%s1907 + $0x68] sm:$0xff]
        %v1922 = vld [vmem:[%s1907 + $0x70] sm:$0xff]
        %v1923 = vld [vmem:[%s1907 + $0x78] sm:$0xff]
        %v1924 = vld [vmem:[%s1907 + $0x80] sm:$0xff]
        %v1925 = vld [vmem:[%s1907 + $0x88] sm:$0xff]
        %v1926 = vld [vmem:[%s1907 + $0x90] sm:$0xff]
        %v1927 = vld [vmem:[%s1907 + $0x98] sm:$0xff]
        %v1928 = vld [vmem:[%s1907 + $0xa0] sm:$0xff]
        %v1929 = vld [vmem:[%s1907 + $0xa8] sm:$0xff]
        %v1930 = vld [vmem:[%s1907 + $0xb0] sm:$0xff]
        %v1931 = vld [vmem:[%s1907 + $0xb8] sm:$0xff]
        %v1933 = vsel %vm775, %v1900, 0
        %1935 = vmatpush.msra.mxu0 %v1923
        %1936 = vmatpush.msra.mxu0 %v1922
        %1937 = vmatpush.msra.mxu0 %v1921
        %1938 = vmatpush.msra.mxu0 %v1920
        %1939 = vmatpush.msra.mxu0 %v1919
        %1940 = vmatpush.msra.mxu0 %v1918
        %1941 = vmatpush.msra.mxu0 %v1917
        %1942 = vmatpush.msra.mxu0 %v1916
        %1943 = vmatpush.msra.mxu0 %v1915
        %1944 = vmatpush.msra.mxu0 %v1914
        %1945 = vmatpush.msra.mxu0 %v1913
        %1946 = vmatpush.msra.mxu0 %v1912
        %1947 = vmatpush.msra.mxu0 %v1911
        %1948 = vmatpush.msra.mxu0 %v1910
        %1949 = vmatpush.msra.mxu0 %v1909
        %1950 = vmatpush.msra.mxu0 %v1908
        %1951 = vmatmul.f32.gmra.mxu0 %v1906
        %v1952 = vpop.f32.mrf.mxu0
        %v1953 = vadd.f32 0.0, %v1952
        %1954 = vdwg.mxu0
        %1955 = vmatpush.msra.mxu0 0.0
        %1956 = vmatpush.msra.mxu0 0.0
        %1957 = vmatpush.msra.mxu0 0.0
        %1958 = vmatpush.msra.mxu0 0.0
        %1959 = vmatpush.msra.mxu0 0.0
        %1960 = vmatpush.msra.mxu0 0.0
        %1961 = vmatpush.msra.mxu0 0.0
        %1962 = vmatpush.msra.mxu0 0.0
        %1963 = vmatpush.msra.mxu0 %v1931
        %1964 = vmatpush.msra.mxu0 %v1930
        %1965 = vmatpush.msra.mxu0 %v1929
        %1966 = vmatpush.msra.mxu0 %v1928
        %1967 = vmatpush.msra.mxu0 %v1927
        %1968 = vmatpush.msra.mxu0 %v1926
        %1969 = vmatpush.msra.mxu0 %v1925
        %1970 = vmatpush.msra.mxu0 %v1924
        %1971 = vmatmul.f32.gmra.mxu0 %v1933
        %v1972 = vpop.f32.mrf.mxu0
        %v1973 = vadd.f32 %v1953, %v1972
        %1974 = vdwg.mxu0
        %v1975 = vrot.slane %v1573, 4
        %vm1977 = vcmp.gt.f32.partialorder %v1975, 0.5
        %v1978 = vmax.f32 %v1973, 0.0
        %v1979 = vsel %vm1977, %v1978, %v1973
        %v1981 = vperm.slane %v1979, 0
        %v1983 = vsel %vm649, 0.0, %v1981
        %v1984 = vperm.slane %v1979, 1
        %v1986 = vsel %vm649, %v1984, 0.0
        %1987 = vst [vmem:[#allocation1] ss:$4 sm:$0xff] %v1979
        %v1988 = vld.sshfl [vmem:[#allocation1] sm:$0xff pattern:$0x73625140]
        %1989 = vrot.lane.b32.xlu0 %v1988, 64
        %v1990 = vpop.permute.xlu0 %1989
        %v1992 = vsel %vm775, %v1983, %v1990
        %s1993 = scalar_lea.vmem %s6, 1536
        %v1994 = vld [vmem:[%s1993] sm:$0xff]
        %v1995 = vld [vmem:[%s1993 + $0x8] sm:$0xff]
        %v1996 = vld [vmem:[%s1993 + $0x10] sm:$0xff]
        %v1997 = vld [vmem:[%s1993 + $0x18] sm:$0xff]
        %v1998 = vld [vmem:[%s1993 + $0x20] sm:$0xff]
        %v1999 = vld [vmem:[%s1993 + $0x28] sm:$0xff]
        %v2000 = vld [vmem:[%s1993 + $0x30] sm:$0xff]
        %v2001 = vld [vmem:[%s1993 + $0x38] sm:$0xff]
        %v2002 = vld [vmem:[%s1993 + $0x40] sm:$0xff]
        %v2003 = vld [vmem:[%s1993 + $0x48] sm:$0xff]
        %v2004 = vld [vmem:[%s1993 + $0x50] sm:$0xff]
        %v2005 = vld [vmem:[%s1993 + $0x58] sm:$0xff]
        %v2006 = vld [vmem:[%s1993 + $0x60] sm:$0xff]
        %v2007 = vld [vmem:[%s1993 + $0x68] sm:$0xff]
        %v2008 = vld [vmem:[%s1993 + $0x70] sm:$0xff]
        %v2009 = vld [vmem:[%s1993 + $0x78] sm:$0xff]
        %v2010 = vld [vmem:[%s1993 + $0x80] sm:$0xff]
        %v2011 = vld [vmem:[%s1993 + $0x88] sm:$0xff]
        %v2012 = vld [vmem:[%s1993 + $0x90] sm:$0xff]
        %v2013 = vld [vmem:[%s1993 + $0x98] sm:$0xff]
        %v2014 = vld [vmem:[%s1993 + $0xa0] sm:$0xff]
        %v2015 = vld [vmem:[%s1993 + $0xa8] sm:$0xff]
        %v2016 = vld [vmem:[%s1993 + $0xb0] sm:$0xff]
        %v2017 = vld [vmem:[%s1993 + $0xb8] sm:$0xff]
        %v2019 = vsel %vm775, %v1986, 0
        %2021 = vmatpush.msra.mxu0 %v2009
        %2022 = vmatpush.msra.mxu0 %v2008
        %2023 = vmatpush.msra.mxu0 %v2007
        %2024 = vmatpush.msra.mxu0 %v2006
        %2025 = vmatpush.msra.mxu0 %v2005
        %2026 = vmatpush.msra.mxu0 %v2004
        %2027 = vmatpush.msra.mxu0 %v2003
        %2028 = vmatpush.msra.mxu0 %v2002
        %2029 = vmatpush.msra.mxu0 %v2001
        %2030 = vmatpush.msra.mxu0 %v2000
        %2031 = vmatpush.msra.mxu0 %v1999
        %2032 = vmatpush.msra.mxu0 %v1998
        %2033 = vmatpush.msra.mxu0 %v1997
        %2034 = vmatpush.msra.mxu0 %v1996
        %2035 = vmatpush.msra.mxu0 %v1995
        %2036 = vmatpush.msra.mxu0 %v1994
        %2037 = vmatmul.f32.gmra.mxu0 %v1992
        %v2038 = vpop.f32.mrf.mxu0
        %v2039 = vadd.f32 0.0, %v2038
        %2040 = vdwg.mxu0
        %2041 = vmatpush.msra.mxu0 0.0
        %2042 = vmatpush.msra.mxu0 0.0
        %2043 = vmatpush.msra.mxu0 0.0
        %2044 = vmatpush.msra.mxu0 0.0
        %2045 = vmatpush.msra.mxu0 0.0
        %2046 = vmatpush.msra.mxu0 0.0
        %2047 = vmatpush.msra.mxu0 0.0
        %2048 = vmatpush.msra.mxu0 0.0
        %2049 = vmatpush.msra.mxu0 %v2017
        %2050 = vmatpush.msra.mxu0 %v2016
        %2051 = vmatpush.msra.mxu0 %v2015
        %2052 = vmatpush.msra.mxu0 %v2014
        %2053 = vmatpush.msra.mxu0 %v2013
        %2054 = vmatpush.msra.mxu0 %v2012
        %2055 = vmatpush.msra.mxu0 %v2011
        %2056 = vmatpush.msra.mxu0 %v2010
        %2057 = vmatmul.f32.gmra.mxu0 %v2019
        %v2058 = vpop.f32.mrf.mxu0
        %v2059 = vadd.f32 %v2039, %v2058
        %2060 = vdwg.mxu0
        %v2061 = vrot.slane %v1888, 4
        %vm2063 = vcmp.gt.f32.partialorder %v2061, 0.5
        %v2064 = vmax.f32 %v2059, 0.0
        %v2065 = vsel %vm2063, %v2064, %v2059
        %2066 = vst [vmem:[#allocation1] ss:$4 sm:$0xff] %v1893
        %v2067 = vld.sshfl [vmem:[#allocation1] sm:$0xff pattern:$0x73625140]
        %2068 = vrot.lane.b32.xlu0 %v2067, 64
        %v2069 = vpop.permute.xlu0 %2068
        %2072 = vst [vmem:[#allocation1] ss:$4 sm:$0xff] %v2065
        %v2073 = vld.sshfl [vmem:[#allocation1] sm:$0xff pattern:$0x73625140]
        %2074 = vrot.lane.b32.xlu0 %v2073, 64
        %v2075 = vpop.permute.xlu0 %2074
        %v2077 = vsel %vm775, %v1628, %v1719
        %v2078 = vsel %vm775, %v1805, %v2069
        %v2079 = vsel %vm775, %v1979, %v2075
        %v2083 = vrot.slane %v2078, 6
        %v2084 = vrot.slane %v2079, 4
        %vm2085 = vcmask 1041408
        %v2086 = vsel %vm2085, %v2077, %v2083
        %v2087 = vsel %vm1479, %v2086, %v2084
        %2089 = vst [vmem:[%s642] sm:$0x3f] %v2087
        %v2090 = vrot.slane %v2065, 7
        %v2091 = vrot.slane %v2090, 2
        %v2093 = vadd.f32 %v2065, %v2091
        %v2094 = vmul.f32 %v2093, 0.5
        %v2095 = vld [vmem:[%s10] sm:$0xff]
        %v2096 = vld [vmem:[%s10 + $0x8] sm:$0xff]
        %v2097 = vld [vmem:[%s10 + $0x10] sm:$0xff]
        %v2098 = vld [vmem:[%s10 + $0x18] sm:$0xff]
        %v2099 = vld [vmem:[%s10 + $0x20] sm:$0xff]
        %v2100 = vld [vmem:[%s10 + $0x28] sm:$0xff]
        %v2101 = vld [vmem:[%s10 + $0x30] sm:$0xff]
        %v2102 = vld [vmem:[%s10 + $0x38] sm:$0xff]
        %v2103 = vld [vmem:[%s11] sm:$0x1]
        %v2105 = vsel %vm775, %v2094, 0
        %2107 = vmatpush.msra.mxu0 0.0
        %2108 = vmatpush.msra.mxu0 0.0
        %2109 = vmatpush.msra.mxu0 0.0
        %2110 = vmatpush.msra.mxu0 0.0
        %2111 = vmatpush.msra.mxu0 0.0
        %2112 = vmatpush.msra.mxu0 0.0
        %2113 = vmatpush.msra.mxu0 0.0
        %2114 = vmatpush.msra.mxu0 0.0
        %2115 = vmatpush.msra.mxu0 %v2102
        %2116 = vmatpush.msra.mxu0 %v2101
        %2117 = vmatpush.msra.mxu0 %v2100
        %2118 = vmatpush.msra.mxu0 %v2099
        %2119 = vmatpush.msra.mxu0 %v2098
        %2120 = vmatpush.msra.mxu0 %v2097
        %2121 = vmatpush.msra.mxu0 %v2096
        %2122 = vmatpush.msra.mxu0 %v2095
        %2123 = vmatmul.f32.gmra.mxu0 %v2105
        %v2124 = vpop.f32.mrf.mxu0
        %v2125 = vadd.f32 %v2103, %v2124
        %2126 = vdwg.mxu0
        %2127 = vst [vmem:[%s599] sm:$0x1] %v2125
        %p2128 = scmp.lt.s32.totalorder %s31, 1
        %s2129 = scalar_select %p2128, %s31, 1
        %s2130 = smul.addr %s2129, 2
        %s2131 = smul.addr %s2130, 8
        %s2132 = scalar_lea.vmem %s12, %s2131
        %p2133 = scmp.lt.s32.totalorder %s31, 1
        %s2134 = scalar_select %p2133, %s31, 1
        %s2135 = smul.addr %s2134, 8
        %s2136 = scalar_lea.vmem %s13, %s2135
        %p2137 = scmp.lt.s32.totalorder %s31, 1
        %s2138 = scalar_select %p2137, %s31, 1
        %s2139 = smul.addr %s2138, 2
        %s2140 = smul.addr %s2139, 4
        %s2141 = scalar_lea.vmem %s14, %s2140
        %p2142 = scmp.lt.s32.totalorder %s31, 1
        %s2143 = scalar_select %p2142, %s31, 1
        %s2144 = smul.addr %s2143, 3
        %s2145 = smul.addr %s2144, 2
        %s2146 = scalar_lea.vmem %s15, %s2145
        %s2147 = sand.u32 %s420, 1
        %s2148 = scalar_lea.sflag [#allocation3], %s2147
        %s2149 = sand.u32 %s420, 1
        %s2150 = scalar_lea.vmem [#allocation2], %s2149
        // Predicated region
        $region69: #{forward.1} parent=67 // pred_check
          %p2151 = pneg %p326
        $region70: #{forward.1} parent=67 // pred_check_branch
          %2153 = sbr.rel (%p2151) target = $region72
        $region71: #{forward.1} parent=67 // pred_region
          _
        $region72: #{forward.1} parent=67 // pred_fallthru
          _
        // Predicated region
        $region73: #{forward.1} parent=67 // pred_check
          %p2154 = pneg %p352
        $region74: #{forward.1} parent=67 // pred_check_branch
          %2156 = sbr.rel (%p2154) target = $region76
        $region75: #{forward.1} parent=67 // pred_region
          _
        $region76: #{forward.1} parent=67 // pred_fallthru
          _
        // Predicated region
        $region77: #{forward.1} parent=67 // pred_check
          %p2157 = pneg %p378
        $region78: #{forward.1} parent=67 // pred_check_branch
          %2159 = sbr.rel (%p2157) target = $region80
        $region79: #{forward.1} parent=67 // pred_region
          _
        $region80: #{forward.1} parent=67 // pred_fallthru
          _
        // Predicated region
        $region81: #{forward.1} parent=67 // pred_check
          %p2160 = pneg %p404
        $region82: #{forward.1} parent=67 // pred_check_branch
          %2162 = sbr.rel (%p2160) target = $region84
        $region83: #{forward.1} parent=67 // pred_region
          _
        $region84: #{forward.1} parent=67 // pred_fallthru
          _
        // Predicated region
        $region85: #{forward.1} parent=67 // pred_check
          %p2163 = pneg %p430
        $region86: #{forward.1} parent=67 // pred_check_branch
          %2165 = sbr.rel (%p2163) target = $region88
        $region87: #{forward.1} parent=67 // pred_region
          %2167 = vsyncadd %s2148, 0
          %s2168 = scalar_lea.hbm %s16, %s31
          %s2170 = sshll.u32 %s2150, 4
          %s2171 = int_to_ptr.vmem [resolvable:$true] %s2170
          %s2172 = sshll.u32 %s2168, 4
          %s2173 = int_to_ptr.hbm [resolvable:$true] %s2172
          %2175 = dma.vmem_to_hbm [thread:$0]  %s2171, 16, %s2173, %s2148
        $region88: #{forward.1} parent=67 // pred_fallthru
          _
      $region68: #{forward.1} parent=5 // pred_fallthru
        _
      %p2176 = scmp.le.s32.totalorder 2, %s26
      // Predicated region
      $region89: #{forward.1} parent=5 // pred_check
        %p2177 = pneg %p2176
      $region90: #{forward.1} parent=5 // pred_check_branch
        %2179 = sbr.rel (%p2177) target = $region92
      $region91: #{forward.1} parent=5 // pred_region
        %s2180 = ssub.s32 %s26, 2
        // Predicated region
        $region93: #{forward.1} parent=91 // pred_check
          %p2181 = pneg %p332
        $region94: #{forward.1} parent=91 // pred_check_branch
          %2183 = sbr.rel (%p2181) target = $region96
        $region95: #{forward.1} parent=91 // pred_region
          %p2184 = scmp.lt.s32.totalorder %s32, 1
          %s2185 = scalar_select %p2184, %s32, 1
          %s2186 = smul.addr %s2185, 2
          %s2187 = smul.addr %s2186, 8
          %s2188 = scalar_lea.vmem %s12, %s2187
        $region96: #{forward.1} parent=91 // pred_fallthru
          _
        // Predicated region
        $region97: #{forward.1} parent=91 // pred_check
          %p2189 = pneg %p358
        $region98: #{forward.1} parent=91 // pred_check_branch
          %2191 = sbr.rel (%p2189) target = $region100
        $region99: #{forward.1} parent=91 // pred_region
          %p2192 = scmp.lt.s32.totalorder %s32, 1
          %s2193 = scalar_select %p2192, %s32, 1
          %s2194 = smul.addr %s2193, 8
          %s2195 = scalar_lea.vmem %s13, %s2194
        $region100: #{forward.1} parent=91 // pred_fallthru
          _
        // Predicated region
        $region101: #{forward.1} parent=91 // pred_check
          %p2196 = pneg %p384
        $region102: #{forward.1} parent=91 // pred_check_branch
          %2198 = sbr.rel (%p2196) target = $region104
        $region103: #{forward.1} parent=91 // pred_region
          %p2199 = scmp.lt.s32.totalorder %s32, 1
          %s2200 = scalar_select %p2199, %s32, 1
          %s2201 = smul.addr %s2200, 2
          %s2202 = smul.addr %s2201, 4
          %s2203 = scalar_lea.vmem %s14, %s2202
        $region104: #{forward.1} parent=91 // pred_fallthru
          _
        // Predicated region
        $region105: #{forward.1} parent=91 // pred_check
          %p2204 = pneg %p410
        $region106: #{forward.1} parent=91 // pred_check_branch
          %2206 = sbr.rel (%p2204) target = $region108
        $region107: #{forward.1} parent=91 // pred_region
          %p2207 = scmp.lt.s32.totalorder %s32, 1
          %s2208 = scalar_select %p2207, %s32, 1
          %s2209 = smul.addr %s2208, 3
          %s2210 = smul.addr %s2209, 2
          %s2211 = scalar_lea.vmem %s15, %s2210
        $region108: #{forward.1} parent=91 // pred_fallthru
          _
        // Predicated region
        $region109: #{forward.1} parent=91 // pred_check
          %p2212 = pneg %p436
        $region110: #{forward.1} parent=91 // pred_check_branch
          %2214 = sbr.rel (%p2212) target = $region112
        $region111: #{forward.1} parent=91 // pred_region
          %s2215 = sand.u32 %s421, 1
          %s2216 = scalar_lea.sflag [#allocation3], %s2215
          %s2217 = sand.u32 %s421, 1
          %s2218 = scalar_lea.vmem [#allocation2], %s2217
          %2220 = dma.done %s2216, 16
        $region112: #{forward.1} parent=91 // pred_fallthru
          _
      $region92: #{forward.1} parent=5 // pred_fallthru
        _
    $region6: #{forward.1} parent=1 // loop_footer
      %s30 = sadd.s32 1, %s26
    $region7: #{forward.1} parent=1 // loop_footer_branch
      %25 = sbr.rel target = $region3
    $region8: #{forward.1} parent=1 // loop_exit
      _
    %2221 = vsyncpa [#allocation3], 1
    %s2222 = scalar_lea.sflag [#allocation3], 1
    %2223 = vsyncpa %s2222, 1

</llo_original>
